<compile_context>
chip_gen: v5e
topology: v5e:2x2
jax: 0.10.0
libtpu: 0.0.40
codegen_flags: <defaults>
</compile_context>

<pallas_src>
import math
from functools import partial

import jax
import jax.numpy as jnp
from jax import lax
from jax.experimental import pallas as pl
from jax.experimental.pallas import tpu as pltpu


def _attention_kernel(x_ref, wqkv_ref, wout_ref, bout_ref, o_ref,
                      *, heads, dim_head):
    # x_ref: (1, C, S) block — channels on sublanes, flattened spatial on lanes.
    _, C, S = x_ref.shape
    hd = heads * dim_head

    x = x_ref[0].astype(jnp.float32)                        # (C, S)

    # ---- RMSNorm over channels (g * sqrt(C) is folded into wqkv columns) ----
    # F.normalize(x, dim=1): x / max(||x||_2, 1e-12)
    sq = jnp.sum(x * x, axis=0, keepdims=True)              # (1, S)
    inv = jnp.minimum(lax.rsqrt(sq), jnp.float32(1e12))     # == 1/max(sqrt(sq),1e-12)
    xhat = (x * inv).astype(jnp.bfloat16)                   # (C, S) bf16 MXU operand

    # ---- to_qkv 1x1 conv: (3*hd, C) @ (C, S), f32 accumulate ----
    qkv = jnp.dot(wqkv_ref[...], xhat,
                  preferred_element_type=jnp.float32)       # (3hd, S) f32
    qkv = qkv.astype(jnp.bfloat16)
    q = qkv[0:hd].reshape(heads, dim_head, S)               # (h, Dh, S), scale pre-folded
    k = qkv[hd:2 * hd].reshape(heads, dim_head, S)
    v = qkv[2 * hd:3 * hd].reshape(heads, dim_head, S)

    # ---- scores, computed transposed: simT[h, j, i] = sum_d k[h,d,j] q[h,d,i] ----
    simT = jnp.einsum('hdj,hdi->hji', k, q,
                      preferred_element_type=jnp.float32)   # (h, S, S) f32

    # ---- softmax over j (axis -2); max/sum/exp kept in f32 ----
    m = jnp.max(simT, axis=1, keepdims=True)                # (h, 1, S)
    e = jnp.exp(simT - m)                                   # EUP
    denom = jnp.sum(e, axis=1, keepdims=True)               # (h, 1, S)
    attnT = (e * pl.reciprocal(denom, approx=True)).astype(jnp.bfloat16)

    # ---- PV: out[h,d,i] = sum_j v[h,d,j] * attnT[h,j,i]  (canonical MXU form) ----
    out = jnp.einsum('hdj,hji->hdi', v, attnT,
                     preferred_element_type=jnp.float32)    # (h, Dh, S) f32
    out = out.reshape(hd, S).astype(jnp.bfloat16)           # channel = h*Dh + d

    # ---- to_out 1x1 conv: (C, hd) @ (hd, S) + bias ----
    y = jnp.dot(wout_ref[...], out,
                preferred_element_type=jnp.float32)         # (C, S) f32
    y = y + bout_ref[...].astype(jnp.float32)               # (C, 1) broadcast
    o_ref[...] = y[None].astype(o_ref.dtype)


def attention_forward(x, g, w_qkv, w_out, b_out, *, heads=4, dim_head=32):
    """x: (B, C, H, W); g: (1, C, 1, 1); w_qkv: (3*heads*dim_head, C);
    w_out: (C, heads*dim_head); b_out: (C,). Returns (B, C, H, W)."""
    B, C, H, W = x.shape
    S = H * W
    hd = heads * dim_head
    scale = dim_head ** -0.5

    x2 = x.reshape(B, C, S)          # lane-dense last dim (S multiple of 128)

    # Fold RMSNorm gain (g * sqrt(C)) into wqkv columns and the softmax scale
    # into its q rows, then cast weights to bf16 once (MXU-native operands).
    gain = g.reshape(1, C).astype(jnp.float32) * jnp.float32(math.sqrt(C))
    w_eff = w_qkv.astype(jnp.float32) * gain                 # (3hd, C)
    w_eff = w_eff.at[:hd].multiply(jnp.float32(scale))
    w_eff = w_eff.astype(jnp.bfloat16)
    w_out_bf = w_out.astype(jnp.bfloat16)                    # (C, hd)
    b2 = b_out.reshape(C, 1).astype(jnp.float32)

    flops = 2 * B * (3 * hd * C * S + 2 * heads * S * S * dim_head + C * hd * S)
    transcendentals = B * heads * S * S
    bytes_accessed = (2 * B * C * S * x.dtype.itemsize       # x in + y out
                      + w_eff.size * 2 + w_out_bf.size * 2 + b2.size * 4)

    kernel = partial(_attention_kernel, heads=heads, dim_head=dim_head)

    y = pl.pallas_call(
        kernel,
        out_shape=jax.ShapeDtypeStruct((B, C, S), x.dtype),
        grid_spec=pltpu.PrefetchScalarGridSpec(
            num_scalar_prefetch=0,
            grid=(B,),
            in_specs=[
                pl.BlockSpec((1, C, S), lambda b: (b, 0, 0)),
                pl.BlockSpec((3 * hd, C), lambda b: (0, 0)),
                pl.BlockSpec((C, hd), lambda b: (0, 0)),
                pl.BlockSpec((C, 1), lambda b: (0, 0)),
            ],
            out_specs=pl.BlockSpec((1, C, S), lambda b: (b, 0, 0)),
        ),
        compiler_params=pltpu.CompilerParams(
            dimension_semantics=("parallel",),
        ),
        cost_estimate=pl.CostEstimate(
            flops=flops,
            transcendentals=transcendentals,
            bytes_accessed=bytes_accessed,
        ),
    )(x2, w_eff, w_out_bf, b2)
    return y.reshape(B, C, H, W)


def attention_ref(x, g, w_qkv, w_out, b_out, *, heads=4, dim_head=32):
    """Pure-JAX f32 reference replicating the PyTorch forward."""
    B, C, H, W = x.shape
    S = H * W
    hd = heads * dim_head
    scale = dim_head ** -0.5
    P = lax.Precision.HIGHEST

    xf = x.astype(jnp.float32).reshape(B, C, S)
    norm = jnp.sqrt(jnp.sum(xf * xf, axis=1, keepdims=True))
    xn = xf / jnp.maximum(norm, 1e-12) * g.reshape(1, C, 1) * (C ** 0.5)

    qkv = jnp.einsum('oc,bcs->bos', w_qkv, xn, precision=P)
    q, k, v = jnp.split(qkv, 3, axis=1)
    q = q.reshape(B, heads, dim_head, S) * scale
    k = k.reshape(B, heads, dim_head, S)
    v = v.reshape(B, heads, dim_head, S)

    sim = jnp.einsum('bhdi,bhdj->bhij', q, k, precision=P)
    sim = sim - jnp.max(sim, axis=-1, keepdims=True)
    attn = jax.nn.softmax(sim, axis=-1)
    out = jnp.einsum('bhij,bhdj->bhid', attn, v, precision=P)      # (B, h, S, Dh)
    out = jnp.transpose(out, (0, 1, 3, 2)).reshape(B, hd, S)        # (B, h*Dh, S)
    y = jnp.einsum('co,bos->bcs', w_out, out, precision=P) + b_out.reshape(1, C, 1)
    return y.reshape(B, C, H, W)


if __name__ == "__main__":
    key = jax.random.PRNGKey(0)
    B, dim, H, W = 2, 4, 16, 16
    heads, dim_head = 4, 32
    hd = heads * dim_head

    k1, k2, k3, k4, k5 = jax.random.split(key, 5)
    x = jax.random.normal(k1, (B, dim, H, W), dtype=jnp.float32)
    # Non-trivial g so the gain-folding path is exercised.
    g = (1.0 + 0.1 * jax.random.normal(k5, (1, dim, 1, 1))).astype(jnp.float32)
    w_qkv = jax.random.normal(k2, (3 * hd, dim), dtype=jnp.float32) / math.sqrt(dim)
    w_out = jax.random.normal(k3, (dim, hd), dtype=jnp.float32) / math.sqrt(hd)
    b_out = 0.05 * jax.random.normal(k4, (dim,), dtype=jnp.float32)

    out = attention_forward(x, g, w_qkv, w_out, b_out, heads=heads, dim_head=dim_head)
    out = jax.block_until_ready(out)

    ref = attention_ref(x, g, w_qkv, w_out, b_out, heads=heads, dim_head=dim_head)
    assert out.shape == (B, dim, H, W)
    # bf16 MXU operands (f32 accumulation): tolerance set for bf16 compute.
    err = float(jnp.max(jnp.abs(out - ref)))
    assert jnp.allclose(out, ref, atol=3e-2, rtol=3e-2), err

    print("KERNEL_OK")
</pallas_src>

<mosaic_0001>
module attributes {stable_mosaic.version = 11 : i64} {
  func.func @_attention_kernel(%arg0: i32, %arg1: memref<1x4x256xf32, #tpu.memory_space<vmem>>, %arg2: memref<384x4xbf16, #tpu.memory_space<vmem>>, %arg3: memref<4x128xbf16, #tpu.memory_space<vmem>>, %arg4: memref<4x1xf32, #tpu.memory_space<vmem>>, %arg5: memref<1x4x256xf32, #tpu.memory_space<vmem>>) attributes {dimension_semantics = [#tpu.dimension_semantics<parallel>], iteration_bounds = array<i64: 2>, scalar_prefetch = 0 : i64, scratch_operands = 0 : i64, tpu.core_type = #tpu.core_type<tc>, window_params = [{transform_indices = @transform_0, window_bounds = array<i64: 1, 4, 256>}, {pipeline_mode = #tpu.pipeline_mode<synchronous>, transform_indices = @transform_1, window_bounds = array<i64: 384, 4>}, {pipeline_mode = #tpu.pipeline_mode<synchronous>, transform_indices = @transform_2, window_bounds = array<i64: 4, 128>}, {pipeline_mode = #tpu.pipeline_mode<synchronous>, transform_indices = @transform_3, window_bounds = array<i64: 4, 1>}, {transform_indices = @transform_4, window_bounds = array<i64: 1, 4, 256>}]} {
    %c0 = arith.constant 0 : index
    %c0_0 = arith.constant 0 : index
    %c0_1 = arith.constant 0 : index
    %0 = vector.load %arg1[%c0, %c0_0, %c0_1] : memref<1x4x256xf32, #tpu.memory_space<vmem>>, vector<1x4x256xf32>
    %1 = vector.shape_cast %0 : vector<1x4x256xf32> to vector<4x256xf32>
    %2 = arith.mulf %1, %1 : vector<4x256xf32>
    %cst = arith.constant dense<0.000000e+00> : vector<256xf32>
    %3 = vector.multi_reduction <add>, %2, %cst [0] : vector<4x256xf32> to vector<256xf32>
    %4 = vector.shape_cast %3 : vector<256xf32> to vector<1x256xf32>
    %5 = math.rsqrt %4 : vector<1x256xf32>
    %cst_2 = arith.constant 9.99999995E+11 : f32
    %6 = vector.broadcast %cst_2 : f32 to vector<1x256xf32>
    %7 = arith.minimumf %5, %6 : vector<1x256xf32>
    %8 = vector.broadcast %7 : vector<1x256xf32> to vector<4x256xf32>
    %9 = arith.mulf %1, %8 : vector<4x256xf32>
    %10 = arith.truncf %9 : vector<4x256xf32> to vector<4x256xbf16>
    %c0_3 = arith.constant 0 : index
    %c0_4 = arith.constant 0 : index
    %11 = vector.load %arg2[%c0_3, %c0_4] : memref<384x4xbf16, #tpu.memory_space<vmem>>, vector<384x4xbf16>
    %cst_5 = arith.constant dense<0.000000e+00> : vector<384x256xf32>
    %12 = tpu.matmul %11, %10, %cst_5 {dimension_numbers = #tpu.dot_dimension_numbers<[1], [0], [0], [1], [0, 0, 1, 1], [], []>} : vector<384x4xbf16>, vector<4x256xbf16>, vector<384x256xf32> -> vector<384x256xf32>
    %13 = arith.truncf %12 : vector<384x256xf32> to vector<384x256xbf16>
    %14 = vector.extract_strided_slice %13 {offsets = [0, 0], sizes = [128, 256], strides = [1, 1]} : vector<384x256xbf16> to vector<128x256xbf16>
    %15 = vector.shape_cast %14 : vector<128x256xbf16> to vector<4x32x256xbf16>
    %16 = vector.extract_strided_slice %13 {offsets = [128, 0], sizes = [128, 256], strides = [1, 1]} : vector<384x256xbf16> to vector<128x256xbf16>
    %17 = vector.shape_cast %16 : vector<128x256xbf16> to vector<4x32x256xbf16>
    %18 = vector.extract_strided_slice %13 {offsets = [256, 0], sizes = [128, 256], strides = [1, 1]} : vector<384x256xbf16> to vector<128x256xbf16>
    %19 = vector.shape_cast %18 : vector<128x256xbf16> to vector<4x32x256xbf16>
    "tpu.trace_start"() <{level = 10 : i32, message = "hdj,hdi->hji"}> : () -> ()
    %cst_6 = arith.constant dense<0.000000e+00> : vector<4x256x256xf32>
    %20 = tpu.matmul %17, %15, %cst_6 {dimension_numbers = #tpu.dot_dimension_numbers<[1], [1], [2], [2], [0, 0, 0, 2, 1, 2], [0], [0]>} : vector<4x32x256xbf16>, vector<4x32x256xbf16>, vector<4x256x256xf32> -> vector<4x256x256xf32>
    "tpu.trace_stop"() : () -> ()
    %cst_7 = arith.constant dense<0xFF800000> : vector<4x256xf32>
    %21 = vector.multi_reduction <maximumf>, %20, %cst_7 [1] : vector<4x256x256xf32> to vector<4x256xf32>
    %22 = vector.shape_cast %21 : vector<4x256xf32> to vector<4x1x256xf32>
    %23 = vector.broadcast %22 : vector<4x1x256xf32> to vector<4x256x256xf32>
    %24 = arith.subf %20, %23 : vector<4x256x256xf32>
    %25 = math.exp %24 : vector<4x256x256xf32>
    %cst_8 = arith.constant dense<0.000000e+00> : vector<4x256xf32>
    %26 = vector.multi_reduction <add>, %25, %cst_8 [1] : vector<4x256x256xf32> to vector<4x256xf32>
    %27 = vector.shape_cast %26 : vector<4x256xf32> to vector<4x1x256xf32>
    %28 = tpu.reciprocal %27 {approx = true} : vector<4x1x256xf32> -> vector<4x1x256xf32>
    %29 = vector.broadcast %28 : vector<4x1x256xf32> to vector<4x256x256xf32>
    %30 = arith.mulf %25, %29 : vector<4x256x256xf32>
    %31 = arith.truncf %30 : vector<4x256x256xf32> to vector<4x256x256xbf16>
    "tpu.trace_start"() <{level = 10 : i32, message = "hdj,hji->hdi"}> : () -> ()
    %cst_9 = arith.constant dense<0.000000e+00> : vector<4x32x256xf32>
    %32 = tpu.matmul %19, %31, %cst_9 {dimension_numbers = #tpu.dot_dimension_numbers<[2], [1], [1], [2], [0, 0, 0, 1, 1, 2], [0], [0]>} : vector<4x32x256xbf16>, vector<4x256x256xbf16>, vector<4x32x256xf32> -> vector<4x32x256xf32>
    "tpu.trace_stop"() : () -> ()
    %33 = vector.shape_cast %32 : vector<4x32x256xf32> to vector<128x256xf32>
    %34 = arith.truncf %33 : vector<128x256xf32> to vector<128x256xbf16>
    %c0_10 = arith.constant 0 : index
    %c0_11 = arith.constant 0 : index
    %35 = vector.load %arg3[%c0_10, %c0_11] : memref<4x128xbf16, #tpu.memory_space<vmem>>, vector<4x128xbf16>
    %cst_12 = arith.constant dense<0.000000e+00> : vector<4x256xf32>
    %36 = tpu.matmul %35, %34, %cst_12 {dimension_numbers = #tpu.dot_dimension_numbers<[1], [0], [0], [1], [0, 0, 1, 1], [], []>} : vector<4x128xbf16>, vector<128x256xbf16>, vector<4x256xf32> -> vector<4x256xf32>
    %c0_13 = arith.constant 0 : index
    %c0_14 = arith.constant 0 : index
    %37 = vector.load %arg4[%c0_13, %c0_14] : memref<4x1xf32, #tpu.memory_space<vmem>>, vector<4x1xf32>
    %38 = vector.broadcast %37 : vector<4x1xf32> to vector<4x256xf32>
    %39 = arith.addf %36, %38 : vector<4x256xf32>
    %40 = vector.shape_cast %39 : vector<4x256xf32> to vector<1x4x256xf32>
    %c0_15 = arith.constant 0 : index
    %c0_16 = arith.constant 0 : index
    %c0_17 = arith.constant 0 : index
    %41 = vector.load %arg5[%c0_15, %c0_16, %c0_17] : memref<1x4x256xf32, #tpu.memory_space<vmem>>, vector<1x4x256xf32>
    tpu.vector_store %arg5[%c0_15, %c0_16, %c0_17], %40 {strides = array<i32>} : memref<1x4x256xf32, #tpu.memory_space<vmem>>, vector<1x4x256xf32>,
    return
  }
  func.func @transform_0(%arg0: i32) -> (i32, i32, i32) {
    %c0_i32 = arith.constant 0 : i32
    %c0_i32_0 = arith.constant 0 : i32
    %c0_i32_1 = arith.constant 0 : i32
    return %arg0, %c0_i32, %c0_i32_0 : i32, i32, i32
  }
  func.func @transform_1(%arg0: i32) -> (i32, i32) {
    %c0_i32 = arith.constant 0 : i32
    %c0_i32_0 = arith.constant 0 : i32
    %c0_i32_1 = arith.constant 0 : i32
    return %c0_i32, %c0_i32_0 : i32, i32
  }
  func.func @transform_2(%arg0: i32) -> (i32, i32) {
    %c0_i32 = arith.constant 0 : i32
    %c0_i32_0 = arith.constant 0 : i32
    %c0_i32_1 = arith.constant 0 : i32
    return %c0_i32, %c0_i32_0 : i32, i32
  }
  func.func @transform_3(%arg0: i32) -> (i32, i32) {
    %c0_i32 = arith.constant 0 : i32
    %c0_i32_0 = arith.constant 0 : i32
    %c0_i32_1 = arith.constant 0 : i32
    return %c0_i32, %c0_i32_0 : i32, i32
  }
  func.func @transform_4(%arg0: i32) -> (i32, i32, i32) {
    %c0_i32 = arith.constant 0 : i32
    %c0_i32_0 = arith.constant 0 : i32
    %c0_i32_1 = arith.constant 0 : i32
    return %arg0, %c0_i32, %c0_i32_0 : i32, i32, i32
  }
}

</mosaic_0001>

<llo_original>
// kernel: tpu_custom_call.1
$region0: #{tpu_custom_call.1}
  #allocation0 [shape = 'u32[]', space=smem, size = 0x4, offset = 0x4, fixed_abs, tag = 'smem constant byte address 0x4 - core index']
  #allocation1 [shape = 'u32[72,128]{1,0:T(1,128)}', space=vmem, size = 0x9000, scoped, tag = 'internal scratch']
  %s0 = inlined_call_operand.vmem [shape: f32[2,4,256], index: 0, kind: input, shape index: {}]
  %s1 = inlined_call_operand.vmem [shape: bf16[384,4], index: 1, kind: input, shape index: {}]
  %s2 = inlined_call_operand.vmem [shape: bf16[4,128], index: 2, kind: input, shape index: {}]
  %s3 = inlined_call_operand.vmem [shape: f32[4,1], index: 3, kind: input, shape index: {}]
  %s4 = inlined_call_operand.hbm [shape: f32[2,4,256], index: 4, kind: output, shape index: {}]
  %s5 = sld [smem:[#allocation0]]
  $region49: #{tpu_custom_call.1} parent=0
    _
  %s7 = ssub.s32 1, %s5
  %s8 = scalar_select 0, %s7, %s5
  $region1: #{tpu_custom_call.1} parent=0
    #allocation2 [shape = 'u8[8192]{0}', space=vmem, size = 0x2000, scoped, tag = 'output window, operand 0']
    #allocation3 [shape = 's32[2]{0}', space=sflag, size = 0x8, scoped, tag = 'scoped memory for tpu_custom_call.1']
    %9 = vsyncpa [#allocation3], 0
    %s10 = scalar_lea.sflag [#allocation3], 1
    %11 = vsyncpa %s10, 0
    loop: start=0, step=1, limit=4
    $region2: #{tpu_custom_call.1} parent=1 // loop_pre_header
      _
    $region3: #{tpu_custom_call.1} parent=1 // loop_header
      %s13 = sphi 0, %s17
      %p14 = scmp.ge.s32.totalorder %s13, 4
      %s23 = sphi 0, %s25
      %s26 = sphi 0, %s23
      %s27 = sphi 0, %s26
      %s43 = sphi 0, %s27
      %s47 = sphi 0, %s47
      %s49 = sphi 0, %s47
      %s50 = sphi 0, %s49
      %s64 = sphi 0, %s50
      %s68 = sphi 0, %s68
      %s70 = sphi 0, %s68
      %s71 = sphi 0, %s70
      %s85 = sphi 0, %s71
      %s89 = sphi 0, %s89
      %s91 = sphi 0, %s89
      %s92 = sphi 0, %s91
      %s106 = sphi 0, %s92
      %s112 = sphi 0, %s114
      %s115 = sphi 0, %s112
      %s116 = sphi 0, %s115
      %s132 = sphi 0, %s116
    $region4: #{tpu_custom_call.1} parent=1 // loop_header_branch
      %16 = sbr.rel (%p14) target = $region8
    $region5: #{tpu_custom_call.1} parent=1 // loop_body
      %s18 = ssub.s32 %s13, 1
      %s19 = ssub.s32 %s13, 2
      %s20 = sadd.s32 %s13, 1
      %s21 = ssub.s32 %s13, %s20
      %p22 = scmp.eq.s32.totalorder %s21, 0
      %s24 = sadd.s32 %s23, 1
      %s25 = scalar_select %p22, %s23, %s24
      %p28 = pneg %p22
      %p29 = scmp.eq.s32.totalorder %s13, 1
      %p30 = por %p28, %p29
      %p31 = scmp.ne.s32.totalorder %s23, %s26
      %p32 = scmp.eq.s32.totalorder %s13, 0
      %p33 = por %p31, %p32
      %p34 = scmp.ne.s32.totalorder %s23, %s26
      %p35 = scmp.eq.s32.totalorder %s18, 1
      %p36 = por %p34, %p35
      %p37 = scmp.ne.s32.totalorder %s26, %s27
      %p38 = scmp.eq.s32.totalorder %s18, 0
      %p39 = por %p37, %p38
      %p40 = scmp.ne.s32.totalorder %s26, %s27
      %p41 = scmp.eq.s32.totalorder %s19, 1
      %p42 = por %p40, %p41
      %p44 = scmp.ne.s32.totalorder %s27, %s43
      %p45 = scmp.eq.s32.totalorder %s19, 0
      %p46 = por %p44, %p45
      %s48 = sadd.s32 %s47, 1
      %p51 = scmp.eq.s32.totalorder %s13, 1
      %p52 = scmp.ne.s32.totalorder %s47, %s49
      %p53 = scmp.eq.s32.totalorder %s13, 0
      %p54 = por %p52, %p53
      %p55 = scmp.ne.s32.totalorder %s47, %s49
      %p56 = scmp.eq.s32.totalorder %s18, 1
      %p57 = por %p55, %p56
      %p58 = scmp.ne.s32.totalorder %s49, %s50
      %p59 = scmp.eq.s32.totalorder %s18, 0
      %p60 = por %p58, %p59
      %p61 = scmp.ne.s32.totalorder %s49, %s50
      %p62 = scmp.eq.s32.totalorder %s19, 1
      %p63 = por %p61, %p62
      %p65 = scmp.ne.s32.totalorder %s50, %s64
      %p66 = scmp.eq.s32.totalorder %s19, 0
      %p67 = por %p65, %p66
      %s69 = sadd.s32 %s68, 1
      %p72 = scmp.eq.s32.totalorder %s13, 1
      %p73 = scmp.ne.s32.totalorder %s68, %s70
      %p74 = scmp.eq.s32.totalorder %s13, 0
      %p75 = por %p73, %p74
      %p76 = scmp.ne.s32.totalorder %s68, %s70
      %p77 = scmp.eq.s32.totalorder %s18, 1
      %p78 = por %p76, %p77
      %p79 = scmp.ne.s32.totalorder %s70, %s71
      %p80 = scmp.eq.s32.totalorder %s18, 0
      %p81 = por %p79, %p80
      %p82 = scmp.ne.s32.totalorder %s70, %s71
      %p83 = scmp.eq.s32.totalorder %s19, 1
      %p84 = por %p82, %p83
      %p86 = scmp.ne.s32.totalorder %s71, %s85
      %p87 = scmp.eq.s32.totalorder %s19, 0
      %p88 = por %p86, %p87
      %s90 = sadd.s32 %s89, 1
      %p93 = scmp.eq.s32.totalorder %s13, 1
      %p94 = scmp.ne.s32.totalorder %s89, %s91
      %p95 = scmp.eq.s32.totalorder %s13, 0
      %p96 = por %p94, %p95
      %p97 = scmp.ne.s32.totalorder %s89, %s91
      %p98 = scmp.eq.s32.totalorder %s18, 1
      %p99 = por %p97, %p98
      %p100 = scmp.ne.s32.totalorder %s91, %s92
      %p101 = scmp.eq.s32.totalorder %s18, 0
      %p102 = por %p100, %p101
      %p103 = scmp.ne.s32.totalorder %s91, %s92
      %p104 = scmp.eq.s32.totalorder %s19, 1
      %p105 = por %p103, %p104
      %p107 = scmp.ne.s32.totalorder %s92, %s106
      %p108 = scmp.eq.s32.totalorder %s19, 0
      %p109 = por %p107, %p108
      %s110 = ssub.s32 %s13, %s20
      %p111 = scmp.eq.s32.totalorder %s110, 0
      %s113 = sadd.s32 %s112, 1
      %s114 = scalar_select %p111, %s112, %s113
      %p117 = pneg %p111
      %p118 = scmp.eq.s32.totalorder %s13, 1
      %p119 = por %p117, %p118
      %p120 = scmp.ne.s32.totalorder %s112, %s115
      %p121 = scmp.eq.s32.totalorder %s13, 0
      %p122 = por %p120, %p121
      %p123 = scmp.ne.s32.totalorder %s112, %s115
      %p124 = scmp.eq.s32.totalorder %s18, 1
      %p125 = por %p123, %p124
      %p126 = scmp.ne.s32.totalorder %s115, %s116
      %p127 = scmp.eq.s32.totalorder %s18, 0
      %p128 = por %p126, %p127
      %p129 = scmp.ne.s32.totalorder %s115, %s116
      %p130 = scmp.eq.s32.totalorder %s19, 1
      %p131 = por %p129, %p130
      %p133 = scmp.ne.s32.totalorder %s116, %s132
      %p134 = scmp.eq.s32.totalorder %s19, 0
      %p135 = por %p133, %p134
      %p136 = scmp.le.s32.totalorder 1, %s13
      %p137 = scmp.lt.s32.totalorder %s13, 3
      %p138 = pnand %p136, %p137
      %p139 = pneg %p138
      // Predicated region
      $region9: #{tpu_custom_call.1} parent=5 // pred_check
        _
      $region10: #{tpu_custom_call.1} parent=5 // pred_check_branch
        %141 = sbr.rel (%p138) target = $region12
      $region11: #{tpu_custom_call.1} parent=5 // pred_region
        %s142 = ssub.s32 %s13, 1
        // Predicated region
        $region13: #{tpu_custom_call.1} parent=11 // pred_check
          %p143 = pneg %p60
        $region14: #{tpu_custom_call.1} parent=11 // pred_check_branch
          %145 = sbr.rel (%p143) target = $region16
        $region15: #{tpu_custom_call.1} parent=11 // pred_region
          _
        $region16: #{tpu_custom_call.1} parent=11 // pred_fallthru
          _
        // Predicated region
        $region17: #{tpu_custom_call.1} parent=11 // pred_check
          %p146 = pneg %p81
        $region18: #{tpu_custom_call.1} parent=11 // pred_check_branch
          %148 = sbr.rel (%p146) target = $region20
        $region19: #{tpu_custom_call.1} parent=11 // pred_region
          _
        $region20: #{tpu_custom_call.1} parent=11 // pred_fallthru
          _
        // Predicated region
        $region21: #{tpu_custom_call.1} parent=11 // pred_check
          %p149 = pneg %p102
        $region22: #{tpu_custom_call.1} parent=11 // pred_check_branch
          %151 = sbr.rel (%p149) target = $region24
        $region23: #{tpu_custom_call.1} parent=11 // pred_region
          _
        $region24: #{tpu_custom_call.1} parent=11 // pred_fallthru
          _
      $region12: #{tpu_custom_call.1} parent=5 // pred_fallthru
        _
      %p152 = scmp.lt.s32.totalorder %s13, 2
      // Predicated region
      $region25: #{tpu_custom_call.1} parent=5 // pred_check
        %p153 = pneg %p152
      $region26: #{tpu_custom_call.1} parent=5 // pred_check_branch
        %155 = sbr.rel (%p153) target = $region28
      $region27: #{tpu_custom_call.1} parent=5 // pred_region
        // Predicated region
        $region29: #{tpu_custom_call.1} parent=27 // pred_check
          %p156 = pneg %p33
        $region30: #{tpu_custom_call.1} parent=27 // pred_check_branch
          %158 = sbr.rel (%p156) target = $region32
        $region31: #{tpu_custom_call.1} parent=27 // pred_region
          %p159 = scmp.lt.s32.totalorder %s13, 1
          %s160 = scalar_select %p159, %s13, 1
          %s161 = smul.addr %s160, 2
          %s162 = smul.addr %s161, 4
          %s163 = scalar_lea.vmem %s0, %s162
        $region32: #{tpu_custom_call.1} parent=27 // pred_fallthru
          _
      $region28: #{tpu_custom_call.1} parent=5 // pred_fallthru
        _
      %p164 = scmp.le.s32.totalorder 1, %s13
      %p165 = scmp.lt.s32.totalorder %s13, 3
      %p166 = pnand %p164, %p165
      %p167 = pneg %p166
      // Predicated region
      $region33: #{tpu_custom_call.1} parent=5 // pred_check
        _
      $region34: #{tpu_custom_call.1} parent=5 // pred_check_branch
        %169 = sbr.rel (%p166) target = $region36
      $region35: #{tpu_custom_call.1} parent=5 // pred_region
        %s170 = ssub.s32 %s13, 1
        %p171 = scmp.lt.s32.totalorder %s18, 1
        %s172 = scalar_select %p171, %s18, 1
        %s173 = smul.addr %s172, 2
        %s174 = smul.addr %s173, 4
        %s175 = scalar_lea.vmem %s0, %s174
        %p176 = pneg %p39
        %p177 = pneg %p36
        %p178 = pneg %p60
        %p179 = pneg %p57
        %p180 = pneg %p81
        %p181 = pneg %p78
        %p182 = pneg %p102
        %p183 = pneg %p99
        %p184 = pneg %p128
        %p185 = pneg %p125
        %s186 = sand.u32 %s115, 1
        %s187 = scalar_lea.sflag [#allocation3], %s186
        %s188 = sand.u32 %s115, 1
        %s189 = smul.addr %s188, 8
        %s190 = scalar_lea.vmem [#allocation2], %s189
        %p191 = scmp.lt.s32.totalorder %s18, 1
        %s192 = scalar_select %p191, %s18, 1
        %s193 = smul.addr %s192, 2
        %s194 = smul.addr %s193, 4
        %s195 = scalar_lea.vmem %s0, %s194
        %v197 = vld [vmem:[%s195] sm:$0xff]
        %v198 = vmul.f32 %v197, %v197
        %200 = vst [vmem:[#allocation1] ss:$2 sm:$0xff] %v198
        %v201 = vld.sshfl [vmem:[#allocation1] sm:$0xff pattern:$0x75316420]
        %v202 = vld.sshfl [vmem:[#allocation1 + $0x8] sm:$0xff pattern:$0x75316420]
        %vm205 = vcmask 1043456
        %v206 = vsel %vm205, %v201, 0.0
        %v207 = vrot.slane %v206, 4
        %v208 = vadd.f32 %v206, %v207
        %v209 = vrot.slane %v208, 2
        %v210 = vadd.f32 %v208, %v209
        %v211 = vrot.slane %v210, 1
        %v212 = vadd.f32 %v210, %v211
        %v213 = vsel %vm205, %v202, 0.0
        %v214 = vrot.slane %v213, 4
        %v215 = vadd.f32 %v213, %v214
        %v216 = vrot.slane %v215, 2
        %v217 = vadd.f32 %v215, %v216
        %v218 = vrot.slane %v217, 1
        %v219 = vadd.f32 %v217, %v218
        %v220 = vrsqrt.pop %v212
        %v221 = vmul.f32 %v220, %v212
        %v222 = vmul.f32 %v221, %v220
        %v223 = vmul.f32 0.5, %v222
        %v224 = vsub.f32 1.5, %v223
        %v225 = vmul.f32 %v220, %v224
        %vm226 = vweird.f32 %v212
        %vm227 = vweird.f32 %v220
        %vm228 = vmor %vm226, %vm227
        %v229 = vsel %vm228, %v220, %v225
        %v230 = vrsqrt.pop %v219
        %v231 = vmul.f32 %v230, %v219
        %v232 = vmul.f32 %v231, %v230
        %v233 = vmul.f32 0.5, %v232
        %v234 = vsub.f32 1.5, %v233
        %v235 = vmul.f32 %v230, %v234
        %vm236 = vweird.f32 %v219
        %vm237 = vweird.f32 %v230
        %vm238 = vmor %vm236, %vm237
        %v239 = vsel %vm238, %v230, %v235
        %v240 = vmin.f32 %v229, 1e+12
        %v241 = vmin.f32 %v239, 1e+12
        %v244 = vrot.slane %v241, 4
        %v245 = vsel %vm205, %v240, %v244
        %v247 = vmul.f32 %v197, %v245
        %249 = vst [vmem:[#allocation1] ss:$2 sm:$0xff] %v247
        %v250 = vld.sshfl [vmem:[#allocation1] sm:$0xff pattern:$0x75316420]
        %v251 = vld.sshfl [vmem:[#allocation1 + $0x8] sm:$0xff pattern:$0x75316420]
        %v254 = vpack.c.bf16 %v250, %v250
        %v255 = vpack.c.bf16 %v251, %v251
        %v256 = vld [vmem:[%s1] sm:$0xf]
        %v257 = vld [vmem:[%s1 + $0x4] sm:$0xf]
        %v258 = vld [vmem:[%s1 + $0x8] sm:$0xf]
        %v259 = vld [vmem:[%s1 + $0xc] sm:$0xf]
        %v260 = vld [vmem:[%s1 + $0x10] sm:$0xf]
        %v261 = vld [vmem:[%s1 + $0x14] sm:$0xf]
        %v262 = vld [vmem:[%s1 + $0x18] sm:$0xf]
        %v263 = vld [vmem:[%s1 + $0x1c] sm:$0xf]
        %v264 = vld [vmem:[%s1 + $0x20] sm:$0xf]
        %v265 = vld [vmem:[%s1 + $0x24] sm:$0xf]
        %v266 = vld [vmem:[%s1 + $0x28] sm:$0xf]
        %v267 = vld [vmem:[%s1 + $0x2c] sm:$0xf]
        %v268 = vld [vmem:[%s1 + $0x30] sm:$0xf]
        %v269 = vld [vmem:[%s1 + $0x34] sm:$0xf]
        %v270 = vld [vmem:[%s1 + $0x38] sm:$0xf]
        %v271 = vld [vmem:[%s1 + $0x3c] sm:$0xf]
        %v272 = vld [vmem:[%s1 + $0x40] sm:$0xf]
        %v273 = vld [vmem:[%s1 + $0x44] sm:$0xf]
        %v274 = vld [vmem:[%s1 + $0x48] sm:$0xf]
        %v275 = vld [vmem:[%s1 + $0x4c] sm:$0xf]
        %v276 = vld [vmem:[%s1 + $0x50] sm:$0xf]
        %v277 = vld [vmem:[%s1 + $0x54] sm:$0xf]
        %v278 = vld [vmem:[%s1 + $0x58] sm:$0xf]
        %v279 = vld [vmem:[%s1 + $0x5c] sm:$0xf]
        %v280 = vld [vmem:[%s1 + $0x60] sm:$0xf]
        %v281 = vld [vmem:[%s1 + $0x64] sm:$0xf]
        %v282 = vld [vmem:[%s1 + $0x68] sm:$0xf]
        %v283 = vld [vmem:[%s1 + $0x6c] sm:$0xf]
        %v284 = vld [vmem:[%s1 + $0x70] sm:$0xf]
        %v285 = vld [vmem:[%s1 + $0x74] sm:$0xf]
        %v286 = vld [vmem:[%s1 + $0x78] sm:$0xf]
        %v287 = vld [vmem:[%s1 + $0x7c] sm:$0xf]
        %v288 = vld [vmem:[%s1 + $0x80] sm:$0xf]
        %v289 = vld [vmem:[%s1 + $0x84] sm:$0xf]
        %v290 = vld [vmem:[%s1 + $0x88] sm:$0xf]
        %v291 = vld [vmem:[%s1 + $0x8c] sm:$0xf]
        %v292 = vld [vmem:[%s1 + $0x90] sm:$0xf]
        %v293 = vld [vmem:[%s1 + $0x94] sm:$0xf]
        %v294 = vld [vmem:[%s1 + $0x98] sm:$0xf]
        %v295 = vld [vmem:[%s1 + $0x9c] sm:$0xf]
        %v296 = vld [vmem:[%s1 + $0xa0] sm:$0xf]
        %v297 = vld [vmem:[%s1 + $0xa4] sm:$0xf]
        %v298 = vld [vmem:[%s1 + $0xa8] sm:$0xf]
        %v299 = vld [vmem:[%s1 + $0xac] sm:$0xf]
        %v300 = vld [vmem:[%s1 + $0xb0] sm:$0xf]
        %v301 = vld [vmem:[%s1 + $0xb4] sm:$0xf]
        %v302 = vld [vmem:[%s1 + $0xb8] sm:$0xf]
        %v303 = vld [vmem:[%s1 + $0xbc] sm:$0xf]
        %v352 = vunpack.c.l.b16 %v256
        %v353 = vunpack.c.l.b16 %v257
        %v354 = vunpack.c.l.b16 %v258
        %v355 = vunpack.c.l.b16 %v259
        %v356 = vunpack.c.l.b16 %v260
        %v357 = vunpack.c.l.b16 %v261
        %v358 = vunpack.c.l.b16 %v262
        %v359 = vunpack.c.l.b16 %v263
        %v360 = vunpack.c.l.b16 %v264
        %v361 = vunpack.c.l.b16 %v265
        %v362 = vunpack.c.l.b16 %v266
        %v363 = vunpack.c.l.b16 %v267
        %v364 = vunpack.c.l.b16 %v268
        %v365 = vunpack.c.l.b16 %v269
        %v366 = vunpack.c.l.b16 %v270
        %v367 = vunpack.c.l.b16 %v271
        %v368 = vunpack.c.l.b16 %v272
        %v369 = vunpack.c.l.b16 %v273
        %v370 = vunpack.c.l.b16 %v274
        %v371 = vunpack.c.l.b16 %v275
        %v372 = vunpack.c.l.b16 %v276
        %v373 = vunpack.c.l.b16 %v277
        %v374 = vunpack.c.l.b16 %v278
        %v375 = vunpack.c.l.b16 %v279
        %v376 = vunpack.c.l.b16 %v280
        %v377 = vunpack.c.l.b16 %v281
        %v378 = vunpack.c.l.b16 %v282
        %v379 = vunpack.c.l.b16 %v283
        %v380 = vunpack.c.l.b16 %v284
        %v381 = vunpack.c.l.b16 %v285
        %v382 = vunpack.c.l.b16 %v286
        %v383 = vunpack.c.l.b16 %v287
        %v384 = vunpack.c.l.b16 %v288
        %v385 = vunpack.c.l.b16 %v289
        %v386 = vunpack.c.l.b16 %v290
        %v387 = vunpack.c.l.b16 %v291
        %v388 = vunpack.c.l.b16 %v292
        %v389 = vunpack.c.l.b16 %v293
        %v390 = vunpack.c.l.b16 %v294
        %v391 = vunpack.c.l.b16 %v295
        %v392 = vunpack.c.l.b16 %v296
        %v393 = vunpack.c.l.b16 %v297
        %v394 = vunpack.c.l.b16 %v298
        %v395 = vunpack.c.l.b16 %v299
        %v396 = vunpack.c.l.b16 %v300
        %v397 = vunpack.c.l.b16 %v301
        %v398 = vunpack.c.l.b16 %v302
        %v399 = vunpack.c.l.b16 %v303
        %v400 = vpack.c.b16 %v353, %v352
        %v401 = vpack.c.b16 %v355, %v354
        %v402 = vpack.c.b16 %v357, %v356
        %v403 = vpack.c.b16 %v359, %v358
        %v404 = vpack.c.b16 %v361, %v360
        %v405 = vpack.c.b16 %v363, %v362
        %v406 = vpack.c.b16 %v365, %v364
        %v407 = vpack.c.b16 %v367, %v366
        %v408 = vpack.c.b16 %v369, %v368
        %v409 = vpack.c.b16 %v371, %v370
        %v410 = vpack.c.b16 %v373, %v372
        %v411 = vpack.c.b16 %v375, %v374
        %v412 = vpack.c.b16 %v377, %v376
        %v413 = vpack.c.b16 %v379, %v378
        %v414 = vpack.c.b16 %v381, %v380
        %v415 = vpack.c.b16 %v383, %v382
        %v416 = vpack.c.b16 %v385, %v384
        %v417 = vpack.c.b16 %v387, %v386
        %v418 = vpack.c.b16 %v389, %v388
        %v419 = vpack.c.b16 %v391, %v390
        %v420 = vpack.c.b16 %v393, %v392
        %v421 = vpack.c.b16 %v395, %v394
        %v422 = vpack.c.b16 %v397, %v396
        %v423 = vpack.c.b16 %v399, %v398
        %vm424 = vcmask 31744
        %v426 = vsel %vm424, %v400, 0
        %v429 = vsel %vm424, %v401, 0
        %v432 = vsel %vm424, %v402, 0
        %v435 = vsel %vm424, %v403, 0
        %v438 = vsel %vm424, %v404, 0
        %v441 = vsel %vm424, %v405, 0
        %v444 = vsel %vm424, %v406, 0
        %v447 = vsel %vm424, %v407, 0
        %v450 = vsel %vm424, %v408, 0
        %v453 = vsel %vm424, %v409, 0
        %v456 = vsel %vm424, %v410, 0
        %v459 = vsel %vm424, %v411, 0
        %v462 = vsel %vm424, %v412, 0
        %v465 = vsel %vm424, %v413, 0
        %v468 = vsel %vm424, %v414, 0
        %v471 = vsel %vm424, %v415, 0
        %v474 = vsel %vm424, %v416, 0
        %v477 = vsel %vm424, %v417, 0
        %v480 = vsel %vm424, %v418, 0
        %v483 = vsel %vm424, %v419, 0
        %v486 = vsel %vm424, %v420, 0
        %v489 = vsel %vm424, %v421, 0
        %v492 = vsel %vm424, %v422, 0
        %v495 = vsel %vm424, %v423, 0
        %vm497 = vcmask 1041408
        %v499 = vsel %vm497, %v254, 0
        %v502 = vsel %vm497, %v255, 0
        %504 = vmatpush.bf16.msra.mxu0 0
        %505 = vmatpush.bf16.msra.mxu0 0
        %506 = vmatpush.bf16.msra.mxu0 0
        %507 = vmatpush.bf16.msra.mxu0 0
        %508 = vmatpush.bf16.msra.mxu0 0
        %509 = vmatpush.bf16.msra.mxu0 0
        %510 = vmatpush.bf16.msra.mxu0 0
        %511 = vmatpush.bf16.msra.mxu0 %v499
        %512 = vmatmul.bf16.gmra.mxu0 %v426
        %v513 = vpop.f32.mrf.mxu0
        %v514 = vadd.f32 0.0, %v513
        %v515 = vpop.f32.mrf.mxu0
        %v516 = vadd.f32 0.0, %v515
        %517 = vmatmul.bf16.gmra.mxu0 %v429
        %v518 = vpop.f32.mrf.mxu0
        %v519 = vadd.f32 0.0, %v518
        %v520 = vpop.f32.mrf.mxu0
        %v521 = vadd.f32 0.0, %v520
        %522 = vmatmul.bf16.gmra.mxu0 %v432
        %v523 = vpop.f32.mrf.mxu0
        %v524 = vadd.f32 0.0, %v523
        %v525 = vpop.f32.mrf.mxu0
        %v526 = vadd.f32 0.0, %v525
        %527 = vmatmul.bf16.gmra.mxu0 %v435
        %v528 = vpop.f32.mrf.mxu0
        %v529 = vadd.f32 0.0, %v528
        %v530 = vpop.f32.mrf.mxu0
        %v531 = vadd.f32 0.0, %v530
        %532 = vmatmul.bf16.gmra.mxu0 %v438
        %v533 = vpop.f32.mrf.mxu0
        %v534 = vadd.f32 0.0, %v533
        %v535 = vpop.f32.mrf.mxu0
        %v536 = vadd.f32 0.0, %v535
        %537 = vmatmul.bf16.gmra.mxu0 %v441
        %v538 = vpop.f32.mrf.mxu0
        %v539 = vadd.f32 0.0, %v538
        %v540 = vpop.f32.mrf.mxu0
        %v541 = vadd.f32 0.0, %v540
        %542 = vmatmul.bf16.gmra.mxu0 %v444
        %v543 = vpop.f32.mrf.mxu0
        %v544 = vadd.f32 0.0, %v543
        %v545 = vpop.f32.mrf.mxu0
        %v546 = vadd.f32 0.0, %v545
        %547 = vmatmul.bf16.gmra.mxu0 %v447
        %v548 = vpop.f32.mrf.mxu0
        %v549 = vadd.f32 0.0, %v548
        %v550 = vpop.f32.mrf.mxu0
        %v551 = vadd.f32 0.0, %v550
        %552 = vmatmul.bf16.gmra.mxu0 %v450
        %v553 = vpop.f32.mrf.mxu0
        %v554 = vadd.f32 0.0, %v553
        %v555 = vpop.f32.mrf.mxu0
        %v556 = vadd.f32 0.0, %v555
        %557 = vmatmul.bf16.gmra.mxu0 %v453
        %v558 = vpop.f32.mrf.mxu0
        %v559 = vadd.f32 0.0, %v558
        %v560 = vpop.f32.mrf.mxu0
        %v561 = vadd.f32 0.0, %v560
        %562 = vmatmul.bf16.gmra.mxu0 %v456
        %v563 = vpop.f32.mrf.mxu0
        %v564 = vadd.f32 0.0, %v563
        %v565 = vpop.f32.mrf.mxu0
        %v566 = vadd.f32 0.0, %v565
        %567 = vmatmul.bf16.gmra.mxu0 %v459
        %v568 = vpop.f32.mrf.mxu0
        %v569 = vadd.f32 0.0, %v568
        %v570 = vpop.f32.mrf.mxu0
        %v571 = vadd.f32 0.0, %v570
        %572 = vmatmul.bf16.gmra.mxu0 %v462
        %v573 = vpop.f32.mrf.mxu0
        %v574 = vadd.f32 0.0, %v573
        %v575 = vpop.f32.mrf.mxu0
        %v576 = vadd.f32 0.0, %v575
        %577 = vmatmul.bf16.gmra.mxu0 %v465
        %v578 = vpop.f32.mrf.mxu0
        %v579 = vadd.f32 0.0, %v578
        %v580 = vpop.f32.mrf.mxu0
        %v581 = vadd.f32 0.0, %v580
        %582 = vmatmul.bf16.gmra.mxu0 %v468
        %v583 = vpop.f32.mrf.mxu0
        %v584 = vadd.f32 0.0, %v583
        %v585 = vpop.f32.mrf.mxu0
        %v586 = vadd.f32 0.0, %v585
        %587 = vmatmul.bf16.gmra.mxu0 %v471
        %v588 = vpop.f32.mrf.mxu0
        %v589 = vadd.f32 0.0, %v588
        %v590 = vpop.f32.mrf.mxu0
        %v591 = vadd.f32 0.0, %v590
        %592 = vmatmul.bf16.gmra.mxu0 %v474
        %v593 = vpop.f32.mrf.mxu0
        %v594 = vadd.f32 0.0, %v593
        %v595 = vpop.f32.mrf.mxu0
        %v596 = vadd.f32 0.0, %v595
        %597 = vmatmul.bf16.gmra.mxu0 %v477
        %v598 = vpop.f32.mrf.mxu0
        %v599 = vadd.f32 0.0, %v598
        %v600 = vpop.f32.mrf.mxu0
        %v601 = vadd.f32 0.0, %v600
        %602 = vmatmul.bf16.gmra.mxu0 %v480
        %v603 = vpop.f32.mrf.mxu0
        %v604 = vadd.f32 0.0, %v603
        %v605 = vpop.f32.mrf.mxu0
        %v606 = vadd.f32 0.0, %v605
        %607 = vmatmul.bf16.gmra.mxu0 %v483
        %v608 = vpop.f32.mrf.mxu0
        %v609 = vadd.f32 0.0, %v608
        %v610 = vpop.f32.mrf.mxu0
        %v611 = vadd.f32 0.0, %v610
        %612 = vmatmul.bf16.gmra.mxu0 %v486
        %v613 = vpop.f32.mrf.mxu0
        %v614 = vadd.f32 0.0, %v613
        %v615 = vpop.f32.mrf.mxu0
        %v616 = vadd.f32 0.0, %v615
        %617 = vmatmul.bf16.gmra.mxu0 %v489
        %v618 = vpop.f32.mrf.mxu0
        %v619 = vadd.f32 0.0, %v618
        %v620 = vpop.f32.mrf.mxu0
        %v621 = vadd.f32 0.0, %v620
        %622 = vmatmul.bf16.gmra.mxu0 %v492
        %v623 = vpop.f32.mrf.mxu0
        %v624 = vadd.f32 0.0, %v623
        %v625 = vpop.f32.mrf.mxu0
        %v626 = vadd.f32 0.0, %v625
        %627 = vmatmul.bf16.gmra.mxu0 %v495
        %v628 = vpop.f32.mrf.mxu0
        %v629 = vadd.f32 0.0, %v628
        %v630 = vpop.f32.mrf.mxu0
        %v631 = vadd.f32 0.0, %v630
        %632 = vdwg.mxu0
        %633 = vmatpush.bf16.msra.mxu0 0
        %634 = vmatpush.bf16.msra.mxu0 0
        %635 = vmatpush.bf16.msra.mxu0 0
        %636 = vmatpush.bf16.msra.mxu0 0
        %637 = vmatpush.bf16.msra.mxu0 0
        %638 = vmatpush.bf16.msra.mxu0 0
        %639 = vmatpush.bf16.msra.mxu0 0
        %640 = vmatpush.bf16.msra.mxu0 %v502
        %641 = vmatmul.bf16.gmra.mxu0 %v426
        %v642 = vpop.f32.mrf.mxu0
        %v643 = vadd.f32 0.0, %v642
        %v644 = vpop.f32.mrf.mxu0
        %v645 = vadd.f32 0.0, %v644
        %646 = vmatmul.bf16.gmra.mxu0 %v429
        %v647 = vpop.f32.mrf.mxu0
        %v648 = vadd.f32 0.0, %v647
        %v649 = vpop.f32.mrf.mxu0
        %v650 = vadd.f32 0.0, %v649
        %651 = vmatmul.bf16.gmra.mxu0 %v432
        %v652 = vpop.f32.mrf.mxu0
        %v653 = vadd.f32 0.0, %v652
        %v654 = vpop.f32.mrf.mxu0
        %v655 = vadd.f32 0.0, %v654
        %656 = vmatmul.bf16.gmra.mxu0 %v435
        %v657 = vpop.f32.mrf.mxu0
        %v658 = vadd.f32 0.0, %v657
        %v659 = vpop.f32.mrf.mxu0
        %v660 = vadd.f32 0.0, %v659
        %661 = vmatmul.bf16.gmra.mxu0 %v438
        %v662 = vpop.f32.mrf.mxu0
        %v663 = vadd.f32 0.0, %v662
        %v664 = vpop.f32.mrf.mxu0
        %v665 = vadd.f32 0.0, %v664
        %666 = vmatmul.bf16.gmra.mxu0 %v441
        %v667 = vpop.f32.mrf.mxu0
        %v668 = vadd.f32 0.0, %v667
        %v669 = vpop.f32.mrf.mxu0
        %v670 = vadd.f32 0.0, %v669
        %671 = vmatmul.bf16.gmra.mxu0 %v444
        %v672 = vpop.f32.mrf.mxu0
        %v673 = vadd.f32 0.0, %v672
        %v674 = vpop.f32.mrf.mxu0
        %v675 = vadd.f32 0.0, %v674
        %676 = vmatmul.bf16.gmra.mxu0 %v447
        %v677 = vpop.f32.mrf.mxu0
        %v678 = vadd.f32 0.0, %v677
        %v679 = vpop.f32.mrf.mxu0
        %v680 = vadd.f32 0.0, %v679
        %681 = vmatmul.bf16.gmra.mxu0 %v450
        %v682 = vpop.f32.mrf.mxu0
        %v683 = vadd.f32 0.0, %v682
        %v684 = vpop.f32.mrf.mxu0
        %v685 = vadd.f32 0.0, %v684
        %686 = vmatmul.bf16.gmra.mxu0 %v453
        %v687 = vpop.f32.mrf.mxu0
        %v688 = vadd.f32 0.0, %v687
        %v689 = vpop.f32.mrf.mxu0
        %v690 = vadd.f32 0.0, %v689
        %691 = vmatmul.bf16.gmra.mxu0 %v456
        %v692 = vpop.f32.mrf.mxu0
        %v693 = vadd.f32 0.0, %v692
        %v694 = vpop.f32.mrf.mxu0
        %v695 = vadd.f32 0.0, %v694
        %696 = vmatmul.bf16.gmra.mxu0 %v459
        %v697 = vpop.f32.mrf.mxu0
        %v698 = vadd.f32 0.0, %v697
        %v699 = vpop.f32.mrf.mxu0
        %v700 = vadd.f32 0.0, %v699
        %701 = vmatmul.bf16.gmra.mxu0 %v462
        %v702 = vpop.f32.mrf.mxu0
        %v703 = vadd.f32 0.0, %v702
        %v704 = vpop.f32.mrf.mxu0
        %v705 = vadd.f32 0.0, %v704
        %706 = vmatmul.bf16.gmra.mxu0 %v465
        %v707 = vpop.f32.mrf.mxu0
        %v708 = vadd.f32 0.0, %v707
        %v709 = vpop.f32.mrf.mxu0
        %v710 = vadd.f32 0.0, %v709
        %711 = vmatmul.bf16.gmra.mxu0 %v468
        %v712 = vpop.f32.mrf.mxu0
        %v713 = vadd.f32 0.0, %v712
        %v714 = vpop.f32.mrf.mxu0
        %v715 = vadd.f32 0.0, %v714
        %716 = vmatmul.bf16.gmra.mxu0 %v471
        %v717 = vpop.f32.mrf.mxu0
        %v718 = vadd.f32 0.0, %v717
        %v719 = vpop.f32.mrf.mxu0
        %v720 = vadd.f32 0.0, %v719
        %721 = vmatmul.bf16.gmra.mxu0 %v474
        %v722 = vpop.f32.mrf.mxu0
        %v723 = vadd.f32 0.0, %v722
        %v724 = vpop.f32.mrf.mxu0
        %v725 = vadd.f32 0.0, %v724
        %726 = vmatmul.bf16.gmra.mxu0 %v477
        %v727 = vpop.f32.mrf.mxu0
        %v728 = vadd.f32 0.0, %v727
        %v729 = vpop.f32.mrf.mxu0
        %v730 = vadd.f32 0.0, %v729
        %731 = vmatmul.bf16.gmra.mxu0 %v480
        %v732 = vpop.f32.mrf.mxu0
        %v733 = vadd.f32 0.0, %v732
        %v734 = vpop.f32.mrf.mxu0
        %v735 = vadd.f32 0.0, %v734
        %736 = vmatmul.bf16.gmra.mxu0 %v483
        %v737 = vpop.f32.mrf.mxu0
        %v738 = vadd.f32 0.0, %v737
        %v739 = vpop.f32.mrf.mxu0
        %v740 = vadd.f32 0.0, %v739
        %741 = vmatmul.bf16.gmra.mxu0 %v486
        %v742 = vpop.f32.mrf.mxu0
        %v743 = vadd.f32 0.0, %v742
        %v744 = vpop.f32.mrf.mxu0
        %v745 = vadd.f32 0.0, %v744
        %746 = vmatmul.bf16.gmra.mxu0 %v489
        %v747 = vpop.f32.mrf.mxu0
        %v748 = vadd.f32 0.0, %v747
        %v749 = vpop.f32.mrf.mxu0
        %v750 = vadd.f32 0.0, %v749
        %751 = vmatmul.bf16.gmra.mxu0 %v492
        %v752 = vpop.f32.mrf.mxu0
        %v753 = vadd.f32 0.0, %v752
        %v754 = vpop.f32.mrf.mxu0
        %v755 = vadd.f32 0.0, %v754
        %756 = vmatmul.bf16.gmra.mxu0 %v495
        %v757 = vpop.f32.mrf.mxu0
        %v758 = vadd.f32 0.0, %v757
        %v759 = vpop.f32.mrf.mxu0
        %v760 = vadd.f32 0.0, %v759
        %761 = vdwg.mxu0
        %v762 = vpack.c.bf16 %v643, %v514
        %v763 = vpack.c.bf16 %v645, %v516
        %v764 = vpack.c.bf16 %v648, %v519
        %v765 = vpack.c.bf16 %v650, %v521
        %v766 = vpack.c.bf16 %v653, %v524
        %v767 = vpack.c.bf16 %v655, %v526
        %v768 = vpack.c.bf16 %v658, %v529
        %v769 = vpack.c.bf16 %v660, %v531
        %v770 = vpack.c.bf16 %v663, %v534
        %v771 = vpack.c.bf16 %v665, %v536
        %v772 = vpack.c.bf16 %v668, %v539
        %v773 = vpack.c.bf16 %v670, %v541
        %v774 = vpack.c.bf16 %v673, %v544
        %v775 = vpack.c.bf16 %v675, %v546
        %v776 = vpack.c.bf16 %v678, %v549
        %v777 = vpack.c.bf16 %v680, %v551
        %v778 = vpack.c.bf16 %v683, %v554
        %v779 = vpack.c.bf16 %v685, %v556
        %v780 = vpack.c.bf16 %v688, %v559
        %v781 = vpack.c.bf16 %v690, %v561
        %v782 = vpack.c.bf16 %v693, %v564
        %v783 = vpack.c.bf16 %v695, %v566
        %v784 = vpack.c.bf16 %v698, %v569
        %v785 = vpack.c.bf16 %v700, %v571
        %v786 = vpack.c.bf16 %v703, %v574
        %v787 = vpack.c.bf16 %v705, %v576
        %v788 = vpack.c.bf16 %v708, %v579
        %v789 = vpack.c.bf16 %v710, %v581
        %v790 = vpack.c.bf16 %v713, %v584
        %v791 = vpack.c.bf16 %v715, %v586
        %v792 = vpack.c.bf16 %v718, %v589
        %v793 = vpack.c.bf16 %v720, %v591
        %v794 = vpack.c.bf16 %v723, %v594
        %v795 = vpack.c.bf16 %v725, %v596
        %v796 = vpack.c.bf16 %v728, %v599
        %v797 = vpack.c.bf16 %v730, %v601
        %v798 = vpack.c.bf16 %v733, %v604
        %v799 = vpack.c.bf16 %v735, %v606
        %v800 = vpack.c.bf16 %v738, %v609
        %v801 = vpack.c.bf16 %v740, %v611
        %v802 = vpack.c.bf16 %v743, %v614
        %v803 = vpack.c.bf16 %v745, %v616
        %v804 = vpack.c.bf16 %v748, %v619
        %v805 = vpack.c.bf16 %v750, %v621
        %v806 = vpack.c.bf16 %v753, %v624
        %v807 = vpack.c.bf16 %v755, %v626
        %v808 = vpack.c.bf16 %v758, %v629
        %v809 = vpack.c.bf16 %v760, %v631
        %v814 = vunpack.c.l.b16 %v778
        %v815 = vunpack.c.h.b16 %v778
        %v816 = vunpack.c.l.b16 %v779
        %v817 = vunpack.c.h.b16 %v779
        %v818 = vunpack.c.l.b16 %v780
        %v819 = vunpack.c.h.b16 %v780
        %v820 = vunpack.c.l.b16 %v781
        %v821 = vunpack.c.h.b16 %v781
        %v822 = vpack.c.b16 %v816, %v814
        %v823 = vpack.c.b16 %v817, %v815
        %v824 = vpack.c.b16 %v820, %v818
        %v825 = vpack.c.b16 %v821, %v819
        %830 = vxpose.binary.xlu0.c.b16.start [1/16] %v823, %v822, 128
        %831 = vxpose.binary.xlu0.c.b16.cont [2/16] %v825, %v824, 128
        %832 = vxpose.binary.xlu0.c.b16.cont [3/16] 0, 0, 128
        %833 = vxpose.binary.xlu0.c.b16.cont [4/16] 0, 0, 128
        %834 = vxpose.binary.xlu0.c.b16.cont [5/16] 0, 0, 128
        %835 = vxpose.binary.xlu0.c.b16.cont [6/16] 0, 0, 128
        %836 = vxpose.binary.xlu0.c.b16.cont [7/16] 0, 0, 128
        %837 = vxpose.binary.xlu0.c.b16.end [8/16] 0, 0, 128
        %v838 = vpop.trf.xlu0
        %v839 = vpop.trf.xlu0
        %v840 = vpop.trf.xlu0
        %v841 = vpop.trf.xlu0
        %v842 = vpop.trf.xlu0
        %v843 = vpop.trf.xlu0
        %v844 = vpop.trf.xlu0
        %v845 = vpop.trf.xlu0
        %v846 = vpop.trf.xlu0
        %v847 = vpop.trf.xlu0
        %v848 = vpop.trf.xlu0
        %v849 = vpop.trf.xlu0
        %v850 = vpop.trf.xlu0
        %v851 = vpop.trf.xlu0
        %v852 = vpop.trf.xlu0
        %v853 = vpop.trf.xlu0
        %v858 = vunpack.c.l.b16 %v762
        %v859 = vunpack.c.h.b16 %v762
        %v860 = vunpack.c.l.b16 %v763
        %v861 = vunpack.c.h.b16 %v763
        %v862 = vunpack.c.l.b16 %v764
        %v863 = vunpack.c.h.b16 %v764
        %v864 = vunpack.c.l.b16 %v765
        %v865 = vunpack.c.h.b16 %v765
        %v866 = vpack.c.b16 %v860, %v858
        %v867 = vpack.c.b16 %v861, %v859
        %v868 = vpack.c.b16 %v864, %v862
        %v869 = vpack.c.b16 %v865, %v863
        %vm874 = vcmask 261120
        %v876 = vsel %vm874, %v838, 0
        %v879 = vsel %vm874, %v840, 0
        %v882 = vsel %vm874, %v842, 0
        %v885 = vsel %vm874, %v844, 0
        %v888 = vsel %vm874, %v846, 0
        %v891 = vsel %vm874, %v848, 0
        %v894 = vsel %vm874, %v850, 0
        %v897 = vsel %vm874, %v852, 0
        %v900 = vsel %vm874, %v839, 0
        %v903 = vsel %vm874, %v841, 0
        %v906 = vsel %vm874, %v843, 0
        %v909 = vsel %vm874, %v845, 0
        %v912 = vsel %vm874, %v847, 0
        %v915 = vsel %vm874, %v849, 0
        %v918 = vsel %vm874, %v851, 0
        %v921 = vsel %vm874, %v853, 0
        %923 = vmatpush.bf16.msra.mxu0 0
        %924 = vmatpush.bf16.msra.mxu0 0
        %925 = vmatpush.bf16.msra.mxu0 0
        %926 = vmatpush.bf16.msra.mxu0 0
        %927 = vmatpush.bf16.msra.mxu0 0
        %928 = vmatpush.bf16.msra.mxu0 0
        %929 = vmatpush.bf16.msra.mxu0 %v868
        %930 = vmatpush.bf16.msra.mxu0 %v866
        %931 = vmatmul.bf16.gmra.mxu0 %v876
        %v932 = vpop.f32.mrf.mxu0
        %v933 = vadd.f32 0.0, %v932
        %v934 = vpop.f32.mrf.mxu0
        %v935 = vadd.f32 0.0, %v934
        %936 = vmatmul.bf16.gmra.mxu0 %v879
        %v937 = vpop.f32.mrf.mxu0
        %v938 = vadd.f32 0.0, %v937
        %v939 = vpop.f32.mrf.mxu0
        %v940 = vadd.f32 0.0, %v939
        %941 = vmatmul.bf16.gmra.mxu0 %v882
        %v942 = vpop.f32.mrf.mxu0
        %v943 = vadd.f32 0.0, %v942
        %v944 = vpop.f32.mrf.mxu0
        %v945 = vadd.f32 0.0, %v944
        %946 = vmatmul.bf16.gmra.mxu0 %v885
        %v947 = vpop.f32.mrf.mxu0
        %v948 = vadd.f32 0.0, %v947
        %v949 = vpop.f32.mrf.mxu0
        %v950 = vadd.f32 0.0, %v949
        %951 = vmatmul.bf16.gmra.mxu0 %v888
        %v952 = vpop.f32.mrf.mxu0
        %v953 = vadd.f32 0.0, %v952
        %v954 = vpop.f32.mrf.mxu0
        %v955 = vadd.f32 0.0, %v954
        %956 = vmatmul.bf16.gmra.mxu0 %v891
        %v957 = vpop.f32.mrf.mxu0
        %v958 = vadd.f32 0.0, %v957
        %v959 = vpop.f32.mrf.mxu0
        %v960 = vadd.f32 0.0, %v959
        %961 = vmatmul.bf16.gmra.mxu0 %v894
        %v962 = vpop.f32.mrf.mxu0
        %v963 = vadd.f32 0.0, %v962
        %v964 = vpop.f32.mrf.mxu0
        %v965 = vadd.f32 0.0, %v964
        %966 = vmatmul.bf16.gmra.mxu0 %v897
        %v967 = vpop.f32.mrf.mxu0
        %v968 = vadd.f32 0.0, %v967
        %v969 = vpop.f32.mrf.mxu0
        %v970 = vadd.f32 0.0, %v969
        %971 = vmatmul.bf16.gmra.mxu0 %v900
        %v972 = vpop.f32.mrf.mxu0
        %v973 = vadd.f32 0.0, %v972
        %v974 = vpop.f32.mrf.mxu0
        %v975 = vadd.f32 0.0, %v974
        %976 = vmatmul.bf16.gmra.mxu0 %v903
        %v977 = vpop.f32.mrf.mxu0
        %v978 = vadd.f32 0.0, %v977
        %v979 = vpop.f32.mrf.mxu0
        %v980 = vadd.f32 0.0, %v979
        %981 = vmatmul.bf16.gmra.mxu0 %v906
        %v982 = vpop.f32.mrf.mxu0
        %v983 = vadd.f32 0.0, %v982
        %v984 = vpop.f32.mrf.mxu0
        %v985 = vadd.f32 0.0, %v984
        %986 = vmatmul.bf16.gmra.mxu0 %v909
        %v987 = vpop.f32.mrf.mxu0
        %v988 = vadd.f32 0.0, %v987
        %v989 = vpop.f32.mrf.mxu0
        %v990 = vadd.f32 0.0, %v989
        %991 = vmatmul.bf16.gmra.mxu0 %v912
        %v992 = vpop.f32.mrf.mxu0
        %v993 = vadd.f32 0.0, %v992
        %v994 = vpop.f32.mrf.mxu0
        %v995 = vadd.f32 0.0, %v994
        %996 = vmatmul.bf16.gmra.mxu0 %v915
        %v997 = vpop.f32.mrf.mxu0
        %v998 = vadd.f32 0.0, %v997
        %v999 = vpop.f32.mrf.mxu0
        %v1000 = vadd.f32 0.0, %v999
        %1001 = vmatmul.bf16.gmra.mxu0 %v918
        %v1002 = vpop.f32.mrf.mxu0
        %v1003 = vadd.f32 0.0, %v1002
        %v1004 = vpop.f32.mrf.mxu0
        %v1005 = vadd.f32 0.0, %v1004
        %1006 = vmatmul.bf16.gmra.mxu0 %v921
        %v1007 = vpop.f32.mrf.mxu0
        %v1008 = vadd.f32 0.0, %v1007
        %v1009 = vpop.f32.mrf.mxu0
        %v1010 = vadd.f32 0.0, %v1009
        %1011 = vdwg.mxu0
        %1012 = vmatpush.bf16.msra.mxu0 0
        %1013 = vmatpush.bf16.msra.mxu0 0
        %1014 = vmatpush.bf16.msra.mxu0 0
        %1015 = vmatpush.bf16.msra.mxu0 0
        %1016 = vmatpush.bf16.msra.mxu0 0
        %1017 = vmatpush.bf16.msra.mxu0 0
        %1018 = vmatpush.bf16.msra.mxu0 %v869
        %1019 = vmatpush.bf16.msra.mxu0 %v867
        %1020 = vmatmul.bf16.gmra.mxu0 %v876
        %v1021 = vpop.f32.mrf.mxu0
        %v1022 = vadd.f32 0.0, %v1021
        %v1023 = vpop.f32.mrf.mxu0
        %v1024 = vadd.f32 0.0, %v1023
        %1025 = vmatmul.bf16.gmra.mxu0 %v879
        %v1026 = vpop.f32.mrf.mxu0
        %v1027 = vadd.f32 0.0, %v1026
        %v1028 = vpop.f32.mrf.mxu0
        %v1029 = vadd.f32 0.0, %v1028
        %1030 = vmatmul.bf16.gmra.mxu0 %v882
        %v1031 = vpop.f32.mrf.mxu0
        %v1032 = vadd.f32 0.0, %v1031
        %v1033 = vpop.f32.mrf.mxu0
        %v1034 = vadd.f32 0.0, %v1033
        %1035 = vmatmul.bf16.gmra.mxu0 %v885
        %v1036 = vpop.f32.mrf.mxu0
        %v1037 = vadd.f32 0.0, %v1036
        %v1038 = vpop.f32.mrf.mxu0
        %v1039 = vadd.f32 0.0, %v1038
        %1040 = vmatmul.bf16.gmra.mxu0 %v888
        %v1041 = vpop.f32.mrf.mxu0
        %v1042 = vadd.f32 0.0, %v1041
        %v1043 = vpop.f32.mrf.mxu0
        %v1044 = vadd.f32 0.0, %v1043
        %1045 = vmatmul.bf16.gmra.mxu0 %v891
        %v1046 = vpop.f32.mrf.mxu0
        %v1047 = vadd.f32 0.0, %v1046
        %v1048 = vpop.f32.mrf.mxu0
        %v1049 = vadd.f32 0.0, %v1048
        %1050 = vmatmul.bf16.gmra.mxu0 %v894
        %v1051 = vpop.f32.mrf.mxu0
        %v1052 = vadd.f32 0.0, %v1051
        %v1053 = vpop.f32.mrf.mxu0
        %v1054 = vadd.f32 0.0, %v1053
        %1055 = vmatmul.bf16.gmra.mxu0 %v897
        %v1056 = vpop.f32.mrf.mxu0
        %v1057 = vadd.f32 0.0, %v1056
        %v1058 = vpop.f32.mrf.mxu0
        %v1059 = vadd.f32 0.0, %v1058
        %1060 = vmatmul.bf16.gmra.mxu0 %v900
        %v1061 = vpop.f32.mrf.mxu0
        %v1062 = vadd.f32 0.0, %v1061
        %v1063 = vpop.f32.mrf.mxu0
        %v1064 = vadd.f32 0.0, %v1063
        %1065 = vmatmul.bf16.gmra.mxu0 %v903
        %v1066 = vpop.f32.mrf.mxu0
        %v1067 = vadd.f32 0.0, %v1066
        %v1068 = vpop.f32.mrf.mxu0
        %v1069 = vadd.f32 0.0, %v1068
        %1070 = vmatmul.bf16.gmra.mxu0 %v906
        %v1071 = vpop.f32.mrf.mxu0
        %v1072 = vadd.f32 0.0, %v1071
        %v1073 = vpop.f32.mrf.mxu0
        %v1074 = vadd.f32 0.0, %v1073
        %1075 = vmatmul.bf16.gmra.mxu0 %v909
        %v1076 = vpop.f32.mrf.mxu0
        %v1077 = vadd.f32 0.0, %v1076
        %v1078 = vpop.f32.mrf.mxu0
        %v1079 = vadd.f32 0.0, %v1078
        %1080 = vmatmul.bf16.gmra.mxu0 %v912
        %v1081 = vpop.f32.mrf.mxu0
        %v1082 = vadd.f32 0.0, %v1081
        %v1083 = vpop.f32.mrf.mxu0
        %v1084 = vadd.f32 0.0, %v1083
        %1085 = vmatmul.bf16.gmra.mxu0 %v915
        %v1086 = vpop.f32.mrf.mxu0
        %v1087 = vadd.f32 0.0, %v1086
        %v1088 = vpop.f32.mrf.mxu0
        %v1089 = vadd.f32 0.0, %v1088
        %1090 = vmatmul.bf16.gmra.mxu0 %v918
        %v1091 = vpop.f32.mrf.mxu0
        %v1092 = vadd.f32 0.0, %v1091
        %v1093 = vpop.f32.mrf.mxu0
        %v1094 = vadd.f32 0.0, %v1093
        %1095 = vmatmul.bf16.gmra.mxu0 %v921
        %v1096 = vpop.f32.mrf.mxu0
        %v1097 = vadd.f32 0.0, %v1096
        %v1098 = vpop.f32.mrf.mxu0
        %v1099 = vadd.f32 0.0, %v1098
        %1100 = vdwg.mxu0
        %v1105 = vunpack.c.l.b16 %v782
        %v1106 = vunpack.c.h.b16 %v782
        %v1107 = vunpack.c.l.b16 %v783
        %v1108 = vunpack.c.h.b16 %v783
        %v1109 = vunpack.c.l.b16 %v784
        %v1110 = vunpack.c.h.b16 %v784
        %v1111 = vunpack.c.l.b16 %v785
        %v1112 = vunpack.c.h.b16 %v785
        %v1113 = vpack.c.b16 %v1107, %v1105
        %v1114 = vpack.c.b16 %v1108, %v1106
        %v1115 = vpack.c.b16 %v1111, %v1109
        %v1116 = vpack.c.b16 %v1112, %v1110
        %1121 = vxpose.binary.xlu0.c.b16.start [1/16] %v1114, %v1113, 128
        %1122 = vxpose.binary.xlu0.c.b16.cont [2/16] %v1116, %v1115, 128
        %1123 = vxpose.binary.xlu0.c.b16.cont [3/16] 0, 0, 128
        %1124 = vxpose.binary.xlu0.c.b16.cont [4/16] 0, 0, 128
        %1125 = vxpose.binary.xlu0.c.b16.cont [5/16] 0, 0, 128
        %1126 = vxpose.binary.xlu0.c.b16.cont [6/16] 0, 0, 128
        %1127 = vxpose.binary.xlu0.c.b16.cont [7/16] 0, 0, 128
        %1128 = vxpose.binary.xlu0.c.b16.end [8/16] 0, 0, 128
        %v1129 = vpop.trf.xlu0
        %v1130 = vpop.trf.xlu0
        %v1131 = vpop.trf.xlu0
        %v1132 = vpop.trf.xlu0
        %v1133 = vpop.trf.xlu0
        %v1134 = vpop.trf.xlu0
        %v1135 = vpop.trf.xlu0
        %v1136 = vpop.trf.xlu0
        %v1137 = vpop.trf.xlu0
        %v1138 = vpop.trf.xlu0
        %v1139 = vpop.trf.xlu0
        %v1140 = vpop.trf.xlu0
        %v1141 = vpop.trf.xlu0
        %v1142 = vpop.trf.xlu0
        %v1143 = vpop.trf.xlu0
        %v1144 = vpop.trf.xlu0
        %v1149 = vunpack.c.l.b16 %v766
        %v1150 = vunpack.c.h.b16 %v766
        %v1151 = vunpack.c.l.b16 %v767
        %v1152 = vunpack.c.h.b16 %v767
        %v1153 = vunpack.c.l.b16 %v768
        %v1154 = vunpack.c.h.b16 %v768
        %v1155 = vunpack.c.l.b16 %v769
        %v1156 = vunpack.c.h.b16 %v769
        %v1157 = vpack.c.b16 %v1151, %v1149
        %v1158 = vpack.c.b16 %v1152, %v1150
        %v1159 = vpack.c.b16 %v1155, %v1153
        %v1160 = vpack.c.b16 %v1156, %v1154
        %v1166 = vsel %vm874, %v1129, 0
        %v1169 = vsel %vm874, %v1131, 0
        %v1172 = vsel %vm874, %v1133, 0
        %v1175 = vsel %vm874, %v1135, 0
        %v1178 = vsel %vm874, %v1137, 0
        %v1181 = vsel %vm874, %v1139, 0
        %v1184 = vsel %vm874, %v1141, 0
        %v1187 = vsel %vm874, %v1143, 0
        %v1190 = vsel %vm874, %v1130, 0
        %v1193 = vsel %vm874, %v1132, 0
        %v1196 = vsel %vm874, %v1134, 0
        %v1199 = vsel %vm874, %v1136, 0
        %v1202 = vsel %vm874, %v1138, 0
        %v1205 = vsel %vm874, %v1140, 0
        %v1208 = vsel %vm874, %v1142, 0
        %v1211 = vsel %vm874, %v1144, 0
        %1213 = vmatpush.bf16.msra.mxu0 0
        %1214 = vmatpush.bf16.msra.mxu0 0
        %1215 = vmatpush.bf16.msra.mxu0 0
        %1216 = vmatpush.bf16.msra.mxu0 0
        %1217 = vmatpush.bf16.msra.mxu0 0
        %1218 = vmatpush.bf16.msra.mxu0 0
        %1219 = vmatpush.bf16.msra.mxu0 %v1159
        %1220 = vmatpush.bf16.msra.mxu0 %v1157
        %1221 = vmatmul.bf16.gmra.mxu0 %v1166
        %v1222 = vpop.f32.mrf.mxu0
        %v1223 = vadd.f32 0.0, %v1222
        %v1224 = vpop.f32.mrf.mxu0
        %v1225 = vadd.f32 0.0, %v1224
        %1226 = vmatmul.bf16.gmra.mxu0 %v1169
        %v1227 = vpop.f32.mrf.mxu0
        %v1228 = vadd.f32 0.0, %v1227
        %v1229 = vpop.f32.mrf.mxu0
        %v1230 = vadd.f32 0.0, %v1229
        %1231 = vmatmul.bf16.gmra.mxu0 %v1172
        %v1232 = vpop.f32.mrf.mxu0
        %v1233 = vadd.f32 0.0, %v1232
        %v1234 = vpop.f32.mrf.mxu0
        %v1235 = vadd.f32 0.0, %v1234
        %1236 = vmatmul.bf16.gmra.mxu0 %v1175
        %v1237 = vpop.f32.mrf.mxu0
        %v1238 = vadd.f32 0.0, %v1237
        %v1239 = vpop.f32.mrf.mxu0
        %v1240 = vadd.f32 0.0, %v1239
        %1241 = vmatmul.bf16.gmra.mxu0 %v1178
        %v1242 = vpop.f32.mrf.mxu0
        %v1243 = vadd.f32 0.0, %v1242
        %v1244 = vpop.f32.mrf.mxu0
        %v1245 = vadd.f32 0.0, %v1244
        %1246 = vmatmul.bf16.gmra.mxu0 %v1181
        %v1247 = vpop.f32.mrf.mxu0
        %v1248 = vadd.f32 0.0, %v1247
        %v1249 = vpop.f32.mrf.mxu0
        %v1250 = vadd.f32 0.0, %v1249
        %1251 = vmatmul.bf16.gmra.mxu0 %v1184
        %v1252 = vpop.f32.mrf.mxu0
        %v1253 = vadd.f32 0.0, %v1252
        %v1254 = vpop.f32.mrf.mxu0
        %v1255 = vadd.f32 0.0, %v1254
        %1256 = vmatmul.bf16.gmra.mxu0 %v1187
        %v1257 = vpop.f32.mrf.mxu0
        %v1258 = vadd.f32 0.0, %v1257
        %v1259 = vpop.f32.mrf.mxu0
        %v1260 = vadd.f32 0.0, %v1259
        %1261 = vmatmul.bf16.gmra.mxu0 %v1190
        %v1262 = vpop.f32.mrf.mxu0
        %v1263 = vadd.f32 0.0, %v1262
        %v1264 = vpop.f32.mrf.mxu0
        %v1265 = vadd.f32 0.0, %v1264
        %1266 = vmatmul.bf16.gmra.mxu0 %v1193
        %v1267 = vpop.f32.mrf.mxu0
        %v1268 = vadd.f32 0.0, %v1267
        %v1269 = vpop.f32.mrf.mxu0
        %v1270 = vadd.f32 0.0, %v1269
        %1271 = vmatmul.bf16.gmra.mxu0 %v1196
        %v1272 = vpop.f32.mrf.mxu0
        %v1273 = vadd.f32 0.0, %v1272
        %v1274 = vpop.f32.mrf.mxu0
        %v1275 = vadd.f32 0.0, %v1274
        %1276 = vmatmul.bf16.gmra.mxu0 %v1199
        %v1277 = vpop.f32.mrf.mxu0
        %v1278 = vadd.f32 0.0, %v1277
        %v1279 = vpop.f32.mrf.mxu0
        %v1280 = vadd.f32 0.0, %v1279
        %1281 = vmatmul.bf16.gmra.mxu0 %v1202
        %v1282 = vpop.f32.mrf.mxu0
        %v1283 = vadd.f32 0.0, %v1282
        %v1284 = vpop.f32.mrf.mxu0
        %v1285 = vadd.f32 0.0, %v1284
        %1286 = vmatmul.bf16.gmra.mxu0 %v1205
        %v1287 = vpop.f32.mrf.mxu0
        %v1288 = vadd.f32 0.0, %v1287
        %v1289 = vpop.f32.mrf.mxu0
        %v1290 = vadd.f32 0.0, %v1289
        %1291 = vmatmul.bf16.gmra.mxu0 %v1208
        %v1292 = vpop.f32.mrf.mxu0
        %v1293 = vadd.f32 0.0, %v1292
        %v1294 = vpop.f32.mrf.mxu0
        %v1295 = vadd.f32 0.0, %v1294
        %1296 = vmatmul.bf16.gmra.mxu0 %v1211
        %v1297 = vpop.f32.mrf.mxu0
        %v1298 = vadd.f32 0.0, %v1297
        %v1299 = vpop.f32.mrf.mxu0
        %v1300 = vadd.f32 0.0, %v1299
        %1301 = vdwg.mxu0
        %1302 = vmatpush.bf16.msra.mxu0 0
        %1303 = vmatpush.bf16.msra.mxu0 0
        %1304 = vmatpush.bf16.msra.mxu0 0
        %1305 = vmatpush.bf16.msra.mxu0 0
        %1306 = vmatpush.bf16.msra.mxu0 0
        %1307 = vmatpush.bf16.msra.mxu0 0
        %1308 = vmatpush.bf16.msra.mxu0 %v1160
        %1309 = vmatpush.bf16.msra.mxu0 %v1158
        %1310 = vmatmul.bf16.gmra.mxu0 %v1166
        %v1311 = vpop.f32.mrf.mxu0
        %v1312 = vadd.f32 0.0, %v1311
        %v1313 = vpop.f32.mrf.mxu0
        %v1314 = vadd.f32 0.0, %v1313
        %1315 = vmatmul.bf16.gmra.mxu0 %v1169
        %v1316 = vpop.f32.mrf.mxu0
        %v1317 = vadd.f32 0.0, %v1316
        %v1318 = vpop.f32.mrf.mxu0
        %v1319 = vadd.f32 0.0, %v1318
        %1320 = vmatmul.bf16.gmra.mxu0 %v1172
        %v1321 = vpop.f32.mrf.mxu0
        %v1322 = vadd.f32 0.0, %v1321
        %v1323 = vpop.f32.mrf.mxu0
        %v1324 = vadd.f32 0.0, %v1323
        %1325 = vmatmul.bf16.gmra.mxu0 %v1175
        %v1326 = vpop.f32.mrf.mxu0
        %v1327 = vadd.f32 0.0, %v1326
        %v1328 = vpop.f32.mrf.mxu0
        %v1329 = vadd.f32 0.0, %v1328
        %1330 = vmatmul.bf16.gmra.mxu0 %v1178
        %v1331 = vpop.f32.mrf.mxu0
        %v1332 = vadd.f32 0.0, %v1331
        %v1333 = vpop.f32.mrf.mxu0
        %v1334 = vadd.f32 0.0, %v1333
        %1335 = vmatmul.bf16.gmra.mxu0 %v1181
        %v1336 = vpop.f32.mrf.mxu0
        %v1337 = vadd.f32 0.0, %v1336
        %v1338 = vpop.f32.mrf.mxu0
        %v1339 = vadd.f32 0.0, %v1338
        %1340 = vmatmul.bf16.gmra.mxu0 %v1184
        %v1341 = vpop.f32.mrf.mxu0
        %v1342 = vadd.f32 0.0, %v1341
        %v1343 = vpop.f32.mrf.mxu0
        %v1344 = vadd.f32 0.0, %v1343
        %1345 = vmatmul.bf16.gmra.mxu0 %v1187
        %v1346 = vpop.f32.mrf.mxu0
        %v1347 = vadd.f32 0.0, %v1346
        %v1348 = vpop.f32.mrf.mxu0
        %v1349 = vadd.f32 0.0, %v1348
        %1350 = vmatmul.bf16.gmra.mxu0 %v1190
        %v1351 = vpop.f32.mrf.mxu0
        %v1352 = vadd.f32 0.0, %v1351
        %v1353 = vpop.f32.mrf.mxu0
        %v1354 = vadd.f32 0.0, %v1353
        %1355 = vmatmul.bf16.gmra.mxu0 %v1193
        %v1356 = vpop.f32.mrf.mxu0
        %v1357 = vadd.f32 0.0, %v1356
        %v1358 = vpop.f32.mrf.mxu0
        %v1359 = vadd.f32 0.0, %v1358
        %1360 = vmatmul.bf16.gmra.mxu0 %v1196
        %v1361 = vpop.f32.mrf.mxu0
        %v1362 = vadd.f32 0.0, %v1361
        %v1363 = vpop.f32.mrf.mxu0
        %v1364 = vadd.f32 0.0, %v1363
        %1365 = vmatmul.bf16.gmra.mxu0 %v1199
        %v1366 = vpop.f32.mrf.mxu0
        %v1367 = vadd.f32 0.0, %v1366
        %v1368 = vpop.f32.mrf.mxu0
        %v1369 = vadd.f32 0.0, %v1368
        %1370 = vmatmul.bf16.gmra.mxu0 %v1202
        %v1371 = vpop.f32.mrf.mxu0
        %v1372 = vadd.f32 0.0, %v1371
        %v1373 = vpop.f32.mrf.mxu0
        %v1374 = vadd.f32 0.0, %v1373
        %1375 = vmatmul.bf16.gmra.mxu0 %v1205
        %v1376 = vpop.f32.mrf.mxu0
        %v1377 = vadd.f32 0.0, %v1376
        %v1378 = vpop.f32.mrf.mxu0
        %v1379 = vadd.f32 0.0, %v1378
        %1380 = vmatmul.bf16.gmra.mxu0 %v1208
        %v1381 = vpop.f32.mrf.mxu0
        %v1382 = vadd.f32 0.0, %v1381
        %v1383 = vpop.f32.mrf.mxu0
        %v1384 = vadd.f32 0.0, %v1383
        %1385 = vmatmul.bf16.gmra.mxu0 %v1211
        %v1386 = vpop.f32.mrf.mxu0
        %v1387 = vadd.f32 0.0, %v1386
        %v1388 = vpop.f32.mrf.mxu0
        %v1389 = vadd.f32 0.0, %v1388
        %1390 = vdwg.mxu0
        %v1395 = vunpack.c.l.b16 %v786
        %v1396 = vunpack.c.h.b16 %v786
        %v1397 = vunpack.c.l.b16 %v787
        %v1398 = vunpack.c.h.b16 %v787
        %v1399 = vunpack.c.l.b16 %v788
        %v1400 = vunpack.c.h.b16 %v788
        %v1401 = vunpack.c.l.b16 %v789
        %v1402 = vunpack.c.h.b16 %v789
        %v1403 = vpack.c.b16 %v1397, %v1395
        %v1404 = vpack.c.b16 %v1398, %v1396
        %v1405 = vpack.c.b16 %v1401, %v1399
        %v1406 = vpack.c.b16 %v1402, %v1400
        %1411 = vxpose.binary.xlu0.c.b16.start [1/16] %v1404, %v1403, 128
        %1412 = vxpose.binary.xlu0.c.b16.cont [2/16] %v1406, %v1405, 128
        %1413 = vxpose.binary.xlu0.c.b16.cont [3/16] 0, 0, 128
        %1414 = vxpose.binary.xlu0.c.b16.cont [4/16] 0, 0, 128
        %1415 = vxpose.binary.xlu0.c.b16.cont [5/16] 0, 0, 128
        %1416 = vxpose.binary.xlu0.c.b16.cont [6/16] 0, 0, 128
        %1417 = vxpose.binary.xlu0.c.b16.cont [7/16] 0, 0, 128
        %1418 = vxpose.binary.xlu0.c.b16.end [8/16] 0, 0, 128
        %v1419 = vpop.trf.xlu0
        %v1420 = vpop.trf.xlu0
        %v1421 = vpop.trf.xlu0
        %v1422 = vpop.trf.xlu0
        %v1423 = vpop.trf.xlu0
        %v1424 = vpop.trf.xlu0
        %v1425 = vpop.trf.xlu0
        %v1426 = vpop.trf.xlu0
        %v1427 = vpop.trf.xlu0
        %v1428 = vpop.trf.xlu0
        %v1429 = vpop.trf.xlu0
        %v1430 = vpop.trf.xlu0
        %v1431 = vpop.trf.xlu0
        %v1432 = vpop.trf.xlu0
        %v1433 = vpop.trf.xlu0
        %v1434 = vpop.trf.xlu0
        %v1439 = vunpack.c.l.b16 %v770
        %v1440 = vunpack.c.h.b16 %v770
        %v1441 = vunpack.c.l.b16 %v771
        %v1442 = vunpack.c.h.b16 %v771
        %v1443 = vunpack.c.l.b16 %v772
        %v1444 = vunpack.c.h.b16 %v772
        %v1445 = vunpack.c.l.b16 %v773
        %v1446 = vunpack.c.h.b16 %v773
        %v1447 = vpack.c.b16 %v1441, %v1439
        %v1448 = vpack.c.b16 %v1442, %v1440
        %v1449 = vpack.c.b16 %v1445, %v1443
        %v1450 = vpack.c.b16 %v1446, %v1444
        %v1456 = vsel %vm874, %v1419, 0
        %v1459 = vsel %vm874, %v1421, 0
        %v1462 = vsel %vm874, %v1423, 0
        %v1465 = vsel %vm874, %v1425, 0
        %v1468 = vsel %vm874, %v1427, 0
        %v1471 = vsel %vm874, %v1429, 0
        %v1474 = vsel %vm874, %v1431, 0
        %v1477 = vsel %vm874, %v1433, 0
        %v1480 = vsel %vm874, %v1420, 0
        %v1483 = vsel %vm874, %v1422, 0
        %v1486 = vsel %vm874, %v1424, 0
        %v1489 = vsel %vm874, %v1426, 0
        %v1492 = vsel %vm874, %v1428, 0
        %v1495 = vsel %vm874, %v1430, 0
        %v1498 = vsel %vm874, %v1432, 0
        %v1501 = vsel %vm874, %v1434, 0
        %1503 = vmatpush.bf16.msra.mxu0 0
        %1504 = vmatpush.bf16.msra.mxu0 0
        %1505 = vmatpush.bf16.msra.mxu0 0
        %1506 = vmatpush.bf16.msra.mxu0 0
        %1507 = vmatpush.bf16.msra.mxu0 0
        %1508 = vmatpush.bf16.msra.mxu0 0
        %1509 = vmatpush.bf16.msra.mxu0 %v1449
        %1510 = vmatpush.bf16.msra.mxu0 %v1447
        %1511 = vmatmul.bf16.gmra.mxu0 %v1456
        %v1512 = vpop.f32.mrf.mxu0
        %v1513 = vadd.f32 0.0, %v1512
        %v1514 = vpop.f32.mrf.mxu0
        %v1515 = vadd.f32 0.0, %v1514
        %1516 = vmatmul.bf16.gmra.mxu0 %v1459
        %v1517 = vpop.f32.mrf.mxu0
        %v1518 = vadd.f32 0.0, %v1517
        %v1519 = vpop.f32.mrf.mxu0
        %v1520 = vadd.f32 0.0, %v1519
        %1521 = vmatmul.bf16.gmra.mxu0 %v1462
        %v1522 = vpop.f32.mrf.mxu0
        %v1523 = vadd.f32 0.0, %v1522
        %v1524 = vpop.f32.mrf.mxu0
        %v1525 = vadd.f32 0.0, %v1524
        %1526 = vmatmul.bf16.gmra.mxu0 %v1465
        %v1527 = vpop.f32.mrf.mxu0
        %v1528 = vadd.f32 0.0, %v1527
        %v1529 = vpop.f32.mrf.mxu0
        %v1530 = vadd.f32 0.0, %v1529
        %1531 = vmatmul.bf16.gmra.mxu0 %v1468
        %v1532 = vpop.f32.mrf.mxu0
        %v1533 = vadd.f32 0.0, %v1532
        %v1534 = vpop.f32.mrf.mxu0
        %v1535 = vadd.f32 0.0, %v1534
        %1536 = vmatmul.bf16.gmra.mxu0 %v1471
        %v1537 = vpop.f32.mrf.mxu0
        %v1538 = vadd.f32 0.0, %v1537
        %v1539 = vpop.f32.mrf.mxu0
        %v1540 = vadd.f32 0.0, %v1539
        %1541 = vmatmul.bf16.gmra.mxu0 %v1474
        %v1542 = vpop.f32.mrf.mxu0
        %v1543 = vadd.f32 0.0, %v1542
        %v1544 = vpop.f32.mrf.mxu0
        %v1545 = vadd.f32 0.0, %v1544
        %1546 = vmatmul.bf16.gmra.mxu0 %v1477
        %v1547 = vpop.f32.mrf.mxu0
        %v1548 = vadd.f32 0.0, %v1547
        %v1549 = vpop.f32.mrf.mxu0
        %v1550 = vadd.f32 0.0, %v1549
        %1551 = vmatmul.bf16.gmra.mxu0 %v1480
        %v1552 = vpop.f32.mrf.mxu0
        %v1553 = vadd.f32 0.0, %v1552
        %v1554 = vpop.f32.mrf.mxu0
        %v1555 = vadd.f32 0.0, %v1554
        %1556 = vmatmul.bf16.gmra.mxu0 %v1483
        %v1557 = vpop.f32.mrf.mxu0
        %v1558 = vadd.f32 0.0, %v1557
        %v1559 = vpop.f32.mrf.mxu0
        %v1560 = vadd.f32 0.0, %v1559
        %1561 = vmatmul.bf16.gmra.mxu0 %v1486
        %v1562 = vpop.f32.mrf.mxu0
        %v1563 = vadd.f32 0.0, %v1562
        %v1564 = vpop.f32.mrf.mxu0
        %v1565 = vadd.f32 0.0, %v1564
        %1566 = vmatmul.bf16.gmra.mxu0 %v1489
        %v1567 = vpop.f32.mrf.mxu0
        %v1568 = vadd.f32 0.0, %v1567
        %v1569 = vpop.f32.mrf.mxu0
        %v1570 = vadd.f32 0.0, %v1569
        %1571 = vmatmul.bf16.gmra.mxu0 %v1492
        %v1572 = vpop.f32.mrf.mxu0
        %v1573 = vadd.f32 0.0, %v1572
        %v1574 = vpop.f32.mrf.mxu0
        %v1575 = vadd.f32 0.0, %v1574
        %1576 = vmatmul.bf16.gmra.mxu0 %v1495
        %v1577 = vpop.f32.mrf.mxu0
        %v1578 = vadd.f32 0.0, %v1577
        %v1579 = vpop.f32.mrf.mxu0
        %v1580 = vadd.f32 0.0, %v1579
        %1581 = vmatmul.bf16.gmra.mxu0 %v1498
        %v1582 = vpop.f32.mrf.mxu0
        %v1583 = vadd.f32 0.0, %v1582
        %v1584 = vpop.f32.mrf.mxu0
        %v1585 = vadd.f32 0.0, %v1584
        %1586 = vmatmul.bf16.gmra.mxu0 %v1501
        %v1587 = vpop.f32.mrf.mxu0
        %v1588 = vadd.f32 0.0, %v1587
        %v1589 = vpop.f32.mrf.mxu0
        %v1590 = vadd.f32 0.0, %v1589
        %1591 = vdwg.mxu0
        %1592 = vmatpush.bf16.msra.mxu0 0
        %1593 = vmatpush.bf16.msra.mxu0 0
        %1594 = vmatpush.bf16.msra.mxu0 0
        %1595 = vmatpush.bf16.msra.mxu0 0
        %1596 = vmatpush.bf16.msra.mxu0 0
        %1597 = vmatpush.bf16.msra.mxu0 0
        %1598 = vmatpush.bf16.msra.mxu0 %v1450
        %1599 = vmatpush.bf16.msra.mxu0 %v1448
        %1600 = vmatmul.bf16.gmra.mxu0 %v1456
        %v1601 = vpop.f32.mrf.mxu0
        %v1602 = vadd.f32 0.0, %v1601
        %v1603 = vpop.f32.mrf.mxu0
        %v1604 = vadd.f32 0.0, %v1603
        %1605 = vmatmul.bf16.gmra.mxu0 %v1459
        %v1606 = vpop.f32.mrf.mxu0
        %v1607 = vadd.f32 0.0, %v1606
        %v1608 = vpop.f32.mrf.mxu0
        %v1609 = vadd.f32 0.0, %v1608
        %1610 = vmatmul.bf16.gmra.mxu0 %v1462
        %v1611 = vpop.f32.mrf.mxu0
        %v1612 = vadd.f32 0.0, %v1611
        %v1613 = vpop.f32.mrf.mxu0
        %v1614 = vadd.f32 0.0, %v1613
        %1615 = vmatmul.bf16.gmra.mxu0 %v1465
        %v1616 = vpop.f32.mrf.mxu0
        %v1617 = vadd.f32 0.0, %v1616
        %v1618 = vpop.f32.mrf.mxu0
        %v1619 = vadd.f32 0.0, %v1618
        %1620 = vmatmul.bf16.gmra.mxu0 %v1468
        %v1621 = vpop.f32.mrf.mxu0
        %v1622 = vadd.f32 0.0, %v1621
        %v1623 = vpop.f32.mrf.mxu0
        %v1624 = vadd.f32 0.0, %v1623
        %1625 = vmatmul.bf16.gmra.mxu0 %v1471
        %v1626 = vpop.f32.mrf.mxu0
        %v1627 = vadd.f32 0.0, %v1626
        %v1628 = vpop.f32.mrf.mxu0
        %v1629 = vadd.f32 0.0, %v1628
        %1630 = vmatmul.bf16.gmra.mxu0 %v1474
        %v1631 = vpop.f32.mrf.mxu0
        %v1632 = vadd.f32 0.0, %v1631
        %v1633 = vpop.f32.mrf.mxu0
        %v1634 = vadd.f32 0.0, %v1633
        %1635 = vmatmul.bf16.gmra.mxu0 %v1477
        %v1636 = vpop.f32.mrf.mxu0
        %v1637 = vadd.f32 0.0, %v1636
        %v1638 = vpop.f32.mrf.mxu0
        %v1639 = vadd.f32 0.0, %v1638
        %1640 = vmatmul.bf16.gmra.mxu0 %v1480
        %v1641 = vpop.f32.mrf.mxu0
        %v1642 = vadd.f32 0.0, %v1641
        %v1643 = vpop.f32.mrf.mxu0
        %v1644 = vadd.f32 0.0, %v1643
        %1645 = vmatmul.bf16.gmra.mxu0 %v1483
        %v1646 = vpop.f32.mrf.mxu0
        %v1647 = vadd.f32 0.0, %v1646
        %v1648 = vpop.f32.mrf.mxu0
        %v1649 = vadd.f32 0.0, %v1648
        %1650 = vmatmul.bf16.gmra.mxu0 %v1486
        %v1651 = vpop.f32.mrf.mxu0
        %v1652 = vadd.f32 0.0, %v1651
        %v1653 = vpop.f32.mrf.mxu0
        %v1654 = vadd.f32 0.0, %v1653
        %1655 = vmatmul.bf16.gmra.mxu0 %v1489
        %v1656 = vpop.f32.mrf.mxu0
        %v1657 = vadd.f32 0.0, %v1656
        %v1658 = vpop.f32.mrf.mxu0
        %v1659 = vadd.f32 0.0, %v1658
        %1660 = vmatmul.bf16.gmra.mxu0 %v1492
        %v1661 = vpop.f32.mrf.mxu0
        %v1662 = vadd.f32 0.0, %v1661
        %v1663 = vpop.f32.mrf.mxu0
        %v1664 = vadd.f32 0.0, %v1663
        %1665 = vmatmul.bf16.gmra.mxu0 %v1495
        %v1666 = vpop.f32.mrf.mxu0
        %v1667 = vadd.f32 0.0, %v1666
        %v1668 = vpop.f32.mrf.mxu0
        %v1669 = vadd.f32 0.0, %v1668
        %1670 = vmatmul.bf16.gmra.mxu0 %v1498
        %v1671 = vpop.f32.mrf.mxu0
        %v1672 = vadd.f32 0.0, %v1671
        %v1673 = vpop.f32.mrf.mxu0
        %v1674 = vadd.f32 0.0, %v1673
        %1675 = vmatmul.bf16.gmra.mxu0 %v1501
        %v1676 = vpop.f32.mrf.mxu0
        %v1677 = vadd.f32 0.0, %v1676
        %v1678 = vpop.f32.mrf.mxu0
        %v1679 = vadd.f32 0.0, %v1678
        %1680 = vdwg.mxu0
        %v1685 = vunpack.c.l.b16 %v790
        %v1686 = vunpack.c.h.b16 %v790
        %v1687 = vunpack.c.l.b16 %v791
        %v1688 = vunpack.c.h.b16 %v791
        %v1689 = vunpack.c.l.b16 %v792
        %v1690 = vunpack.c.h.b16 %v792
        %v1691 = vunpack.c.l.b16 %v793
        %v1692 = vunpack.c.h.b16 %v793
        %v1693 = vpack.c.b16 %v1687, %v1685
        %v1694 = vpack.c.b16 %v1688, %v1686
        %v1695 = vpack.c.b16 %v1691, %v1689
        %v1696 = vpack.c.b16 %v1692, %v1690
        %1701 = vxpose.binary.xlu0.c.b16.start [1/16] %v1694, %v1693, 128
        %1702 = vxpose.binary.xlu0.c.b16.cont [2/16] %v1696, %v1695, 128
        %1703 = vxpose.binary.xlu0.c.b16.cont [3/16] 0, 0, 128
        %1704 = vxpose.binary.xlu0.c.b16.cont [4/16] 0, 0, 128
        %1705 = vxpose.binary.xlu0.c.b16.cont [5/16] 0, 0, 128
        %1706 = vxpose.binary.xlu0.c.b16.cont [6/16] 0, 0, 128
        %1707 = vxpose.binary.xlu0.c.b16.cont [7/16] 0, 0, 128
        %1708 = vxpose.binary.xlu0.c.b16.end [8/16] 0, 0, 128
        %v1709 = vpop.trf.xlu0
        %v1710 = vpop.trf.xlu0
        %v1711 = vpop.trf.xlu0
        %v1712 = vpop.trf.xlu0
        %v1713 = vpop.trf.xlu0
        %v1714 = vpop.trf.xlu0
        %v1715 = vpop.trf.xlu0
        %v1716 = vpop.trf.xlu0
        %v1717 = vpop.trf.xlu0
        %v1718 = vpop.trf.xlu0
        %v1719 = vpop.trf.xlu0
        %v1720 = vpop.trf.xlu0
        %v1721 = vpop.trf.xlu0
        %v1722 = vpop.trf.xlu0
        %v1723 = vpop.trf.xlu0
        %v1724 = vpop.trf.xlu0
        %v1729 = vunpack.c.l.b16 %v774
        %v1730 = vunpack.c.h.b16 %v774
        %v1731 = vunpack.c.l.b16 %v775
        %v1732 = vunpack.c.h.b16 %v775
        %v1733 = vunpack.c.l.b16 %v776
        %v1734 = vunpack.c.h.b16 %v776
        %v1735 = vunpack.c.l.b16 %v777
        %v1736 = vunpack.c.h.b16 %v777
        %v1737 = vpack.c.b16 %v1731, %v1729
        %v1738 = vpack.c.b16 %v1732, %v1730
        %v1739 = vpack.c.b16 %v1735, %v1733
        %v1740 = vpack.c.b16 %v1736, %v1734
        %v1746 = vsel %vm874, %v1709, 0
        %v1749 = vsel %vm874, %v1711, 0
        %v1752 = vsel %vm874, %v1713, 0
        %v1755 = vsel %vm874, %v1715, 0
        %v1758 = vsel %vm874, %v1717, 0
        %v1761 = vsel %vm874, %v1719, 0
        %v1764 = vsel %vm874, %v1721, 0
        %v1767 = vsel %vm874, %v1723, 0
        %v1770 = vsel %vm874, %v1710, 0
        %v1773 = vsel %vm874, %v1712, 0
        %v1776 = vsel %vm874, %v1714, 0
        %v1779 = vsel %vm874, %v1716, 0
        %v1782 = vsel %vm874, %v1718, 0
        %v1785 = vsel %vm874, %v1720, 0
        %v1788 = vsel %vm874, %v1722, 0
        %v1791 = vsel %vm874, %v1724, 0
        %1793 = vmatpush.bf16.msra.mxu0 0
        %1794 = vmatpush.bf16.msra.mxu0 0
        %1795 = vmatpush.bf16.msra.mxu0 0
        %1796 = vmatpush.bf16.msra.mxu0 0
        %1797 = vmatpush.bf16.msra.mxu0 0
        %1798 = vmatpush.bf16.msra.mxu0 0
        %1799 = vmatpush.bf16.msra.mxu0 %v1739
        %1800 = vmatpush.bf16.msra.mxu0 %v1737
        %1801 = vmatmul.bf16.gmra.mxu0 %v1746
        %v1802 = vpop.f32.mrf.mxu0
        %v1803 = vadd.f32 0.0, %v1802
        %v1804 = vpop.f32.mrf.mxu0
        %v1805 = vadd.f32 0.0, %v1804
        %1806 = vmatmul.bf16.gmra.mxu0 %v1749
        %v1807 = vpop.f32.mrf.mxu0
        %v1808 = vadd.f32 0.0, %v1807
        %v1809 = vpop.f32.mrf.mxu0
        %v1810 = vadd.f32 0.0, %v1809
        %1811 = vmatmul.bf16.gmra.mxu0 %v1752
        %v1812 = vpop.f32.mrf.mxu0
        %v1813 = vadd.f32 0.0, %v1812
        %v1814 = vpop.f32.mrf.mxu0
        %v1815 = vadd.f32 0.0, %v1814
        %1816 = vmatmul.bf16.gmra.mxu0 %v1755
        %v1817 = vpop.f32.mrf.mxu0
        %v1818 = vadd.f32 0.0, %v1817
        %v1819 = vpop.f32.mrf.mxu0
        %v1820 = vadd.f32 0.0, %v1819
        %1821 = vmatmul.bf16.gmra.mxu0 %v1758
        %v1822 = vpop.f32.mrf.mxu0
        %v1823 = vadd.f32 0.0, %v1822
        %v1824 = vpop.f32.mrf.mxu0
        %v1825 = vadd.f32 0.0, %v1824
        %1826 = vmatmul.bf16.gmra.mxu0 %v1761
        %v1827 = vpop.f32.mrf.mxu0
        %v1828 = vadd.f32 0.0, %v1827
        %v1829 = vpop.f32.mrf.mxu0
        %v1830 = vadd.f32 0.0, %v1829
        %1831 = vmatmul.bf16.gmra.mxu0 %v1764
        %v1832 = vpop.f32.mrf.mxu0
        %v1833 = vadd.f32 0.0, %v1832
        %v1834 = vpop.f32.mrf.mxu0
        %v1835 = vadd.f32 0.0, %v1834
        %1836 = vmatmul.bf16.gmra.mxu0 %v1767
        %v1837 = vpop.f32.mrf.mxu0
        %v1838 = vadd.f32 0.0, %v1837
        %v1839 = vpop.f32.mrf.mxu0
        %v1840 = vadd.f32 0.0, %v1839
        %1841 = vmatmul.bf16.gmra.mxu0 %v1770
        %v1842 = vpop.f32.mrf.mxu0
        %v1843 = vadd.f32 0.0, %v1842
        %v1844 = vpop.f32.mrf.mxu0
        %v1845 = vadd.f32 0.0, %v1844
        %1846 = vmatmul.bf16.gmra.mxu0 %v1773
        %v1847 = vpop.f32.mrf.mxu0
        %v1848 = vadd.f32 0.0, %v1847
        %v1849 = vpop.f32.mrf.mxu0
        %v1850 = vadd.f32 0.0, %v1849
        %1851 = vmatmul.bf16.gmra.mxu0 %v1776
        %v1852 = vpop.f32.mrf.mxu0
        %v1853 = vadd.f32 0.0, %v1852
        %v1854 = vpop.f32.mrf.mxu0
        %v1855 = vadd.f32 0.0, %v1854
        %1856 = vmatmul.bf16.gmra.mxu0 %v1779
        %v1857 = vpop.f32.mrf.mxu0
        %v1858 = vadd.f32 0.0, %v1857
        %v1859 = vpop.f32.mrf.mxu0
        %v1860 = vadd.f32 0.0, %v1859
        %1861 = vmatmul.bf16.gmra.mxu0 %v1782
        %v1862 = vpop.f32.mrf.mxu0
        %v1863 = vadd.f32 0.0, %v1862
        %v1864 = vpop.f32.mrf.mxu0
        %v1865 = vadd.f32 0.0, %v1864
        %1866 = vmatmul.bf16.gmra.mxu0 %v1785
        %v1867 = vpop.f32.mrf.mxu0
        %v1868 = vadd.f32 0.0, %v1867
        %v1869 = vpop.f32.mrf.mxu0
        %v1870 = vadd.f32 0.0, %v1869
        %1871 = vmatmul.bf16.gmra.mxu0 %v1788
        %v1872 = vpop.f32.mrf.mxu0
        %v1873 = vadd.f32 0.0, %v1872
        %v1874 = vpop.f32.mrf.mxu0
        %v1875 = vadd.f32 0.0, %v1874
        %1876 = vmatmul.bf16.gmra.mxu0 %v1791
        %v1877 = vpop.f32.mrf.mxu0
        %v1878 = vadd.f32 0.0, %v1877
        %v1879 = vpop.f32.mrf.mxu0
        %v1880 = vadd.f32 0.0, %v1879
        %1881 = vdwg.mxu0
        %1882 = vmatpush.bf16.msra.mxu0 0
        %1883 = vmatpush.bf16.msra.mxu0 0
        %1884 = vmatpush.bf16.msra.mxu0 0
        %1885 = vmatpush.bf16.msra.mxu0 0
        %1886 = vmatpush.bf16.msra.mxu0 0
        %1887 = vmatpush.bf16.msra.mxu0 0
        %1888 = vmatpush.bf16.msra.mxu0 %v1740
        %1889 = vmatpush.bf16.msra.mxu0 %v1738
        %1890 = vmatmul.bf16.gmra.mxu0 %v1746
        %v1891 = vpop.f32.mrf.mxu0
        %v1892 = vadd.f32 0.0, %v1891
        %v1893 = vpop.f32.mrf.mxu0
        %v1894 = vadd.f32 0.0, %v1893
        %1895 = vmatmul.bf16.gmra.mxu0 %v1749
        %v1896 = vpop.f32.mrf.mxu0
        %v1897 = vadd.f32 0.0, %v1896
        %v1898 = vpop.f32.mrf.mxu0
        %v1899 = vadd.f32 0.0, %v1898
        %1900 = vmatmul.bf16.gmra.mxu0 %v1752
        %v1901 = vpop.f32.mrf.mxu0
        %v1902 = vadd.f32 0.0, %v1901
        %v1903 = vpop.f32.mrf.mxu0
        %v1904 = vadd.f32 0.0, %v1903
        %1905 = vmatmul.bf16.gmra.mxu0 %v1755
        %v1906 = vpop.f32.mrf.mxu0
        %v1907 = vadd.f32 0.0, %v1906
        %v1908 = vpop.f32.mrf.mxu0
        %v1909 = vadd.f32 0.0, %v1908
        %1910 = vmatmul.bf16.gmra.mxu0 %v1758
        %v1911 = vpop.f32.mrf.mxu0
        %v1912 = vadd.f32 0.0, %v1911
        %v1913 = vpop.f32.mrf.mxu0
        %v1914 = vadd.f32 0.0, %v1913
        %1915 = vmatmul.bf16.gmra.mxu0 %v1761
        %v1916 = vpop.f32.mrf.mxu0
        %v1917 = vadd.f32 0.0, %v1916
        %v1918 = vpop.f32.mrf.mxu0
        %v1919 = vadd.f32 0.0, %v1918
        %1920 = vmatmul.bf16.gmra.mxu0 %v1764
        %v1921 = vpop.f32.mrf.mxu0
        %v1922 = vadd.f32 0.0, %v1921
        %v1923 = vpop.f32.mrf.mxu0
        %v1924 = vadd.f32 0.0, %v1923
        %1925 = vmatmul.bf16.gmra.mxu0 %v1767
        %v1926 = vpop.f32.mrf.mxu0
        %v1927 = vadd.f32 0.0, %v1926
        %v1928 = vpop.f32.mrf.mxu0
        %v1929 = vadd.f32 0.0, %v1928
        %1930 = vmatmul.bf16.gmra.mxu0 %v1770
        %v1931 = vpop.f32.mrf.mxu0
        %v1932 = vadd.f32 0.0, %v1931
        %v1933 = vpop.f32.mrf.mxu0
        %v1934 = vadd.f32 0.0, %v1933
        %1935 = vmatmul.bf16.gmra.mxu0 %v1773
        %v1936 = vpop.f32.mrf.mxu0
        %v1937 = vadd.f32 0.0, %v1936
        %v1938 = vpop.f32.mrf.mxu0
        %v1939 = vadd.f32 0.0, %v1938
        %1940 = vmatmul.bf16.gmra.mxu0 %v1776
        %v1941 = vpop.f32.mrf.mxu0
        %v1942 = vadd.f32 0.0, %v1941
        %v1943 = vpop.f32.mrf.mxu0
        %v1944 = vadd.f32 0.0, %v1943
        %1945 = vmatmul.bf16.gmra.mxu0 %v1779
        %v1946 = vpop.f32.mrf.mxu0
        %v1947 = vadd.f32 0.0, %v1946
        %v1948 = vpop.f32.mrf.mxu0
        %v1949 = vadd.f32 0.0, %v1948
        %1950 = vmatmul.bf16.gmra.mxu0 %v1782
        %v1951 = vpop.f32.mrf.mxu0
        %v1952 = vadd.f32 0.0, %v1951
        %v1953 = vpop.f32.mrf.mxu0
        %v1954 = vadd.f32 0.0, %v1953
        %1955 = vmatmul.bf16.gmra.mxu0 %v1785
        %v1956 = vpop.f32.mrf.mxu0
        %v1957 = vadd.f32 0.0, %v1956
        %v1958 = vpop.f32.mrf.mxu0
        %v1959 = vadd.f32 0.0, %v1958
        %1960 = vmatmul.bf16.gmra.mxu0 %v1788
        %v1961 = vpop.f32.mrf.mxu0
        %v1962 = vadd.f32 0.0, %v1961
        %v1963 = vpop.f32.mrf.mxu0
        %v1964 = vadd.f32 0.0, %v1963
        %1965 = vmatmul.bf16.gmra.mxu0 %v1791
        %v1966 = vpop.f32.mrf.mxu0
        %v1967 = vadd.f32 0.0, %v1966
        %v1968 = vpop.f32.mrf.mxu0
        %v1969 = vadd.f32 0.0, %v1968
        %1970 = vdwg.mxu0
        %v1971 = vmax.f32 %v933, %v935
        %v1972 = vmax.f32 %v1971, %v938
        %v1973 = vmax.f32 %v1972, %v940
        %v1974 = vmax.f32 %v1973, %v943
        %v1975 = vmax.f32 %v1974, %v945
        %v1976 = vmax.f32 %v1975, %v948
        %v1977 = vmax.f32 %v1976, %v950
        %v1978 = vmax.f32 %v1977, %v953
        %v1979 = vmax.f32 %v1978, %v955
        %v1980 = vmax.f32 %v1979, %v958
        %v1981 = vmax.f32 %v1980, %v960
        %v1982 = vmax.f32 %v1981, %v963
        %v1983 = vmax.f32 %v1982, %v965
        %v1984 = vmax.f32 %v1983, %v968
        %v1985 = vmax.f32 %v1984, %v970
        %v1986 = vmax.f32 %v1985, %v973
        %v1987 = vmax.f32 %v1986, %v975
        %v1988 = vmax.f32 %v1987, %v978
        %v1989 = vmax.f32 %v1988, %v980
        %v1990 = vmax.f32 %v1989, %v983
        %v1991 = vmax.f32 %v1990, %v985
        %v1992 = vmax.f32 %v1991, %v988
        %v1993 = vmax.f32 %v1992, %v990
        %v1994 = vmax.f32 %v1993, %v993
        %v1995 = vmax.f32 %v1994, %v995
        %v1996 = vmax.f32 %v1995, %v998
        %v1997 = vmax.f32 %v1996, %v1000
        %v1998 = vmax.f32 %v1997, %v1003
        %v1999 = vmax.f32 %v1998, %v1005
        %v2000 = vmax.f32 %v1999, %v1008
        %v2001 = vmax.f32 %v2000, %v1010
        %v2002 = vrot.slane %v2001, 4
        %v2003 = vmax.f32 %v2001, %v2002
        %v2004 = vrot.slane %v2003, 2
        %v2005 = vmax.f32 %v2003, %v2004
        %v2006 = vrot.slane %v2005, 1
        %v2007 = vmax.f32 %v2005, %v2006
        %v2008 = vmax.f32 %v1022, %v1024
        %v2009 = vmax.f32 %v2008, %v1027
        %v2010 = vmax.f32 %v2009, %v1029
        %v2011 = vmax.f32 %v2010, %v1032
        %v2012 = vmax.f32 %v2011, %v1034
        %v2013 = vmax.f32 %v2012, %v1037
        %v2014 = vmax.f32 %v2013, %v1039
        %v2015 = vmax.f32 %v2014, %v1042
        %v2016 = vmax.f32 %v2015, %v1044
        %v2017 = vmax.f32 %v2016, %v1047
        %v2018 = vmax.f32 %v2017, %v1049
        %v2019 = vmax.f32 %v2018, %v1052
        %v2020 = vmax.f32 %v2019, %v1054
        %v2021 = vmax.f32 %v2020, %v1057
        %v2022 = vmax.f32 %v2021, %v1059
        %v2023 = vmax.f32 %v2022, %v1062
        %v2024 = vmax.f32 %v2023, %v1064
        %v2025 = vmax.f32 %v2024, %v1067
        %v2026 = vmax.f32 %v2025, %v1069
        %v2027 = vmax.f32 %v2026, %v1072
        %v2028 = vmax.f32 %v2027, %v1074
        %v2029 = vmax.f32 %v2028, %v1077
        %v2030 = vmax.f32 %v2029, %v1079
        %v2031 = vmax.f32 %v2030, %v1082
        %v2032 = vmax.f32 %v2031, %v1084
        %v2033 = vmax.f32 %v2032, %v1087
        %v2034 = vmax.f32 %v2033, %v1089
        %v2035 = vmax.f32 %v2034, %v1092
        %v2036 = vmax.f32 %v2035, %v1094
        %v2037 = vmax.f32 %v2036, %v1097
        %v2038 = vmax.f32 %v2037, %v1099
        %v2039 = vrot.slane %v2038, 4
        %v2040 = vmax.f32 %v2038, %v2039
        %v2041 = vrot.slane %v2040, 2
        %v2042 = vmax.f32 %v2040, %v2041
        %v2043 = vrot.slane %v2042, 1
        %v2044 = vmax.f32 %v2042, %v2043
        %v2045 = vmax.f32 %v1223, %v1225
        %v2046 = vmax.f32 %v2045, %v1228
        %v2047 = vmax.f32 %v2046, %v1230
        %v2048 = vmax.f32 %v2047, %v1233
        %v2049 = vmax.f32 %v2048, %v1235
        %v2050 = vmax.f32 %v2049, %v1238
        %v2051 = vmax.f32 %v2050, %v1240
        %v2052 = vmax.f32 %v2051, %v1243
        %v2053 = vmax.f32 %v2052, %v1245
        %v2054 = vmax.f32 %v2053, %v1248
        %v2055 = vmax.f32 %v2054, %v1250
        %v2056 = vmax.f32 %v2055, %v1253
        %v2057 = vmax.f32 %v2056, %v1255
        %v2058 = vmax.f32 %v2057, %v1258
        %v2059 = vmax.f32 %v2058, %v1260
        %v2060 = vmax.f32 %v2059, %v1263
        %v2061 = vmax.f32 %v2060, %v1265
        %v2062 = vmax.f32 %v2061, %v1268
        %v2063 = vmax.f32 %v2062, %v1270
        %v2064 = vmax.f32 %v2063, %v1273
        %v2065 = vmax.f32 %v2064, %v1275
        %v2066 = vmax.f32 %v2065, %v1278
        %v2067 = vmax.f32 %v2066, %v1280
        %v2068 = vmax.f32 %v2067, %v1283
        %v2069 = vmax.f32 %v2068, %v1285
        %v2070 = vmax.f32 %v2069, %v1288
        %v2071 = vmax.f32 %v2070, %v1290
        %v2072 = vmax.f32 %v2071, %v1293
        %v2073 = vmax.f32 %v2072, %v1295
        %v2074 = vmax.f32 %v2073, %v1298
        %v2075 = vmax.f32 %v2074, %v1300
        %v2076 = vrot.slane %v2075, 4
        %v2077 = vmax.f32 %v2075, %v2076
        %v2078 = vrot.slane %v2077, 2
        %v2079 = vmax.f32 %v2077, %v2078
        %v2080 = vrot.slane %v2079, 1
        %v2081 = vmax.f32 %v2079, %v2080
        %v2082 = vmax.f32 %v1312, %v1314
        %v2083 = vmax.f32 %v2082, %v1317
        %v2084 = vmax.f32 %v2083, %v1319
        %v2085 = vmax.f32 %v2084, %v1322
        %v2086 = vmax.f32 %v2085, %v1324
        %v2087 = vmax.f32 %v2086, %v1327
        %v2088 = vmax.f32 %v2087, %v1329
        %v2089 = vmax.f32 %v2088, %v1332
        %v2090 = vmax.f32 %v2089, %v1334
        %v2091 = vmax.f32 %v2090, %v1337
        %v2092 = vmax.f32 %v2091, %v1339
        %v2093 = vmax.f32 %v2092, %v1342
        %v2094 = vmax.f32 %v2093, %v1344
        %v2095 = vmax.f32 %v2094, %v1347
        %v2096 = vmax.f32 %v2095, %v1349
        %v2097 = vmax.f32 %v2096, %v1352
        %v2098 = vmax.f32 %v2097, %v1354
        %v2099 = vmax.f32 %v2098, %v1357
        %v2100 = vmax.f32 %v2099, %v1359
        %v2101 = vmax.f32 %v2100, %v1362
        %v2102 = vmax.f32 %v2101, %v1364
        %v2103 = vmax.f32 %v2102, %v1367
        %v2104 = vmax.f32 %v2103, %v1369
        %v2105 = vmax.f32 %v2104, %v1372
        %v2106 = vmax.f32 %v2105, %v1374
        %v2107 = vmax.f32 %v2106, %v1377
        %v2108 = vmax.f32 %v2107, %v1379
        %v2109 = vmax.f32 %v2108, %v1382
        %v2110 = vmax.f32 %v2109, %v1384
        %v2111 = vmax.f32 %v2110, %v1387
        %v2112 = vmax.f32 %v2111, %v1389
        %v2113 = vrot.slane %v2112, 4
        %v2114 = vmax.f32 %v2112, %v2113
        %v2115 = vrot.slane %v2114, 2
        %v2116 = vmax.f32 %v2114, %v2115
        %v2117 = vrot.slane %v2116, 1
        %v2118 = vmax.f32 %v2116, %v2117
        %v2119 = vmax.f32 %v1513, %v1515
        %v2120 = vmax.f32 %v2119, %v1518
        %v2121 = vmax.f32 %v2120, %v1520
        %v2122 = vmax.f32 %v2121, %v1523
        %v2123 = vmax.f32 %v2122, %v1525
        %v2124 = vmax.f32 %v2123, %v1528
        %v2125 = vmax.f32 %v2124, %v1530
        %v2126 = vmax.f32 %v2125, %v1533
        %v2127 = vmax.f32 %v2126, %v1535
        %v2128 = vmax.f32 %v2127, %v1538
        %v2129 = vmax.f32 %v2128, %v1540
        %v2130 = vmax.f32 %v2129, %v1543
        %v2131 = vmax.f32 %v2130, %v1545
        %v2132 = vmax.f32 %v2131, %v1548
        %v2133 = vmax.f32 %v2132, %v1550
        %v2134 = vmax.f32 %v2133, %v1553
        %v2135 = vmax.f32 %v2134, %v1555
        %v2136 = vmax.f32 %v2135, %v1558
        %v2137 = vmax.f32 %v2136, %v1560
        %v2138 = vmax.f32 %v2137, %v1563
        %v2139 = vmax.f32 %v2138, %v1565
        %v2140 = vmax.f32 %v2139, %v1568
        %v2141 = vmax.f32 %v2140, %v1570
        %v2142 = vmax.f32 %v2141, %v1573
        %v2143 = vmax.f32 %v2142, %v1575
        %v2144 = vmax.f32 %v2143, %v1578
        %v2145 = vmax.f32 %v2144, %v1580
        %v2146 = vmax.f32 %v2145, %v1583
        %v2147 = vmax.f32 %v2146, %v1585
        %v2148 = vmax.f32 %v2147, %v1588
        %v2149 = vmax.f32 %v2148, %v1590
        %v2150 = vrot.slane %v2149, 4
        %v2151 = vmax.f32 %v2149, %v2150
        %v2152 = vrot.slane %v2151, 2
        %v2153 = vmax.f32 %v2151, %v2152
        %v2154 = vrot.slane %v2153, 1
        %v2155 = vmax.f32 %v2153, %v2154
        %v2156 = vmax.f32 %v1602, %v1604
        %v2157 = vmax.f32 %v2156, %v1607
        %v2158 = vmax.f32 %v2157, %v1609
        %v2159 = vmax.f32 %v2158, %v1612
        %v2160 = vmax.f32 %v2159, %v1614
        %v2161 = vmax.f32 %v2160, %v1617
        %v2162 = vmax.f32 %v2161, %v1619
        %v2163 = vmax.f32 %v2162, %v1622
        %v2164 = vmax.f32 %v2163, %v1624
        %v2165 = vmax.f32 %v2164, %v1627
        %v2166 = vmax.f32 %v2165, %v1629
        %v2167 = vmax.f32 %v2166, %v1632
        %v2168 = vmax.f32 %v2167, %v1634
        %v2169 = vmax.f32 %v2168, %v1637
        %v2170 = vmax.f32 %v2169, %v1639
        %v2171 = vmax.f32 %v2170, %v1642
        %v2172 = vmax.f32 %v2171, %v1644
        %v2173 = vmax.f32 %v2172, %v1647
        %v2174 = vmax.f32 %v2173, %v1649
        %v2175 = vmax.f32 %v2174, %v1652
        %v2176 = vmax.f32 %v2175, %v1654
        %v2177 = vmax.f32 %v2176, %v1657
        %v2178 = vmax.f32 %v2177, %v1659
        %v2179 = vmax.f32 %v2178, %v1662
        %v2180 = vmax.f32 %v2179, %v1664
        %v2181 = vmax.f32 %v2180, %v1667
        %v2182 = vmax.f32 %v2181, %v1669
        %v2183 = vmax.f32 %v2182, %v1672
        %v2184 = vmax.f32 %v2183, %v1674
        %v2185 = vmax.f32 %v2184, %v1677
        %v2186 = vmax.f32 %v2185, %v1679
        %v2187 = vrot.slane %v2186, 4
        %v2188 = vmax.f32 %v2186, %v2187
        %v2189 = vrot.slane %v2188, 2
        %v2190 = vmax.f32 %v2188, %v2189
        %v2191 = vrot.slane %v2190, 1
        %v2192 = vmax.f32 %v2190, %v2191
        %v2193 = vmax.f32 %v1803, %v1805
        %v2194 = vmax.f32 %v2193, %v1808
        %v2195 = vmax.f32 %v2194, %v1810
        %v2196 = vmax.f32 %v2195, %v1813
        %v2197 = vmax.f32 %v2196, %v1815
        %v2198 = vmax.f32 %v2197, %v1818
        %v2199 = vmax.f32 %v2198, %v1820
        %v2200 = vmax.f32 %v2199, %v1823
        %v2201 = vmax.f32 %v2200, %v1825
        %v2202 = vmax.f32 %v2201, %v1828
        %v2203 = vmax.f32 %v2202, %v1830
        %v2204 = vmax.f32 %v2203, %v1833
        %v2205 = vmax.f32 %v2204, %v1835
        %v2206 = vmax.f32 %v2205, %v1838
        %v2207 = vmax.f32 %v2206, %v1840
        %v2208 = vmax.f32 %v2207, %v1843
        %v2209 = vmax.f32 %v2208, %v1845
        %v2210 = vmax.f32 %v2209, %v1848
        %v2211 = vmax.f32 %v2210, %v1850
        %v2212 = vmax.f32 %v2211, %v1853
        %v2213 = vmax.f32 %v2212, %v1855
        %v2214 = vmax.f32 %v2213, %v1858
        %v2215 = vmax.f32 %v2214, %v1860
        %v2216 = vmax.f32 %v2215, %v1863
        %v2217 = vmax.f32 %v2216, %v1865
        %v2218 = vmax.f32 %v2217, %v1868
        %v2219 = vmax.f32 %v2218, %v1870
        %v2220 = vmax.f32 %v2219, %v1873
        %v2221 = vmax.f32 %v2220, %v1875
        %v2222 = vmax.f32 %v2221, %v1878
        %v2223 = vmax.f32 %v2222, %v1880
        %v2224 = vrot.slane %v2223, 4
        %v2225 = vmax.f32 %v2223, %v2224
        %v2226 = vrot.slane %v2225, 2
        %v2227 = vmax.f32 %v2225, %v2226
        %v2228 = vrot.slane %v2227, 1
        %v2229 = vmax.f32 %v2227, %v2228
        %v2230 = vmax.f32 %v1892, %v1894
        %v2231 = vmax.f32 %v2230, %v1897
        %v2232 = vmax.f32 %v2231, %v1899
        %v2233 = vmax.f32 %v2232, %v1902
        %v2234 = vmax.f32 %v2233, %v1904
        %v2235 = vmax.f32 %v2234, %v1907
        %v2236 = vmax.f32 %v2235, %v1909
        %v2237 = vmax.f32 %v2236, %v1912
        %v2238 = vmax.f32 %v2237, %v1914
        %v2239 = vmax.f32 %v2238, %v1917
        %v2240 = vmax.f32 %v2239, %v1919
        %v2241 = vmax.f32 %v2240, %v1922
        %v2242 = vmax.f32 %v2241, %v1924
        %v2243 = vmax.f32 %v2242, %v1927
        %v2244 = vmax.f32 %v2243, %v1929
        %v2245 = vmax.f32 %v2244, %v1932
        %v2246 = vmax.f32 %v2245, %v1934
        %v2247 = vmax.f32 %v2246, %v1937
        %v2248 = vmax.f32 %v2247, %v1939
        %v2249 = vmax.f32 %v2248, %v1942
        %v2250 = vmax.f32 %v2249, %v1944
        %v2251 = vmax.f32 %v2250, %v1947
        %v2252 = vmax.f32 %v2251, %v1949
        %v2253 = vmax.f32 %v2252, %v1952
        %v2254 = vmax.f32 %v2253, %v1954
        %v2255 = vmax.f32 %v2254, %v1957
        %v2256 = vmax.f32 %v2255, %v1959
        %v2257 = vmax.f32 %v2256, %v1962
        %v2258 = vmax.f32 %v2257, %v1964
        %v2259 = vmax.f32 %v2258, %v1967
        %v2260 = vmax.f32 %v2259, %v1969
        %v2261 = vrot.slane %v2260, 4
        %v2262 = vmax.f32 %v2260, %v2261
        %v2263 = vrot.slane %v2262, 2
        %v2264 = vmax.f32 %v2262, %v2263
        %v2265 = vrot.slane %v2264, 1
        %v2266 = vmax.f32 %v2264, %v2265
        %v2267 = vsub.f32 %v933, %v2007
        %v2268 = vsub.f32 %v1022, %v2044
        %v2269 = vsub.f32 %v935, %v2007
        %v2270 = vsub.f32 %v1024, %v2044
        %v2271 = vsub.f32 %v938, %v2007
        %v2272 = vsub.f32 %v1027, %v2044
        %v2273 = vsub.f32 %v940, %v2007
        %v2274 = vsub.f32 %v1029, %v2044
        %v2275 = vsub.f32 %v943, %v2007
        %v2276 = vsub.f32 %v1032, %v2044
        %v2277 = vsub.f32 %v945, %v2007
        %v2278 = vsub.f32 %v1034, %v2044
        %v2279 = vsub.f32 %v948, %v2007
        %v2280 = vsub.f32 %v1037, %v2044
        %v2281 = vsub.f32 %v950, %v2007
        %v2282 = vsub.f32 %v1039, %v2044
        %v2283 = vsub.f32 %v953, %v2007
        %v2284 = vsub.f32 %v1042, %v2044
        %v2285 = vsub.f32 %v955, %v2007
        %v2286 = vsub.f32 %v1044, %v2044
        %v2287 = vsub.f32 %v958, %v2007
        %v2288 = vsub.f32 %v1047, %v2044
        %v2289 = vsub.f32 %v960, %v2007
        %v2290 = vsub.f32 %v1049, %v2044
        %v2291 = vsub.f32 %v963, %v2007
        %v2292 = vsub.f32 %v1052, %v2044
        %v2293 = vsub.f32 %v965, %v2007
        %v2294 = vsub.f32 %v1054, %v2044
        %v2295 = vsub.f32 %v968, %v2007
        %v2296 = vsub.f32 %v1057, %v2044
        %v2297 = vsub.f32 %v970, %v2007
        %v2298 = vsub.f32 %v1059, %v2044
        %v2299 = vsub.f32 %v973, %v2007
        %v2300 = vsub.f32 %v1062, %v2044
        %v2301 = vsub.f32 %v975, %v2007
        %v2302 = vsub.f32 %v1064, %v2044
        %v2303 = vsub.f32 %v978, %v2007
        %v2304 = vsub.f32 %v1067, %v2044
        %v2305 = vsub.f32 %v980, %v2007
        %v2306 = vsub.f32 %v1069, %v2044
        %v2307 = vsub.f32 %v983, %v2007
        %v2308 = vsub.f32 %v1072, %v2044
        %v2309 = vsub.f32 %v985, %v2007
        %v2310 = vsub.f32 %v1074, %v2044
        %v2311 = vsub.f32 %v988, %v2007
        %v2312 = vsub.f32 %v1077, %v2044
        %v2313 = vsub.f32 %v990, %v2007
        %v2314 = vsub.f32 %v1079, %v2044
        %v2315 = vsub.f32 %v993, %v2007
        %v2316 = vsub.f32 %v1082, %v2044
        %v2317 = vsub.f32 %v995, %v2007
        %v2318 = vsub.f32 %v1084, %v2044
        %v2319 = vsub.f32 %v998, %v2007
        %v2320 = vsub.f32 %v1087, %v2044
        %v2321 = vsub.f32 %v1000, %v2007
        %v2322 = vsub.f32 %v1089, %v2044
        %v2323 = vsub.f32 %v1003, %v2007
        %v2324 = vsub.f32 %v1092, %v2044
        %v2325 = vsub.f32 %v1005, %v2007
        %v2326 = vsub.f32 %v1094, %v2044
        %v2327 = vsub.f32 %v1008, %v2007
        %v2328 = vsub.f32 %v1097, %v2044
        %v2329 = vsub.f32 %v1010, %v2007
        %v2330 = vsub.f32 %v1099, %v2044
        %v2331 = vsub.f32 %v1223, %v2081
        %v2332 = vsub.f32 %v1312, %v2118
        %v2333 = vsub.f32 %v1225, %v2081
        %v2334 = vsub.f32 %v1314, %v2118
        %v2335 = vsub.f32 %v1228, %v2081
        %v2336 = vsub.f32 %v1317, %v2118
        %v2337 = vsub.f32 %v1230, %v2081
        %v2338 = vsub.f32 %v1319, %v2118
        %v2339 = vsub.f32 %v1233, %v2081
        %v2340 = vsub.f32 %v1322, %v2118
        %v2341 = vsub.f32 %v1235, %v2081
        %v2342 = vsub.f32 %v1324, %v2118
        %v2343 = vsub.f32 %v1238, %v2081
        %v2344 = vsub.f32 %v1327, %v2118
        %v2345 = vsub.f32 %v1240, %v2081
        %v2346 = vsub.f32 %v1329, %v2118
        %v2347 = vsub.f32 %v1243, %v2081
        %v2348 = vsub.f32 %v1332, %v2118
        %v2349 = vsub.f32 %v1245, %v2081
        %v2350 = vsub.f32 %v1334, %v2118
        %v2351 = vsub.f32 %v1248, %v2081
        %v2352 = vsub.f32 %v1337, %v2118
        %v2353 = vsub.f32 %v1250, %v2081
        %v2354 = vsub.f32 %v1339, %v2118
        %v2355 = vsub.f32 %v1253, %v2081
        %v2356 = vsub.f32 %v1342, %v2118
        %v2357 = vsub.f32 %v1255, %v2081
        %v2358 = vsub.f32 %v1344, %v2118
        %v2359 = vsub.f32 %v1258, %v2081
        %v2360 = vsub.f32 %v1347, %v2118
        %v2361 = vsub.f32 %v1260, %v2081
        %v2362 = vsub.f32 %v1349, %v2118
        %v2363 = vsub.f32 %v1263, %v2081
        %v2364 = vsub.f32 %v1352, %v2118
        %v2365 = vsub.f32 %v1265, %v2081
        %v2366 = vsub.f32 %v1354, %v2118
        %v2367 = vsub.f32 %v1268, %v2081
        %v2368 = vsub.f32 %v1357, %v2118
        %v2369 = vsub.f32 %v1270, %v2081
        %v2370 = vsub.f32 %v1359, %v2118
        %v2371 = vsub.f32 %v1273, %v2081
        %v2372 = vsub.f32 %v1362, %v2118
        %v2373 = vsub.f32 %v1275, %v2081
        %v2374 = vsub.f32 %v1364, %v2118
        %v2375 = vsub.f32 %v1278, %v2081
        %v2376 = vsub.f32 %v1367, %v2118
        %v2377 = vsub.f32 %v1280, %v2081
        %v2378 = vsub.f32 %v1369, %v2118
        %v2379 = vsub.f32 %v1283, %v2081
        %v2380 = vsub.f32 %v1372, %v2118
        %v2381 = vsub.f32 %v1285, %v2081
        %v2382 = vsub.f32 %v1374, %v2118
        %v2383 = vsub.f32 %v1288, %v2081
        %v2384 = vsub.f32 %v1377, %v2118
        %v2385 = vsub.f32 %v1290, %v2081
        %v2386 = vsub.f32 %v1379, %v2118
        %v2387 = vsub.f32 %v1293, %v2081
        %v2388 = vsub.f32 %v1382, %v2118
        %v2389 = vsub.f32 %v1295, %v2081
        %v2390 = vsub.f32 %v1384, %v2118
        %v2391 = vsub.f32 %v1298, %v2081
        %v2392 = vsub.f32 %v1387, %v2118
        %v2393 = vsub.f32 %v1300, %v2081
        %v2394 = vsub.f32 %v1389, %v2118
        %v2395 = vsub.f32 %v1513, %v2155
        %v2396 = vsub.f32 %v1602, %v2192
        %v2397 = vsub.f32 %v1515, %v2155
        %v2398 = vsub.f32 %v1604, %v2192
        %v2399 = vsub.f32 %v1518, %v2155
        %v2400 = vsub.f32 %v1607, %v2192
        %v2401 = vsub.f32 %v1520, %v2155
        %v2402 = vsub.f32 %v1609, %v2192
        %v2403 = vsub.f32 %v1523, %v2155
        %v2404 = vsub.f32 %v1612, %v2192
        %v2405 = vsub.f32 %v1525, %v2155
        %v2406 = vsub.f32 %v1614, %v2192
        %v2407 = vsub.f32 %v1528, %v2155
        %v2408 = vsub.f32 %v1617, %v2192
        %v2409 = vsub.f32 %v1530, %v2155
        %v2410 = vsub.f32 %v1619, %v2192
        %v2411 = vsub.f32 %v1533, %v2155
        %v2412 = vsub.f32 %v1622, %v2192
        %v2413 = vsub.f32 %v1535, %v2155
        %v2414 = vsub.f32 %v1624, %v2192
        %v2415 = vsub.f32 %v1538, %v2155
        %v2416 = vsub.f32 %v1627, %v2192
        %v2417 = vsub.f32 %v1540, %v2155
        %v2418 = vsub.f32 %v1629, %v2192
        %v2419 = vsub.f32 %v1543, %v2155
        %v2420 = vsub.f32 %v1632, %v2192
        %v2421 = vsub.f32 %v1545, %v2155
        %v2422 = vsub.f32 %v1634, %v2192
        %v2423 = vsub.f32 %v1548, %v2155
        %v2424 = vsub.f32 %v1637, %v2192
        %v2425 = vsub.f32 %v1550, %v2155
        %v2426 = vsub.f32 %v1639, %v2192
        %v2427 = vsub.f32 %v1553, %v2155
        %v2428 = vsub.f32 %v1642, %v2192
        %v2429 = vsub.f32 %v1555, %v2155
        %v2430 = vsub.f32 %v1644, %v2192
        %v2431 = vsub.f32 %v1558, %v2155
        %v2432 = vsub.f32 %v1647, %v2192
        %v2433 = vsub.f32 %v1560, %v2155
        %v2434 = vsub.f32 %v1649, %v2192
        %v2435 = vsub.f32 %v1563, %v2155
        %v2436 = vsub.f32 %v1652, %v2192
        %v2437 = vsub.f32 %v1565, %v2155
        %v2438 = vsub.f32 %v1654, %v2192
        %v2439 = vsub.f32 %v1568, %v2155
        %v2440 = vsub.f32 %v1657, %v2192
        %v2441 = vsub.f32 %v1570, %v2155
        %v2442 = vsub.f32 %v1659, %v2192
        %v2443 = vsub.f32 %v1573, %v2155
        %v2444 = vsub.f32 %v1662, %v2192
        %v2445 = vsub.f32 %v1575, %v2155
        %v2446 = vsub.f32 %v1664, %v2192
        %v2447 = vsub.f32 %v1578, %v2155
        %v2448 = vsub.f32 %v1667, %v2192
        %v2449 = vsub.f32 %v1580, %v2155
        %v2450 = vsub.f32 %v1669, %v2192
        %v2451 = vsub.f32 %v1583, %v2155
        %v2452 = vsub.f32 %v1672, %v2192
        %v2453 = vsub.f32 %v1585, %v2155
        %v2454 = vsub.f32 %v1674, %v2192
        %v2455 = vsub.f32 %v1588, %v2155
        %v2456 = vsub.f32 %v1677, %v2192
        %v2457 = vsub.f32 %v1590, %v2155
        %v2458 = vsub.f32 %v1679, %v2192
        %v2459 = vsub.f32 %v1803, %v2229
        %v2460 = vsub.f32 %v1892, %v2266
        %v2461 = vsub.f32 %v1805, %v2229
        %v2462 = vsub.f32 %v1894, %v2266
        %v2463 = vsub.f32 %v1808, %v2229
        %v2464 = vsub.f32 %v1897, %v2266
        %v2465 = vsub.f32 %v1810, %v2229
        %v2466 = vsub.f32 %v1899, %v2266
        %v2467 = vsub.f32 %v1813, %v2229
        %v2468 = vsub.f32 %v1902, %v2266
        %v2469 = vsub.f32 %v1815, %v2229
        %v2470 = vsub.f32 %v1904, %v2266
        %v2471 = vsub.f32 %v1818, %v2229
        %v2472 = vsub.f32 %v1907, %v2266
        %v2473 = vsub.f32 %v1820, %v2229
        %v2474 = vsub.f32 %v1909, %v2266
        %v2475 = vsub.f32 %v1823, %v2229
        %v2476 = vsub.f32 %v1912, %v2266
        %v2477 = vsub.f32 %v1825, %v2229
        %v2478 = vsub.f32 %v1914, %v2266
        %v2479 = vsub.f32 %v1828, %v2229
        %v2480 = vsub.f32 %v1917, %v2266
        %v2481 = vsub.f32 %v1830, %v2229
        %v2482 = vsub.f32 %v1919, %v2266
        %v2483 = vsub.f32 %v1833, %v2229
        %v2484 = vsub.f32 %v1922, %v2266
        %v2485 = vsub.f32 %v1835, %v2229
        %v2486 = vsub.f32 %v1924, %v2266
        %v2487 = vsub.f32 %v1838, %v2229
        %v2488 = vsub.f32 %v1927, %v2266
        %v2489 = vsub.f32 %v1840, %v2229
        %v2490 = vsub.f32 %v1929, %v2266
        %v2491 = vsub.f32 %v1843, %v2229
        %v2492 = vsub.f32 %v1932, %v2266
        %v2493 = vsub.f32 %v1845, %v2229
        %v2494 = vsub.f32 %v1934, %v2266
        %v2495 = vsub.f32 %v1848, %v2229
        %v2496 = vsub.f32 %v1937, %v2266
        %v2497 = vsub.f32 %v1850, %v2229
        %v2498 = vsub.f32 %v1939, %v2266
        %v2499 = vsub.f32 %v1853, %v2229
        %v2500 = vsub.f32 %v1942, %v2266
        %v2501 = vsub.f32 %v1855, %v2229
        %v2502 = vsub.f32 %v1944, %v2266
        %v2503 = vsub.f32 %v1858, %v2229
        %v2504 = vsub.f32 %v1947, %v2266
        %v2505 = vsub.f32 %v1860, %v2229
        %v2506 = vsub.f32 %v1949, %v2266
        %v2507 = vsub.f32 %v1863, %v2229
        %v2508 = vsub.f32 %v1952, %v2266
        %v2509 = vsub.f32 %v1865, %v2229
        %v2510 = vsub.f32 %v1954, %v2266
        %v2511 = vsub.f32 %v1868, %v2229
        %v2512 = vsub.f32 %v1957, %v2266
        %v2513 = vsub.f32 %v1870, %v2229
        %v2514 = vsub.f32 %v1959, %v2266
        %v2515 = vsub.f32 %v1873, %v2229
        %v2516 = vsub.f32 %v1962, %v2266
        %v2517 = vsub.f32 %v1875, %v2229
        %v2518 = vsub.f32 %v1964, %v2266
        %v2519 = vsub.f32 %v1878, %v2229
        %v2520 = vsub.f32 %v1967, %v2266
        %v2521 = vsub.f32 %v1880, %v2229
        %v2522 = vsub.f32 %v1969, %v2266
        %v2523 = vmul.f32 %v2267, 1.442695
        %v2524 = vpow.pop %v2523
        %v2525 = vmul.f32 %v2268, 1.442695
        %v2526 = vpow.pop %v2525
        %v2527 = vmul.f32 %v2269, 1.442695
        %v2528 = vpow.pop %v2527
        %v2529 = vmul.f32 %v2270, 1.442695
        %v2530 = vpow.pop %v2529
        %v2531 = vmul.f32 %v2271, 1.442695
        %v2532 = vpow.pop %v2531
        %v2533 = vmul.f32 %v2272, 1.442695
        %v2534 = vpow.pop %v2533
        %v2535 = vmul.f32 %v2273, 1.442695
        %v2536 = vpow.pop %v2535
        %v2537 = vmul.f32 %v2274, 1.442695
        %v2538 = vpow.pop %v2537
        %v2539 = vmul.f32 %v2275, 1.442695
        %v2540 = vpow.pop %v2539
        %v2541 = vmul.f32 %v2276, 1.442695
        %v2542 = vpow.pop %v2541
        %v2543 = vmul.f32 %v2277, 1.442695
        %v2544 = vpow.pop %v2543
        %v2545 = vmul.f32 %v2278, 1.442695
        %v2546 = vpow.pop %v2545
        %v2547 = vmul.f32 %v2279, 1.442695
        %v2548 = vpow.pop %v2547
        %v2549 = vmul.f32 %v2280, 1.442695
        %v2550 = vpow.pop %v2549
        %v2551 = vmul.f32 %v2281, 1.442695
        %v2552 = vpow.pop %v2551
        %v2553 = vmul.f32 %v2282, 1.442695
        %v2554 = vpow.pop %v2553
        %v2555 = vmul.f32 %v2283, 1.442695
        %v2556 = vpow.pop %v2555
        %v2557 = vmul.f32 %v2284, 1.442695
        %v2558 = vpow.pop %v2557
        %v2559 = vmul.f32 %v2285, 1.442695
        %v2560 = vpow.pop %v2559
        %v2561 = vmul.f32 %v2286, 1.442695
        %v2562 = vpow.pop %v2561
        %v2563 = vmul.f32 %v2287, 1.442695
        %v2564 = vpow.pop %v2563
        %v2565 = vmul.f32 %v2288, 1.442695
        %v2566 = vpow.pop %v2565
        %v2567 = vmul.f32 %v2289, 1.442695
        %v2568 = vpow.pop %v2567
        %v2569 = vmul.f32 %v2290, 1.442695
        %v2570 = vpow.pop %v2569
        %v2571 = vmul.f32 %v2291, 1.442695
        %v2572 = vpow.pop %v2571
        %v2573 = vmul.f32 %v2292, 1.442695
        %v2574 = vpow.pop %v2573
        %v2575 = vmul.f32 %v2293, 1.442695
        %v2576 = vpow.pop %v2575
        %v2577 = vmul.f32 %v2294, 1.442695
        %v2578 = vpow.pop %v2577
        %v2579 = vmul.f32 %v2295, 1.442695
        %v2580 = vpow.pop %v2579
        %v2581 = vmul.f32 %v2296, 1.442695
        %v2582 = vpow.pop %v2581
        %v2583 = vmul.f32 %v2297, 1.442695
        %v2584 = vpow.pop %v2583
        %v2585 = vmul.f32 %v2298, 1.442695
        %v2586 = vpow.pop %v2585
        %v2587 = vmul.f32 %v2299, 1.442695
        %v2588 = vpow.pop %v2587
        %v2589 = vmul.f32 %v2300, 1.442695
        %v2590 = vpow.pop %v2589
        %v2591 = vmul.f32 %v2301, 1.442695
        %v2592 = vpow.pop %v2591
        %v2593 = vmul.f32 %v2302, 1.442695
        %v2594 = vpow.pop %v2593
        %v2595 = vmul.f32 %v2303, 1.442695
        %v2596 = vpow.pop %v2595
        %v2597 = vmul.f32 %v2304, 1.442695
        %v2598 = vpow.pop %v2597
        %v2599 = vmul.f32 %v2305, 1.442695
        %v2600 = vpow.pop %v2599
        %v2601 = vmul.f32 %v2306, 1.442695
        %v2602 = vpow.pop %v2601
        %v2603 = vmul.f32 %v2307, 1.442695
        %v2604 = vpow.pop %v2603
        %v2605 = vmul.f32 %v2308, 1.442695
        %v2606 = vpow.pop %v2605
        %v2607 = vmul.f32 %v2309, 1.442695
        %v2608 = vpow.pop %v2607
        %v2609 = vmul.f32 %v2310, 1.442695
        %v2610 = vpow.pop %v2609
        %v2611 = vmul.f32 %v2311, 1.442695
        %v2612 = vpow.pop %v2611
        %v2613 = vmul.f32 %v2312, 1.442695
        %v2614 = vpow.pop %v2613
        %v2615 = vmul.f32 %v2313, 1.442695
        %v2616 = vpow.pop %v2615
        %v2617 = vmul.f32 %v2314, 1.442695
        %v2618 = vpow.pop %v2617
        %v2619 = vmul.f32 %v2315, 1.442695
        %v2620 = vpow.pop %v2619
        %v2621 = vmul.f32 %v2316, 1.442695
        %v2622 = vpow.pop %v2621
        %v2623 = vmul.f32 %v2317, 1.442695
        %v2624 = vpow.pop %v2623
        %v2625 = vmul.f32 %v2318, 1.442695
        %v2626 = vpow.pop %v2625
        %v2627 = vmul.f32 %v2319, 1.442695
        %v2628 = vpow.pop %v2627
        %v2629 = vmul.f32 %v2320, 1.442695
        %v2630 = vpow.pop %v2629
        %v2631 = vmul.f32 %v2321, 1.442695
        %v2632 = vpow.pop %v2631
        %v2633 = vmul.f32 %v2322, 1.442695
        %v2634 = vpow.pop %v2633
        %v2635 = vmul.f32 %v2323, 1.442695
        %v2636 = vpow.pop %v2635
        %v2637 = vmul.f32 %v2324, 1.442695
        %v2638 = vpow.pop %v2637
        %v2639 = vmul.f32 %v2325, 1.442695
        %v2640 = vpow.pop %v2639
        %v2641 = vmul.f32 %v2326, 1.442695
        %v2642 = vpow.pop %v2641
        %v2643 = vmul.f32 %v2327, 1.442695
        %v2644 = vpow.pop %v2643
        %v2645 = vmul.f32 %v2328, 1.442695
        %v2646 = vpow.pop %v2645
        %v2647 = vmul.f32 %v2329, 1.442695
        %v2648 = vpow.pop %v2647
        %v2649 = vmul.f32 %v2330, 1.442695
        %v2650 = vpow.pop %v2649
        %v2651 = vmul.f32 %v2331, 1.442695
        %v2652 = vpow.pop %v2651
        %v2653 = vmul.f32 %v2332, 1.442695
        %v2654 = vpow.pop %v2653
        %v2655 = vmul.f32 %v2333, 1.442695
        %v2656 = vpow.pop %v2655
        %v2657 = vmul.f32 %v2334, 1.442695
        %v2658 = vpow.pop %v2657
        %v2659 = vmul.f32 %v2335, 1.442695
        %v2660 = vpow.pop %v2659
        %v2661 = vmul.f32 %v2336, 1.442695
        %v2662 = vpow.pop %v2661
        %v2663 = vmul.f32 %v2337, 1.442695
        %v2664 = vpow.pop %v2663
        %v2665 = vmul.f32 %v2338, 1.442695
        %v2666 = vpow.pop %v2665
        %v2667 = vmul.f32 %v2339, 1.442695
        %v2668 = vpow.pop %v2667
        %v2669 = vmul.f32 %v2340, 1.442695
        %v2670 = vpow.pop %v2669
        %v2671 = vmul.f32 %v2341, 1.442695
        %v2672 = vpow.pop %v2671
        %v2673 = vmul.f32 %v2342, 1.442695
        %v2674 = vpow.pop %v2673
        %v2675 = vmul.f32 %v2343, 1.442695
        %v2676 = vpow.pop %v2675
        %v2677 = vmul.f32 %v2344, 1.442695
        %v2678 = vpow.pop %v2677
        %v2679 = vmul.f32 %v2345, 1.442695
        %v2680 = vpow.pop %v2679
        %v2681 = vmul.f32 %v2346, 1.442695
        %v2682 = vpow.pop %v2681
        %v2683 = vmul.f32 %v2347, 1.442695
        %v2684 = vpow.pop %v2683
        %v2685 = vmul.f32 %v2348, 1.442695
        %v2686 = vpow.pop %v2685
        %v2687 = vmul.f32 %v2349, 1.442695
        %v2688 = vpow.pop %v2687
        %v2689 = vmul.f32 %v2350, 1.442695
        %v2690 = vpow.pop %v2689
        %v2691 = vmul.f32 %v2351, 1.442695
        %v2692 = vpow.pop %v2691
        %v2693 = vmul.f32 %v2352, 1.442695
        %v2694 = vpow.pop %v2693
        %v2695 = vmul.f32 %v2353, 1.442695
        %v2696 = vpow.pop %v2695
        %v2697 = vmul.f32 %v2354, 1.442695
        %v2698 = vpow.pop %v2697
        %v2699 = vmul.f32 %v2355, 1.442695
        %v2700 = vpow.pop %v2699
        %v2701 = vmul.f32 %v2356, 1.442695
        %v2702 = vpow.pop %v2701
        %v2703 = vmul.f32 %v2357, 1.442695
        %v2704 = vpow.pop %v2703
        %v2705 = vmul.f32 %v2358, 1.442695
        %v2706 = vpow.pop %v2705
        %v2707 = vmul.f32 %v2359, 1.442695
        %v2708 = vpow.pop %v2707
        %v2709 = vmul.f32 %v2360, 1.442695
        %v2710 = vpow.pop %v2709
        %v2711 = vmul.f32 %v2361, 1.442695
        %v2712 = vpow.pop %v2711
        %v2713 = vmul.f32 %v2362, 1.442695
        %v2714 = vpow.pop %v2713
        %v2715 = vmul.f32 %v2363, 1.442695
        %v2716 = vpow.pop %v2715
        %v2717 = vmul.f32 %v2364, 1.442695
        %v2718 = vpow.pop %v2717
        %v2719 = vmul.f32 %v2365, 1.442695
        %v2720 = vpow.pop %v2719
        %v2721 = vmul.f32 %v2366, 1.442695
        %v2722 = vpow.pop %v2721
        %v2723 = vmul.f32 %v2367, 1.442695
        %v2724 = vpow.pop %v2723
        %v2725 = vmul.f32 %v2368, 1.442695
        %v2726 = vpow.pop %v2725
        %v2727 = vmul.f32 %v2369, 1.442695
        %v2728 = vpow.pop %v2727
        %v2729 = vmul.f32 %v2370, 1.442695
        %v2730 = vpow.pop %v2729
        %v2731 = vmul.f32 %v2371, 1.442695
        %v2732 = vpow.pop %v2731
        %v2733 = vmul.f32 %v2372, 1.442695
        %v2734 = vpow.pop %v2733
        %v2735 = vmul.f32 %v2373, 1.442695
        %v2736 = vpow.pop %v2735
        %v2737 = vmul.f32 %v2374, 1.442695
        %v2738 = vpow.pop %v2737
        %v2739 = vmul.f32 %v2375, 1.442695
        %v2740 = vpow.pop %v2739
        %v2741 = vmul.f32 %v2376, 1.442695
        %v2742 = vpow.pop %v2741
        %v2743 = vmul.f32 %v2377, 1.442695
        %v2744 = vpow.pop %v2743
        %v2745 = vmul.f32 %v2378, 1.442695
        %v2746 = vpow.pop %v2745
        %v2747 = vmul.f32 %v2379, 1.442695
        %v2748 = vpow.pop %v2747
        %v2749 = vmul.f32 %v2380, 1.442695
        %v2750 = vpow.pop %v2749
        %v2751 = vmul.f32 %v2381, 1.442695
        %v2752 = vpow.pop %v2751
        %v2753 = vmul.f32 %v2382, 1.442695
        %v2754 = vpow.pop %v2753
        %v2755 = vmul.f32 %v2383, 1.442695
        %v2756 = vpow.pop %v2755
        %v2757 = vmul.f32 %v2384, 1.442695
        %v2758 = vpow.pop %v2757
        %v2759 = vmul.f32 %v2385, 1.442695
        %v2760 = vpow.pop %v2759
        %v2761 = vmul.f32 %v2386, 1.442695
        %v2762 = vpow.pop %v2761
        %v2763 = vmul.f32 %v2387, 1.442695
        %v2764 = vpow.pop %v2763
        %v2765 = vmul.f32 %v2388, 1.442695
        %v2766 = vpow.pop %v2765
        %v2767 = vmul.f32 %v2389, 1.442695
        %v2768 = vpow.pop %v2767
        %v2769 = vmul.f32 %v2390, 1.442695
        %v2770 = vpow.pop %v2769
        %v2771 = vmul.f32 %v2391, 1.442695
        %v2772 = vpow.pop %v2771
        %v2773 = vmul.f32 %v2392, 1.442695
        %v2774 = vpow.pop %v2773
        %v2775 = vmul.f32 %v2393, 1.442695
        %v2776 = vpow.pop %v2775
        %v2777 = vmul.f32 %v2394, 1.442695
        %v2778 = vpow.pop %v2777
        %v2779 = vmul.f32 %v2395, 1.442695
        %v2780 = vpow.pop %v2779
        %v2781 = vmul.f32 %v2396, 1.442695
        %v2782 = vpow.pop %v2781
        %v2783 = vmul.f32 %v2397, 1.442695
        %v2784 = vpow.pop %v2783
        %v2785 = vmul.f32 %v2398, 1.442695
        %v2786 = vpow.pop %v2785
        %v2787 = vmul.f32 %v2399, 1.442695
        %v2788 = vpow.pop %v2787
        %v2789 = vmul.f32 %v2400, 1.442695
        %v2790 = vpow.pop %v2789
        %v2791 = vmul.f32 %v2401, 1.442695
        %v2792 = vpow.pop %v2791
        %v2793 = vmul.f32 %v2402, 1.442695
        %v2794 = vpow.pop %v2793
        %v2795 = vmul.f32 %v2403, 1.442695
        %v2796 = vpow.pop %v2795
        %v2797 = vmul.f32 %v2404, 1.442695
        %v2798 = vpow.pop %v2797
        %v2799 = vmul.f32 %v2405, 1.442695
        %v2800 = vpow.pop %v2799
        %v2801 = vmul.f32 %v2406, 1.442695
        %v2802 = vpow.pop %v2801
        %v2803 = vmul.f32 %v2407, 1.442695
        %v2804 = vpow.pop %v2803
        %v2805 = vmul.f32 %v2408, 1.442695
        %v2806 = vpow.pop %v2805
        %v2807 = vmul.f32 %v2409, 1.442695
        %v2808 = vpow.pop %v2807
        %v2809 = vmul.f32 %v2410, 1.442695
        %v2810 = vpow.pop %v2809
        %v2811 = vmul.f32 %v2411, 1.442695
        %v2812 = vpow.pop %v2811
        %v2813 = vmul.f32 %v2412, 1.442695
        %v2814 = vpow.pop %v2813
        %v2815 = vmul.f32 %v2413, 1.442695
        %v2816 = vpow.pop %v2815
        %v2817 = vmul.f32 %v2414, 1.442695
        %v2818 = vpow.pop %v2817
        %v2819 = vmul.f32 %v2415, 1.442695
        %v2820 = vpow.pop %v2819
        %v2821 = vmul.f32 %v2416, 1.442695
        %v2822 = vpow.pop %v2821
        %v2823 = vmul.f32 %v2417, 1.442695
        %v2824 = vpow.pop %v2823
        %v2825 = vmul.f32 %v2418, 1.442695
        %v2826 = vpow.pop %v2825
        %v2827 = vmul.f32 %v2419, 1.442695
        %v2828 = vpow.pop %v2827
        %v2829 = vmul.f32 %v2420, 1.442695
        %v2830 = vpow.pop %v2829
        %v2831 = vmul.f32 %v2421, 1.442695
        %v2832 = vpow.pop %v2831
        %v2833 = vmul.f32 %v2422, 1.442695
        %v2834 = vpow.pop %v2833
        %v2835 = vmul.f32 %v2423, 1.442695
        %v2836 = vpow.pop %v2835
        %v2837 = vmul.f32 %v2424, 1.442695
        %v2838 = vpow.pop %v2837
        %v2839 = vmul.f32 %v2425, 1.442695
        %v2840 = vpow.pop %v2839
        %v2841 = vmul.f32 %v2426, 1.442695
        %v2842 = vpow.pop %v2841
        %v2843 = vmul.f32 %v2427, 1.442695
        %v2844 = vpow.pop %v2843
        %v2845 = vmul.f32 %v2428, 1.442695
        %v2846 = vpow.pop %v2845
        %v2847 = vmul.f32 %v2429, 1.442695
        %v2848 = vpow.pop %v2847
        %v2849 = vmul.f32 %v2430, 1.442695
        %v2850 = vpow.pop %v2849
        %v2851 = vmul.f32 %v2431, 1.442695
        %v2852 = vpow.pop %v2851
        %v2853 = vmul.f32 %v2432, 1.442695
        %v2854 = vpow.pop %v2853
        %v2855 = vmul.f32 %v2433, 1.442695
        %v2856 = vpow.pop %v2855
        %v2857 = vmul.f32 %v2434, 1.442695
        %v2858 = vpow.pop %v2857
        %v2859 = vmul.f32 %v2435, 1.442695
        %v2860 = vpow.pop %v2859
        %v2861 = vmul.f32 %v2436, 1.442695
        %v2862 = vpow.pop %v2861
        %v2863 = vmul.f32 %v2437, 1.442695
        %v2864 = vpow.pop %v2863
        %v2865 = vmul.f32 %v2438, 1.442695
        %v2866 = vpow.pop %v2865
        %v2867 = vmul.f32 %v2439, 1.442695
        %v2868 = vpow.pop %v2867
        %v2869 = vmul.f32 %v2440, 1.442695
        %v2870 = vpow.pop %v2869
        %v2871 = vmul.f32 %v2441, 1.442695
        %v2872 = vpow.pop %v2871
        %v2873 = vmul.f32 %v2442, 1.442695
        %v2874 = vpow.pop %v2873
        %v2875 = vmul.f32 %v2443, 1.442695
        %v2876 = vpow.pop %v2875
        %v2877 = vmul.f32 %v2444, 1.442695
        %v2878 = vpow.pop %v2877
        %v2879 = vmul.f32 %v2445, 1.442695
        %v2880 = vpow.pop %v2879
        %v2881 = vmul.f32 %v2446, 1.442695
        %v2882 = vpow.pop %v2881
        %v2883 = vmul.f32 %v2447, 1.442695
        %v2884 = vpow.pop %v2883
        %v2885 = vmul.f32 %v2448, 1.442695
        %v2886 = vpow.pop %v2885
        %v2887 = vmul.f32 %v2449, 1.442695
        %v2888 = vpow.pop %v2887
        %v2889 = vmul.f32 %v2450, 1.442695
        %v2890 = vpow.pop %v2889
        %v2891 = vmul.f32 %v2451, 1.442695
        %v2892 = vpow.pop %v2891
        %v2893 = vmul.f32 %v2452, 1.442695
        %v2894 = vpow.pop %v2893
        %v2895 = vmul.f32 %v2453, 1.442695
        %v2896 = vpow.pop %v2895
        %v2897 = vmul.f32 %v2454, 1.442695
        %v2898 = vpow.pop %v2897
        %v2899 = vmul.f32 %v2455, 1.442695
        %v2900 = vpow.pop %v2899
        %v2901 = vmul.f32 %v2456, 1.442695
        %v2902 = vpow.pop %v2901
        %v2903 = vmul.f32 %v2457, 1.442695
        %v2904 = vpow.pop %v2903
        %v2905 = vmul.f32 %v2458, 1.442695
        %v2906 = vpow.pop %v2905
        %v2907 = vmul.f32 %v2459, 1.442695
        %v2908 = vpow.pop %v2907
        %v2909 = vmul.f32 %v2460, 1.442695
        %v2910 = vpow.pop %v2909
        %v2911 = vmul.f32 %v2461, 1.442695
        %v2912 = vpow.pop %v2911
        %v2913 = vmul.f32 %v2462, 1.442695
        %v2914 = vpow.pop %v2913
        %v2915 = vmul.f32 %v2463, 1.442695
        %v2916 = vpow.pop %v2915
        %v2917 = vmul.f32 %v2464, 1.442695
        %v2918 = vpow.pop %v2917
        %v2919 = vmul.f32 %v2465, 1.442695
        %v2920 = vpow.pop %v2919
        %v2921 = vmul.f32 %v2466, 1.442695
        %v2922 = vpow.pop %v2921
        %v2923 = vmul.f32 %v2467, 1.442695
        %v2924 = vpow.pop %v2923
        %v2925 = vmul.f32 %v2468, 1.442695
        %v2926 = vpow.pop %v2925
        %v2927 = vmul.f32 %v2469, 1.442695
        %v2928 = vpow.pop %v2927
        %v2929 = vmul.f32 %v2470, 1.442695
        %v2930 = vpow.pop %v2929
        %v2931 = vmul.f32 %v2471, 1.442695
        %v2932 = vpow.pop %v2931
        %v2933 = vmul.f32 %v2472, 1.442695
        %v2934 = vpow.pop %v2933
        %v2935 = vmul.f32 %v2473, 1.442695
        %v2936 = vpow.pop %v2935
        %v2937 = vmul.f32 %v2474, 1.442695
        %v2938 = vpow.pop %v2937
        %v2939 = vmul.f32 %v2475, 1.442695
        %v2940 = vpow.pop %v2939
        %v2941 = vmul.f32 %v2476, 1.442695
        %v2942 = vpow.pop %v2941
        %v2943 = vmul.f32 %v2477, 1.442695
        %v2944 = vpow.pop %v2943
        %v2945 = vmul.f32 %v2478, 1.442695
        %v2946 = vpow.pop %v2945
        %v2947 = vmul.f32 %v2479, 1.442695
        %v2948 = vpow.pop %v2947
        %v2949 = vmul.f32 %v2480, 1.442695
        %v2950 = vpow.pop %v2949
        %v2951 = vmul.f32 %v2481, 1.442695
        %v2952 = vpow.pop %v2951
        %v2953 = vmul.f32 %v2482, 1.442695
        %v2954 = vpow.pop %v2953
        %v2955 = vmul.f32 %v2483, 1.442695
        %v2956 = vpow.pop %v2955
        %v2957 = vmul.f32 %v2484, 1.442695
        %v2958 = vpow.pop %v2957
        %v2959 = vmul.f32 %v2485, 1.442695
        %v2960 = vpow.pop %v2959
        %v2961 = vmul.f32 %v2486, 1.442695
        %v2962 = vpow.pop %v2961
        %v2963 = vmul.f32 %v2487, 1.442695
        %v2964 = vpow.pop %v2963
        %v2965 = vmul.f32 %v2488, 1.442695
        %v2966 = vpow.pop %v2965
        %v2967 = vmul.f32 %v2489, 1.442695
        %v2968 = vpow.pop %v2967
        %v2969 = vmul.f32 %v2490, 1.442695
        %v2970 = vpow.pop %v2969
        %v2971 = vmul.f32 %v2491, 1.442695
        %v2972 = vpow.pop %v2971
        %v2973 = vmul.f32 %v2492, 1.442695
        %v2974 = vpow.pop %v2973
        %v2975 = vmul.f32 %v2493, 1.442695
        %v2976 = vpow.pop %v2975
        %v2977 = vmul.f32 %v2494, 1.442695
        %v2978 = vpow.pop %v2977
        %v2979 = vmul.f32 %v2495, 1.442695
        %v2980 = vpow.pop %v2979
        %v2981 = vmul.f32 %v2496, 1.442695
        %v2982 = vpow.pop %v2981
        %v2983 = vmul.f32 %v2497, 1.442695
        %v2984 = vpow.pop %v2983
        %v2985 = vmul.f32 %v2498, 1.442695
        %v2986 = vpow.pop %v2985
        %v2987 = vmul.f32 %v2499, 1.442695
        %v2988 = vpow.pop %v2987
        %v2989 = vmul.f32 %v2500, 1.442695
        %v2990 = vpow.pop %v2989
        %v2991 = vmul.f32 %v2501, 1.442695
        %v2992 = vpow.pop %v2991
        %v2993 = vmul.f32 %v2502, 1.442695
        %v2994 = vpow.pop %v2993
        %v2995 = vmul.f32 %v2503, 1.442695
        %v2996 = vpow.pop %v2995
        %v2997 = vmul.f32 %v2504, 1.442695
        %v2998 = vpow.pop %v2997
        %v2999 = vmul.f32 %v2505, 1.442695
        %v3000 = vpow.pop %v2999
        %v3001 = vmul.f32 %v2506, 1.442695
        %v3002 = vpow.pop %v3001
        %v3003 = vmul.f32 %v2507, 1.442695
        %v3004 = vpow.pop %v3003
        %v3005 = vmul.f32 %v2508, 1.442695
        %v3006 = vpow.pop %v3005
        %v3007 = vmul.f32 %v2509, 1.442695
        %v3008 = vpow.pop %v3007
        %v3009 = vmul.f32 %v2510, 1.442695
        %v3010 = vpow.pop %v3009
        %v3011 = vmul.f32 %v2511, 1.442695
        %v3012 = vpow.pop %v3011
        %v3013 = vmul.f32 %v2512, 1.442695
        %v3014 = vpow.pop %v3013
        %v3015 = vmul.f32 %v2513, 1.442695
        %v3016 = vpow.pop %v3015
        %v3017 = vmul.f32 %v2514, 1.442695
        %v3018 = vpow.pop %v3017
        %v3019 = vmul.f32 %v2515, 1.442695
        %v3020 = vpow.pop %v3019
        %v3021 = vmul.f32 %v2516, 1.442695
        %v3022 = vpow.pop %v3021
        %v3023 = vmul.f32 %v2517, 1.442695
        %v3024 = vpow.pop %v3023
        %v3025 = vmul.f32 %v2518, 1.442695
        %v3026 = vpow.pop %v3025
        %v3027 = vmul.f32 %v2519, 1.442695
        %v3028 = vpow.pop %v3027
        %v3029 = vmul.f32 %v2520, 1.442695
        %v3030 = vpow.pop %v3029
        %v3031 = vmul.f32 %v2521, 1.442695
        %v3032 = vpow.pop %v3031
        %v3033 = vmul.f32 %v2522, 1.442695
        %v3034 = vpow.pop %v3033
        %v3035 = vadd.f32 %v2524, %v2528
        %v3036 = vadd.f32 %v3035, %v2532
        %v3037 = vadd.f32 %v3036, %v2536
        %v3038 = vadd.f32 %v3037, %v2540
        %v3039 = vadd.f32 %v3038, %v2544
        %v3040 = vadd.f32 %v3039, %v2548
        %v3041 = vadd.f32 %v3040, %v2552
        %v3042 = vadd.f32 %v3041, %v2556
        %v3043 = vadd.f32 %v3042, %v2560
        %v3044 = vadd.f32 %v3043, %v2564
        %v3045 = vadd.f32 %v3044, %v2568
        %v3046 = vadd.f32 %v3045, %v2572
        %v3047 = vadd.f32 %v3046, %v2576
        %v3048 = vadd.f32 %v3047, %v2580
        %v3049 = vadd.f32 %v3048, %v2584
        %v3050 = vadd.f32 %v3049, %v2588
        %v3051 = vadd.f32 %v3050, %v2592
        %v3052 = vadd.f32 %v3051, %v2596
        %v3053 = vadd.f32 %v3052, %v2600
        %v3054 = vadd.f32 %v3053, %v2604
        %v3055 = vadd.f32 %v3054, %v2608
        %v3056 = vadd.f32 %v3055, %v2612
        %v3057 = vadd.f32 %v3056, %v2616
        %v3058 = vadd.f32 %v3057, %v2620
        %v3059 = vadd.f32 %v3058, %v2624
        %v3060 = vadd.f32 %v3059, %v2628
        %v3061 = vadd.f32 %v3060, %v2632
        %v3062 = vadd.f32 %v3061, %v2636
        %v3063 = vadd.f32 %v3062, %v2640
        %v3064 = vadd.f32 %v3063, %v2644
        %v3065 = vadd.f32 %v3064, %v2648
        %v3066 = vrot.slane %v3065, 4
        %v3067 = vadd.f32 %v3065, %v3066
        %v3068 = vrot.slane %v3067, 2
        %v3069 = vadd.f32 %v3067, %v3068
        %v3070 = vrot.slane %v3069, 1
        %v3071 = vadd.f32 %v3069, %v3070
        %v3072 = vadd.f32 %v2526, %v2530
        %v3073 = vadd.f32 %v3072, %v2534
        %v3074 = vadd.f32 %v3073, %v2538
        %v3075 = vadd.f32 %v3074, %v2542
        %v3076 = vadd.f32 %v3075, %v2546
        %v3077 = vadd.f32 %v3076, %v2550
        %v3078 = vadd.f32 %v3077, %v2554
        %v3079 = vadd.f32 %v3078, %v2558
        %v3080 = vadd.f32 %v3079, %v2562
        %v3081 = vadd.f32 %v3080, %v2566
        %v3082 = vadd.f32 %v3081, %v2570
        %v3083 = vadd.f32 %v3082, %v2574
        %v3084 = vadd.f32 %v3083, %v2578
        %v3085 = vadd.f32 %v3084, %v2582
        %v3086 = vadd.f32 %v3085, %v2586
        %v3087 = vadd.f32 %v3086, %v2590
        %v3088 = vadd.f32 %v3087, %v2594
        %v3089 = vadd.f32 %v3088, %v2598
        %v3090 = vadd.f32 %v3089, %v2602
        %v3091 = vadd.f32 %v3090, %v2606
        %v3092 = vadd.f32 %v3091, %v2610
        %v3093 = vadd.f32 %v3092, %v2614
        %v3094 = vadd.f32 %v3093, %v2618
        %v3095 = vadd.f32 %v3094, %v2622
        %v3096 = vadd.f32 %v3095, %v2626
        %v3097 = vadd.f32 %v3096, %v2630
        %v3098 = vadd.f32 %v3097, %v2634
        %v3099 = vadd.f32 %v3098, %v2638
        %v3100 = vadd.f32 %v3099, %v2642
        %v3101 = vadd.f32 %v3100, %v2646
        %v3102 = vadd.f32 %v3101, %v2650
        %v3103 = vrot.slane %v3102, 4
        %v3104 = vadd.f32 %v3102, %v3103
        %v3105 = vrot.slane %v3104, 2
        %v3106 = vadd.f32 %v3104, %v3105
        %v3107 = vrot.slane %v3106, 1
        %v3108 = vadd.f32 %v3106, %v3107
        %v3109 = vadd.f32 %v2652, %v2656
        %v3110 = vadd.f32 %v3109, %v2660
        %v3111 = vadd.f32 %v3110, %v2664
        %v3112 = vadd.f32 %v3111, %v2668
        %v3113 = vadd.f32 %v3112, %v2672
        %v3114 = vadd.f32 %v3113, %v2676
        %v3115 = vadd.f32 %v3114, %v2680
        %v3116 = vadd.f32 %v3115, %v2684
        %v3117 = vadd.f32 %v3116, %v2688
        %v3118 = vadd.f32 %v3117, %v2692
        %v3119 = vadd.f32 %v3118, %v2696
        %v3120 = vadd.f32 %v3119, %v2700
        %v3121 = vadd.f32 %v3120, %v2704
        %v3122 = vadd.f32 %v3121, %v2708
        %v3123 = vadd.f32 %v3122, %v2712
        %v3124 = vadd.f32 %v3123, %v2716
        %v3125 = vadd.f32 %v3124, %v2720
        %v3126 = vadd.f32 %v3125, %v2724
        %v3127 = vadd.f32 %v3126, %v2728
        %v3128 = vadd.f32 %v3127, %v2732
        %v3129 = vadd.f32 %v3128, %v2736
        %v3130 = vadd.f32 %v3129, %v2740
        %v3131 = vadd.f32 %v3130, %v2744
        %v3132 = vadd.f32 %v3131, %v2748
        %v3133 = vadd.f32 %v3132, %v2752
        %v3134 = vadd.f32 %v3133, %v2756
        %v3135 = vadd.f32 %v3134, %v2760
        %v3136 = vadd.f32 %v3135, %v2764
        %v3137 = vadd.f32 %v3136, %v2768
        %v3138 = vadd.f32 %v3137, %v2772
        %v3139 = vadd.f32 %v3138, %v2776
        %v3140 = vrot.slane %v3139, 4
        %v3141 = vadd.f32 %v3139, %v3140
        %v3142 = vrot.slane %v3141, 2
        %v3143 = vadd.f32 %v3141, %v3142
        %v3144 = vrot.slane %v3143, 1
        %v3145 = vadd.f32 %v3143, %v3144
        %v3146 = vadd.f32 %v2654, %v2658
        %v3147 = vadd.f32 %v3146, %v2662
        %v3148 = vadd.f32 %v3147, %v2666
        %v3149 = vadd.f32 %v3148, %v2670
        %v3150 = vadd.f32 %v3149, %v2674
        %v3151 = vadd.f32 %v3150, %v2678
        %v3152 = vadd.f32 %v3151, %v2682
        %v3153 = vadd.f32 %v3152, %v2686
        %v3154 = vadd.f32 %v3153, %v2690
        %v3155 = vadd.f32 %v3154, %v2694
        %v3156 = vadd.f32 %v3155, %v2698
        %v3157 = vadd.f32 %v3156, %v2702
        %v3158 = vadd.f32 %v3157, %v2706
        %v3159 = vadd.f32 %v3158, %v2710
        %v3160 = vadd.f32 %v3159, %v2714
        %v3161 = vadd.f32 %v3160, %v2718
        %v3162 = vadd.f32 %v3161, %v2722
        %v3163 = vadd.f32 %v3162, %v2726
        %v3164 = vadd.f32 %v3163, %v2730
        %v3165 = vadd.f32 %v3164, %v2734
        %v3166 = vadd.f32 %v3165, %v2738
        %v3167 = vadd.f32 %v3166, %v2742
        %v3168 = vadd.f32 %v3167, %v2746
        %v3169 = vadd.f32 %v3168, %v2750
        %v3170 = vadd.f32 %v3169, %v2754
        %v3171 = vadd.f32 %v3170, %v2758
        %v3172 = vadd.f32 %v3171, %v2762
        %v3173 = vadd.f32 %v3172, %v2766
        %v3174 = vadd.f32 %v3173, %v2770
        %v3175 = vadd.f32 %v3174, %v2774
        %v3176 = vadd.f32 %v3175, %v2778
        %v3177 = vrot.slane %v3176, 4
        %v3178 = vadd.f32 %v3176, %v3177
        %v3179 = vrot.slane %v3178, 2
        %v3180 = vadd.f32 %v3178, %v3179
        %v3181 = vrot.slane %v3180, 1
        %v3182 = vadd.f32 %v3180, %v3181
        %v3183 = vadd.f32 %v2780, %v2784
        %v3184 = vadd.f32 %v3183, %v2788
        %v3185 = vadd.f32 %v3184, %v2792
        %v3186 = vadd.f32 %v3185, %v2796
        %v3187 = vadd.f32 %v3186, %v2800
        %v3188 = vadd.f32 %v3187, %v2804
        %v3189 = vadd.f32 %v3188, %v2808
        %v3190 = vadd.f32 %v3189, %v2812
        %v3191 = vadd.f32 %v3190, %v2816
        %v3192 = vadd.f32 %v3191, %v2820
        %v3193 = vadd.f32 %v3192, %v2824
        %v3194 = vadd.f32 %v3193, %v2828
        %v3195 = vadd.f32 %v3194, %v2832
        %v3196 = vadd.f32 %v3195, %v2836
        %v3197 = vadd.f32 %v3196, %v2840
        %v3198 = vadd.f32 %v3197, %v2844
        %v3199 = vadd.f32 %v3198, %v2848
        %v3200 = vadd.f32 %v3199, %v2852
        %v3201 = vadd.f32 %v3200, %v2856
        %v3202 = vadd.f32 %v3201, %v2860
        %v3203 = vadd.f32 %v3202, %v2864
        %v3204 = vadd.f32 %v3203, %v2868
        %v3205 = vadd.f32 %v3204, %v2872
        %v3206 = vadd.f32 %v3205, %v2876
        %v3207 = vadd.f32 %v3206, %v2880
        %v3208 = vadd.f32 %v3207, %v2884
        %v3209 = vadd.f32 %v3208, %v2888
        %v3210 = vadd.f32 %v3209, %v2892
        %v3211 = vadd.f32 %v3210, %v2896
        %v3212 = vadd.f32 %v3211, %v2900
        %v3213 = vadd.f32 %v3212, %v2904
        %v3214 = vrot.slane %v3213, 4
        %v3215 = vadd.f32 %v3213, %v3214
        %v3216 = vrot.slane %v3215, 2
        %v3217 = vadd.f32 %v3215, %v3216
        %v3218 = vrot.slane %v3217, 1
        %v3219 = vadd.f32 %v3217, %v3218
        %v3220 = vadd.f32 %v2782, %v2786
        %v3221 = vadd.f32 %v3220, %v2790
        %v3222 = vadd.f32 %v3221, %v2794
        %v3223 = vadd.f32 %v3222, %v2798
        %v3224 = vadd.f32 %v3223, %v2802
        %v3225 = vadd.f32 %v3224, %v2806
        %v3226 = vadd.f32 %v3225, %v2810
        %v3227 = vadd.f32 %v3226, %v2814
        %v3228 = vadd.f32 %v3227, %v2818
        %v3229 = vadd.f32 %v3228, %v2822
        %v3230 = vadd.f32 %v3229, %v2826
        %v3231 = vadd.f32 %v3230, %v2830
        %v3232 = vadd.f32 %v3231, %v2834
        %v3233 = vadd.f32 %v3232, %v2838
        %v3234 = vadd.f32 %v3233, %v2842
        %v3235 = vadd.f32 %v3234, %v2846
        %v3236 = vadd.f32 %v3235, %v2850
        %v3237 = vadd.f32 %v3236, %v2854
        %v3238 = vadd.f32 %v3237, %v2858
        %v3239 = vadd.f32 %v3238, %v2862
        %v3240 = vadd.f32 %v3239, %v2866
        %v3241 = vadd.f32 %v3240, %v2870
        %v3242 = vadd.f32 %v3241, %v2874
        %v3243 = vadd.f32 %v3242, %v2878
        %v3244 = vadd.f32 %v3243, %v2882
        %v3245 = vadd.f32 %v3244, %v2886
        %v3246 = vadd.f32 %v3245, %v2890
        %v3247 = vadd.f32 %v3246, %v2894
        %v3248 = vadd.f32 %v3247, %v2898
        %v3249 = vadd.f32 %v3248, %v2902
        %v3250 = vadd.f32 %v3249, %v2906
        %v3251 = vrot.slane %v3250, 4
        %v3252 = vadd.f32 %v3250, %v3251
        %v3253 = vrot.slane %v3252, 2
        %v3254 = vadd.f32 %v3252, %v3253
        %v3255 = vrot.slane %v3254, 1
        %v3256 = vadd.f32 %v3254, %v3255
        %v3257 = vadd.f32 %v2908, %v2912
        %v3258 = vadd.f32 %v3257, %v2916
        %v3259 = vadd.f32 %v3258, %v2920
        %v3260 = vadd.f32 %v3259, %v2924
        %v3261 = vadd.f32 %v3260, %v2928
        %v3262 = vadd.f32 %v3261, %v2932
        %v3263 = vadd.f32 %v3262, %v2936
        %v3264 = vadd.f32 %v3263, %v2940
        %v3265 = vadd.f32 %v3264, %v2944
        %v3266 = vadd.f32 %v3265, %v2948
        %v3267 = vadd.f32 %v3266, %v2952
        %v3268 = vadd.f32 %v3267, %v2956
        %v3269 = vadd.f32 %v3268, %v2960
        %v3270 = vadd.f32 %v3269, %v2964
        %v3271 = vadd.f32 %v3270, %v2968
        %v3272 = vadd.f32 %v3271, %v2972
        %v3273 = vadd.f32 %v3272, %v2976
        %v3274 = vadd.f32 %v3273, %v2980
        %v3275 = vadd.f32 %v3274, %v2984
        %v3276 = vadd.f32 %v3275, %v2988
        %v3277 = vadd.f32 %v3276, %v2992
        %v3278 = vadd.f32 %v3277, %v2996
        %v3279 = vadd.f32 %v3278, %v3000
        %v3280 = vadd.f32 %v3279, %v3004
        %v3281 = vadd.f32 %v3280, %v3008
        %v3282 = vadd.f32 %v3281, %v3012
        %v3283 = vadd.f32 %v3282, %v3016
        %v3284 = vadd.f32 %v3283, %v3020
        %v3285 = vadd.f32 %v3284, %v3024
        %v3286 = vadd.f32 %v3285, %v3028
        %v3287 = vadd.f32 %v3286, %v3032
        %v3288 = vrot.slane %v3287, 4
        %v3289 = vadd.f32 %v3287, %v3288
        %v3290 = vrot.slane %v3289, 2
        %v3291 = vadd.f32 %v3289, %v3290
        %v3292 = vrot.slane %v3291, 1
        %v3293 = vadd.f32 %v3291, %v3292
        %v3294 = vadd.f32 %v2910, %v2914
        %v3295 = vadd.f32 %v3294, %v2918
        %v3296 = vadd.f32 %v3295, %v2922
        %v3297 = vadd.f32 %v3296, %v2926
        %v3298 = vadd.f32 %v3297, %v2930
        %v3299 = vadd.f32 %v3298, %v2934
        %v3300 = vadd.f32 %v3299, %v2938
        %v3301 = vadd.f32 %v3300, %v2942
        %v3302 = vadd.f32 %v3301, %v2946
        %v3303 = vadd.f32 %v3302, %v2950
        %v3304 = vadd.f32 %v3303, %v2954
        %v3305 = vadd.f32 %v3304, %v2958
        %v3306 = vadd.f32 %v3305, %v2962
        %v3307 = vadd.f32 %v3306, %v2966
        %v3308 = vadd.f32 %v3307, %v2970
        %v3309 = vadd.f32 %v3308, %v2974
        %v3310 = vadd.f32 %v3309, %v2978
        %v3311 = vadd.f32 %v3310, %v2982
        %v3312 = vadd.f32 %v3311, %v2986
        %v3313 = vadd.f32 %v3312, %v2990
        %v3314 = vadd.f32 %v3313, %v2994
        %v3315 = vadd.f32 %v3314, %v2998
        %v3316 = vadd.f32 %v3315, %v3002
        %v3317 = vadd.f32 %v3316, %v3006
        %v3318 = vadd.f32 %v3317, %v3010
        %v3319 = vadd.f32 %v3318, %v3014
        %v3320 = vadd.f32 %v3319, %v3018
        %v3321 = vadd.f32 %v3320, %v3022
        %v3322 = vadd.f32 %v3321, %v3026
        %v3323 = vadd.f32 %v3322, %v3030
        %v3324 = vadd.f32 %v3323, %v3034
        %v3325 = vrot.slane %v3324, 4
        %v3326 = vadd.f32 %v3324, %v3325
        %v3327 = vrot.slane %v3326, 2
        %v3328 = vadd.f32 %v3326, %v3327
        %v3329 = vrot.slane %v3328, 1
        %v3330 = vadd.f32 %v3328, %v3329
        %v3331 = vrcp.pop %v3071
        %v3332 = vrcp.pop %v3108
        %v3333 = vrcp.pop %v3145
        %v3334 = vrcp.pop %v3182
        %v3335 = vrcp.pop %v3219
        %v3336 = vrcp.pop %v3256
        %v3337 = vrcp.pop %v3293
        %v3338 = vrcp.pop %v3330
        %v3339 = vmul.f32 %v2524, %v3331
        %v3340 = vmul.f32 %v2526, %v3332
        %v3341 = vmul.f32 %v2528, %v3331
        %v3342 = vmul.f32 %v2530, %v3332
        %v3343 = vmul.f32 %v2532, %v3331
        %v3344 = vmul.f32 %v2534, %v3332
        %v3345 = vmul.f32 %v2536, %v3331
        %v3346 = vmul.f32 %v2538, %v3332
        %v3347 = vmul.f32 %v2540, %v3331
        %v3348 = vmul.f32 %v2542, %v3332
        %v3349 = vmul.f32 %v2544, %v3331
        %v3350 = vmul.f32 %v2546, %v3332
        %v3351 = vmul.f32 %v2548, %v3331
        %v3352 = vmul.f32 %v2550, %v3332
        %v3353 = vmul.f32 %v2552, %v3331
        %v3354 = vmul.f32 %v2554, %v3332
        %v3355 = vmul.f32 %v2556, %v3331
        %v3356 = vmul.f32 %v2558, %v3332
        %v3357 = vmul.f32 %v2560, %v3331
        %v3358 = vmul.f32 %v2562, %v3332
        %v3359 = vmul.f32 %v2564, %v3331
        %v3360 = vmul.f32 %v2566, %v3332
        %v3361 = vmul.f32 %v2568, %v3331
        %v3362 = vmul.f32 %v2570, %v3332
        %v3363 = vmul.f32 %v2572, %v3331
        %v3364 = vmul.f32 %v2574, %v3332
        %v3365 = vmul.f32 %v2576, %v3331
        %v3366 = vmul.f32 %v2578, %v3332
        %v3367 = vmul.f32 %v2580, %v3331
        %v3368 = vmul.f32 %v2582, %v3332
        %v3369 = vmul.f32 %v2584, %v3331
        %v3370 = vmul.f32 %v2586, %v3332
        %v3371 = vmul.f32 %v2588, %v3331
        %v3372 = vmul.f32 %v2590, %v3332
        %v3373 = vmul.f32 %v2592, %v3331
        %v3374 = vmul.f32 %v2594, %v3332
        %v3375 = vmul.f32 %v2596, %v3331
        %v3376 = vmul.f32 %v2598, %v3332
        %v3377 = vmul.f32 %v2600, %v3331
        %v3378 = vmul.f32 %v2602, %v3332
        %v3379 = vmul.f32 %v2604, %v3331
        %v3380 = vmul.f32 %v2606, %v3332
        %v3381 = vmul.f32 %v2608, %v3331
        %v3382 = vmul.f32 %v2610, %v3332
        %v3383 = vmul.f32 %v2612, %v3331
        %v3384 = vmul.f32 %v2614, %v3332
        %v3385 = vmul.f32 %v2616, %v3331
        %v3386 = vmul.f32 %v2618, %v3332
        %v3387 = vmul.f32 %v2620, %v3331
        %v3388 = vmul.f32 %v2622, %v3332
        %v3389 = vmul.f32 %v2624, %v3331
        %v3390 = vmul.f32 %v2626, %v3332
        %v3391 = vmul.f32 %v2628, %v3331
        %v3392 = vmul.f32 %v2630, %v3332
        %v3393 = vmul.f32 %v2632, %v3331
        %v3394 = vmul.f32 %v2634, %v3332
        %v3395 = vmul.f32 %v2636, %v3331
        %v3396 = vmul.f32 %v2638, %v3332
        %v3397 = vmul.f32 %v2640, %v3331
        %v3398 = vmul.f32 %v2642, %v3332
        %v3399 = vmul.f32 %v2644, %v3331
        %v3400 = vmul.f32 %v2646, %v3332
        %v3401 = vmul.f32 %v2648, %v3331
        %v3402 = vmul.f32 %v2650, %v3332
        %v3403 = vmul.f32 %v2652, %v3333
        %v3404 = vmul.f32 %v2654, %v3334
        %v3405 = vmul.f32 %v2656, %v3333
        %v3406 = vmul.f32 %v2658, %v3334
        %v3407 = vmul.f32 %v2660, %v3333
        %v3408 = vmul.f32 %v2662, %v3334
        %v3409 = vmul.f32 %v2664, %v3333
        %v3410 = vmul.f32 %v2666, %v3334
        %v3411 = vmul.f32 %v2668, %v3333
        %v3412 = vmul.f32 %v2670, %v3334
        %v3413 = vmul.f32 %v2672, %v3333
        %v3414 = vmul.f32 %v2674, %v3334
        %v3415 = vmul.f32 %v2676, %v3333
        %v3416 = vmul.f32 %v2678, %v3334
        %v3417 = vmul.f32 %v2680, %v3333
        %v3418 = vmul.f32 %v2682, %v3334
        %v3419 = vmul.f32 %v2684, %v3333
        %v3420 = vmul.f32 %v2686, %v3334
        %v3421 = vmul.f32 %v2688, %v3333
        %v3422 = vmul.f32 %v2690, %v3334
        %v3423 = vmul.f32 %v2692, %v3333
        %v3424 = vmul.f32 %v2694, %v3334
        %v3425 = vmul.f32 %v2696, %v3333
        %v3426 = vmul.f32 %v2698, %v3334
        %v3427 = vmul.f32 %v2700, %v3333
        %v3428 = vmul.f32 %v2702, %v3334
        %v3429 = vmul.f32 %v2704, %v3333
        %v3430 = vmul.f32 %v2706, %v3334
        %v3431 = vmul.f32 %v2708, %v3333
        %v3432 = vmul.f32 %v2710, %v3334
        %v3433 = vmul.f32 %v2712, %v3333
        %v3434 = vmul.f32 %v2714, %v3334
        %v3435 = vmul.f32 %v2716, %v3333
        %v3436 = vmul.f32 %v2718, %v3334
        %v3437 = vmul.f32 %v2720, %v3333
        %v3438 = vmul.f32 %v2722, %v3334
        %v3439 = vmul.f32 %v2724, %v3333
        %v3440 = vmul.f32 %v2726, %v3334
        %v3441 = vmul.f32 %v2728, %v3333
        %v3442 = vmul.f32 %v2730, %v3334
        %v3443 = vmul.f32 %v2732, %v3333
        %v3444 = vmul.f32 %v2734, %v3334
        %v3445 = vmul.f32 %v2736, %v3333
        %v3446 = vmul.f32 %v2738, %v3334
        %v3447 = vmul.f32 %v2740, %v3333
        %v3448 = vmul.f32 %v2742, %v3334
        %v3449 = vmul.f32 %v2744, %v3333
        %v3450 = vmul.f32 %v2746, %v3334
        %v3451 = vmul.f32 %v2748, %v3333
        %v3452 = vmul.f32 %v2750, %v3334
        %v3453 = vmul.f32 %v2752, %v3333
        %v3454 = vmul.f32 %v2754, %v3334
        %v3455 = vmul.f32 %v2756, %v3333
        %v3456 = vmul.f32 %v2758, %v3334
        %v3457 = vmul.f32 %v2760, %v3333
        %v3458 = vmul.f32 %v2762, %v3334
        %v3459 = vmul.f32 %v2764, %v3333
        %v3460 = vmul.f32 %v2766, %v3334
        %v3461 = vmul.f32 %v2768, %v3333
        %v3462 = vmul.f32 %v2770, %v3334
        %v3463 = vmul.f32 %v2772, %v3333
        %v3464 = vmul.f32 %v2774, %v3334
        %v3465 = vmul.f32 %v2776, %v3333
        %v3466 = vmul.f32 %v2778, %v3334
        %v3467 = vmul.f32 %v2780, %v3335
        %v3468 = vmul.f32 %v2782, %v3336
        %v3469 = vmul.f32 %v2784, %v3335
        %v3470 = vmul.f32 %v2786, %v3336
        %v3471 = vmul.f32 %v2788, %v3335
        %v3472 = vmul.f32 %v2790, %v3336
        %v3473 = vmul.f32 %v2792, %v3335
        %v3474 = vmul.f32 %v2794, %v3336
        %v3475 = vmul.f32 %v2796, %v3335
        %v3476 = vmul.f32 %v2798, %v3336
        %v3477 = vmul.f32 %v2800, %v3335
        %v3478 = vmul.f32 %v2802, %v3336
        %v3479 = vmul.f32 %v2804, %v3335
        %v3480 = vmul.f32 %v2806, %v3336
        %v3481 = vmul.f32 %v2808, %v3335
        %v3482 = vmul.f32 %v2810, %v3336
        %v3483 = vmul.f32 %v2812, %v3335
        %v3484 = vmul.f32 %v2814, %v3336
        %v3485 = vmul.f32 %v2816, %v3335
        %v3486 = vmul.f32 %v2818, %v3336
        %v3487 = vmul.f32 %v2820, %v3335
        %v3488 = vmul.f32 %v2822, %v3336
        %v3489 = vmul.f32 %v2824, %v3335
        %v3490 = vmul.f32 %v2826, %v3336
        %v3491 = vmul.f32 %v2828, %v3335
        %v3492 = vmul.f32 %v2830, %v3336
        %v3493 = vmul.f32 %v2832, %v3335
        %v3494 = vmul.f32 %v2834, %v3336
        %v3495 = vmul.f32 %v2836, %v3335
        %v3496 = vmul.f32 %v2838, %v3336
        %v3497 = vmul.f32 %v2840, %v3335
        %v3498 = vmul.f32 %v2842, %v3336
        %v3499 = vmul.f32 %v2844, %v3335
        %v3500 = vmul.f32 %v2846, %v3336
        %v3501 = vmul.f32 %v2848, %v3335
        %v3502 = vmul.f32 %v2850, %v3336
        %v3503 = vmul.f32 %v2852, %v3335
        %v3504 = vmul.f32 %v2854, %v3336
        %v3505 = vmul.f32 %v2856, %v3335
        %v3506 = vmul.f32 %v2858, %v3336
        %v3507 = vmul.f32 %v2860, %v3335
        %v3508 = vmul.f32 %v2862, %v3336
        %v3509 = vmul.f32 %v2864, %v3335
        %v3510 = vmul.f32 %v2866, %v3336
        %v3511 = vmul.f32 %v2868, %v3335
        %v3512 = vmul.f32 %v2870, %v3336
        %v3513 = vmul.f32 %v2872, %v3335
        %v3514 = vmul.f32 %v2874, %v3336
        %v3515 = vmul.f32 %v2876, %v3335
        %v3516 = vmul.f32 %v2878, %v3336
        %v3517 = vmul.f32 %v2880, %v3335
        %v3518 = vmul.f32 %v2882, %v3336
        %v3519 = vmul.f32 %v2884, %v3335
        %v3520 = vmul.f32 %v2886, %v3336
        %v3521 = vmul.f32 %v2888, %v3335
        %v3522 = vmul.f32 %v2890, %v3336
        %v3523 = vmul.f32 %v2892, %v3335
        %v3524 = vmul.f32 %v2894, %v3336
        %v3525 = vmul.f32 %v2896, %v3335
        %v3526 = vmul.f32 %v2898, %v3336
        %v3527 = vmul.f32 %v2900, %v3335
        %v3528 = vmul.f32 %v2902, %v3336
        %v3529 = vmul.f32 %v2904, %v3335
        %v3530 = vmul.f32 %v2906, %v3336
        %v3531 = vmul.f32 %v2908, %v3337
        %v3532 = vmul.f32 %v2910, %v3338
        %v3533 = vmul.f32 %v2912, %v3337
        %v3534 = vmul.f32 %v2914, %v3338
        %v3535 = vmul.f32 %v2916, %v3337
        %v3536 = vmul.f32 %v2918, %v3338
        %v3537 = vmul.f32 %v2920, %v3337
        %v3538 = vmul.f32 %v2922, %v3338
        %v3539 = vmul.f32 %v2924, %v3337
        %v3540 = vmul.f32 %v2926, %v3338
        %v3541 = vmul.f32 %v2928, %v3337
        %v3542 = vmul.f32 %v2930, %v3338
        %v3543 = vmul.f32 %v2932, %v3337
        %v3544 = vmul.f32 %v2934, %v3338
        %v3545 = vmul.f32 %v2936, %v3337
        %v3546 = vmul.f32 %v2938, %v3338
        %v3547 = vmul.f32 %v2940, %v3337
        %v3548 = vmul.f32 %v2942, %v3338
        %v3549 = vmul.f32 %v2944, %v3337
        %v3550 = vmul.f32 %v2946, %v3338
        %v3551 = vmul.f32 %v2948, %v3337
        %v3552 = vmul.f32 %v2950, %v3338
        %v3553 = vmul.f32 %v2952, %v3337
        %v3554 = vmul.f32 %v2954, %v3338
        %v3555 = vmul.f32 %v2956, %v3337
        %v3556 = vmul.f32 %v2958, %v3338
        %v3557 = vmul.f32 %v2960, %v3337
        %v3558 = vmul.f32 %v2962, %v3338
        %v3559 = vmul.f32 %v2964, %v3337
        %v3560 = vmul.f32 %v2966, %v3338
        %v3561 = vmul.f32 %v2968, %v3337
        %v3562 = vmul.f32 %v2970, %v3338
        %v3563 = vmul.f32 %v2972, %v3337
        %v3564 = vmul.f32 %v2974, %v3338
        %v3565 = vmul.f32 %v2976, %v3337
        %v3566 = vmul.f32 %v2978, %v3338
        %v3567 = vmul.f32 %v2980, %v3337
        %v3568 = vmul.f32 %v2982, %v3338
        %v3569 = vmul.f32 %v2984, %v3337
        %v3570 = vmul.f32 %v2986, %v3338
        %v3571 = vmul.f32 %v2988, %v3337
        %v3572 = vmul.f32 %v2990, %v3338
        %v3573 = vmul.f32 %v2992, %v3337
        %v3574 = vmul.f32 %v2994, %v3338
        %v3575 = vmul.f32 %v2996, %v3337
        %v3576 = vmul.f32 %v2998, %v3338
        %v3577 = vmul.f32 %v3000, %v3337
        %v3578 = vmul.f32 %v3002, %v3338
        %v3579 = vmul.f32 %v3004, %v3337
        %v3580 = vmul.f32 %v3006, %v3338
        %v3581 = vmul.f32 %v3008, %v3337
        %v3582 = vmul.f32 %v3010, %v3338
        %v3583 = vmul.f32 %v3012, %v3337
        %v3584 = vmul.f32 %v3014, %v3338
        %v3585 = vmul.f32 %v3016, %v3337
        %v3586 = vmul.f32 %v3018, %v3338
        %v3587 = vmul.f32 %v3020, %v3337
        %v3588 = vmul.f32 %v3022, %v3338
        %v3589 = vmul.f32 %v3024, %v3337
        %v3590 = vmul.f32 %v3026, %v3338
        %v3591 = vmul.f32 %v3028, %v3337
        %v3592 = vmul.f32 %v3030, %v3338
        %v3593 = vmul.f32 %v3032, %v3337
        %v3594 = vmul.f32 %v3034, %v3338
        %v3595 = vpack.c.bf16 %v3340, %v3339
        %v3596 = vpack.c.bf16 %v3342, %v3341
        %v3597 = vpack.c.bf16 %v3344, %v3343
        %v3598 = vpack.c.bf16 %v3346, %v3345
        %v3599 = vpack.c.bf16 %v3348, %v3347
        %v3600 = vpack.c.bf16 %v3350, %v3349
        %v3601 = vpack.c.bf16 %v3352, %v3351
        %v3602 = vpack.c.bf16 %v3354, %v3353
        %v3603 = vpack.c.bf16 %v3356, %v3355
        %v3604 = vpack.c.bf16 %v3358, %v3357
        %v3605 = vpack.c.bf16 %v3360, %v3359
        %v3606 = vpack.c.bf16 %v3362, %v3361
        %v3607 = vpack.c.bf16 %v3364, %v3363
        %v3608 = vpack.c.bf16 %v3366, %v3365
        %v3609 = vpack.c.bf16 %v3368, %v3367
        %v3610 = vpack.c.bf16 %v3370, %v3369
        %v3611 = vpack.c.bf16 %v3372, %v3371
        %v3612 = vpack.c.bf16 %v3374, %v3373
        %v3613 = vpack.c.bf16 %v3376, %v3375
        %v3614 = vpack.c.bf16 %v3378, %v3377
        %v3615 = vpack.c.bf16 %v3380, %v3379
        %v3616 = vpack.c.bf16 %v3382, %v3381
        %v3617 = vpack.c.bf16 %v3384, %v3383
        %v3618 = vpack.c.bf16 %v3386, %v3385
        %v3619 = vpack.c.bf16 %v3388, %v3387
        %v3620 = vpack.c.bf16 %v3390, %v3389
        %v3621 = vpack.c.bf16 %v3392, %v3391
        %v3622 = vpack.c.bf16 %v3394, %v3393
        %v3623 = vpack.c.bf16 %v3396, %v3395
        %v3624 = vpack.c.bf16 %v3398, %v3397
        %v3625 = vpack.c.bf16 %v3400, %v3399
        %v3626 = vpack.c.bf16 %v3402, %v3401
        %v3627 = vpack.c.bf16 %v3404, %v3403
        %v3628 = vpack.c.bf16 %v3406, %v3405
        %v3629 = vpack.c.bf16 %v3408, %v3407
        %v3630 = vpack.c.bf16 %v3410, %v3409
        %v3631 = vpack.c.bf16 %v3412, %v3411
        %v3632 = vpack.c.bf16 %v3414, %v3413
        %v3633 = vpack.c.bf16 %v3416, %v3415
        %v3634 = vpack.c.bf16 %v3418, %v3417
        %v3635 = vpack.c.bf16 %v3420, %v3419
        %v3636 = vpack.c.bf16 %v3422, %v3421
        %v3637 = vpack.c.bf16 %v3424, %v3423
        %v3638 = vpack.c.bf16 %v3426, %v3425
        %v3639 = vpack.c.bf16 %v3428, %v3427
        %v3640 = vpack.c.bf16 %v3430, %v3429
        %v3641 = vpack.c.bf16 %v3432, %v3431
        %v3642 = vpack.c.bf16 %v3434, %v3433
        %v3643 = vpack.c.bf16 %v3436, %v3435
        %v3644 = vpack.c.bf16 %v3438, %v3437
        %v3645 = vpack.c.bf16 %v3440, %v3439
        %v3646 = vpack.c.bf16 %v3442, %v3441
        %v3647 = vpack.c.bf16 %v3444, %v3443
        %v3648 = vpack.c.bf16 %v3446, %v3445
        %v3649 = vpack.c.bf16 %v3448, %v3447
        %v3650 = vpack.c.bf16 %v3450, %v3449
        %v3651 = vpack.c.bf16 %v3452, %v3451
        %v3652 = vpack.c.bf16 %v3454, %v3453
        %v3653 = vpack.c.bf16 %v3456, %v3455
        %v3654 = vpack.c.bf16 %v3458, %v3457
        %v3655 = vpack.c.bf16 %v3460, %v3459
        %v3656 = vpack.c.bf16 %v3462, %v3461
        %v3657 = vpack.c.bf16 %v3464, %v3463
        %v3658 = vpack.c.bf16 %v3466, %v3465
        %v3659 = vpack.c.bf16 %v3468, %v3467
        %v3660 = vpack.c.bf16 %v3470, %v3469
        %v3661 = vpack.c.bf16 %v3472, %v3471
        %v3662 = vpack.c.bf16 %v3474, %v3473
        %v3663 = vpack.c.bf16 %v3476, %v3475
        %v3664 = vpack.c.bf16 %v3478, %v3477
        %v3665 = vpack.c.bf16 %v3480, %v3479
        %v3666 = vpack.c.bf16 %v3482, %v3481
        %v3667 = vpack.c.bf16 %v3484, %v3483
        %v3668 = vpack.c.bf16 %v3486, %v3485
        %v3669 = vpack.c.bf16 %v3488, %v3487
        %v3670 = vpack.c.bf16 %v3490, %v3489
        %v3671 = vpack.c.bf16 %v3492, %v3491
        %v3672 = vpack.c.bf16 %v3494, %v3493
        %v3673 = vpack.c.bf16 %v3496, %v3495
        %v3674 = vpack.c.bf16 %v3498, %v3497
        %v3675 = vpack.c.bf16 %v3500, %v3499
        %v3676 = vpack.c.bf16 %v3502, %v3501
        %v3677 = vpack.c.bf16 %v3504, %v3503
        %v3678 = vpack.c.bf16 %v3506, %v3505
        %v3679 = vpack.c.bf16 %v3508, %v3507
        %v3680 = vpack.c.bf16 %v3510, %v3509
        %v3681 = vpack.c.bf16 %v3512, %v3511
        %v3682 = vpack.c.bf16 %v3514, %v3513
        %v3683 = vpack.c.bf16 %v3516, %v3515
        %v3684 = vpack.c.bf16 %v3518, %v3517
        %v3685 = vpack.c.bf16 %v3520, %v3519
        %v3686 = vpack.c.bf16 %v3522, %v3521
        %v3687 = vpack.c.bf16 %v3524, %v3523
        %v3688 = vpack.c.bf16 %v3526, %v3525
        %v3689 = vpack.c.bf16 %v3528, %v3527
        %v3690 = vpack.c.bf16 %v3530, %v3529
        %v3691 = vpack.c.bf16 %v3532, %v3531
        %v3692 = vpack.c.bf16 %v3534, %v3533
        %v3693 = vpack.c.bf16 %v3536, %v3535
        %v3694 = vpack.c.bf16 %v3538, %v3537
        %v3695 = vpack.c.bf16 %v3540, %v3539
        %v3696 = vpack.c.bf16 %v3542, %v3541
        %v3697 = vpack.c.bf16 %v3544, %v3543
        %v3698 = vpack.c.bf16 %v3546, %v3545
        %v3699 = vpack.c.bf16 %v3548, %v3547
        %v3700 = vpack.c.bf16 %v3550, %v3549
        %v3701 = vpack.c.bf16 %v3552, %v3551
        %v3702 = vpack.c.bf16 %v3554, %v3553
        %v3703 = vpack.c.bf16 %v3556, %v3555
        %v3704 = vpack.c.bf16 %v3558, %v3557
        %v3705 = vpack.c.bf16 %v3560, %v3559
        %v3706 = vpack.c.bf16 %v3562, %v3561
        %v3707 = vpack.c.bf16 %v3564, %v3563
        %v3708 = vpack.c.bf16 %v3566, %v3565
        %v3709 = vpack.c.bf16 %v3568, %v3567
        %v3710 = vpack.c.bf16 %v3570, %v3569
        %v3711 = vpack.c.bf16 %v3572, %v3571
        %v3712 = vpack.c.bf16 %v3574, %v3573
        %v3713 = vpack.c.bf16 %v3576, %v3575
        %v3714 = vpack.c.bf16 %v3578, %v3577
        %v3715 = vpack.c.bf16 %v3580, %v3579
        %v3716 = vpack.c.bf16 %v3582, %v3581
        %v3717 = vpack.c.bf16 %v3584, %v3583
        %v3718 = vpack.c.bf16 %v3586, %v3585
        %v3719 = vpack.c.bf16 %v3588, %v3587
        %v3720 = vpack.c.bf16 %v3590, %v3589
        %v3721 = vpack.c.bf16 %v3592, %v3591
        %v3722 = vpack.c.bf16 %v3594, %v3593
        %v3727 = vunpack.c.l.b16 %v794
        %v3728 = vunpack.c.h.b16 %v794
        %v3729 = vunpack.c.l.b16 %v795
        %v3730 = vunpack.c.h.b16 %v795
        %v3731 = vunpack.c.l.b16 %v796
        %v3732 = vunpack.c.h.b16 %v796
        %v3733 = vunpack.c.l.b16 %v797
        %v3734 = vunpack.c.h.b16 %v797
        %v3735 = vpack.c.b16 %v3729, %v3727
        %v3736 = vpack.c.b16 %v3730, %v3728
        %v3737 = vpack.c.b16 %v3733, %v3731
        %v3738 = vpack.c.b16 %v3734, %v3732
        %v3775 = vunpack.c.l.b16 %v3595
        %v3776 = vunpack.c.h.b16 %v3595
        %v3777 = vunpack.c.l.b16 %v3596
        %v3778 = vunpack.c.h.b16 %v3596
        %v3779 = vunpack.c.l.b16 %v3597
        %v3780 = vunpack.c.h.b16 %v3597
        %v3781 = vunpack.c.l.b16 %v3598
        %v3782 = vunpack.c.h.b16 %v3598
        %v3783 = vunpack.c.l.b16 %v3599
        %v3784 = vunpack.c.h.b16 %v3599
        %v3785 = vunpack.c.l.b16 %v3600
        %v3786 = vunpack.c.h.b16 %v3600
        %v3787 = vunpack.c.l.b16 %v3601
        %v3788 = vunpack.c.h.b16 %v3601
        %v3789 = vunpack.c.l.b16 %v3602
        %v3790 = vunpack.c.h.b16 %v3602
        %v3791 = vunpack.c.l.b16 %v3603
        %v3792 = vunpack.c.h.b16 %v3603
        %v3793 = vunpack.c.l.b16 %v3604
        %v3794 = vunpack.c.h.b16 %v3604
        %v3795 = vunpack.c.l.b16 %v3605
        %v3796 = vunpack.c.h.b16 %v3605
        %v3797 = vunpack.c.l.b16 %v3606
        %v3798 = vunpack.c.h.b16 %v3606
        %v3799 = vunpack.c.l.b16 %v3607
        %v3800 = vunpack.c.h.b16 %v3607
        %v3801 = vunpack.c.l.b16 %v3608
        %v3802 = vunpack.c.h.b16 %v3608
        %v3803 = vunpack.c.l.b16 %v3609
        %v3804 = vunpack.c.h.b16 %v3609
        %v3805 = vunpack.c.l.b16 %v3610
        %v3806 = vunpack.c.h.b16 %v3610
        %v3807 = vunpack.c.l.b16 %v3611
        %v3808 = vunpack.c.h.b16 %v3611
        %v3809 = vunpack.c.l.b16 %v3612
        %v3810 = vunpack.c.h.b16 %v3612
        %v3811 = vunpack.c.l.b16 %v3613
        %v3812 = vunpack.c.h.b16 %v3613
        %v3813 = vunpack.c.l.b16 %v3614
        %v3814 = vunpack.c.h.b16 %v3614
        %v3815 = vunpack.c.l.b16 %v3615
        %v3816 = vunpack.c.h.b16 %v3615
        %v3817 = vunpack.c.l.b16 %v3616
        %v3818 = vunpack.c.h.b16 %v3616
        %v3819 = vunpack.c.l.b16 %v3617
        %v3820 = vunpack.c.h.b16 %v3617
        %v3821 = vunpack.c.l.b16 %v3618
        %v3822 = vunpack.c.h.b16 %v3618
        %v3823 = vunpack.c.l.b16 %v3619
        %v3824 = vunpack.c.h.b16 %v3619
        %v3825 = vunpack.c.l.b16 %v3620
        %v3826 = vunpack.c.h.b16 %v3620
        %v3827 = vunpack.c.l.b16 %v3621
        %v3828 = vunpack.c.h.b16 %v3621
        %v3829 = vunpack.c.l.b16 %v3622
        %v3830 = vunpack.c.h.b16 %v3622
        %v3831 = vunpack.c.l.b16 %v3623
        %v3832 = vunpack.c.h.b16 %v3623
        %v3833 = vunpack.c.l.b16 %v3624
        %v3834 = vunpack.c.h.b16 %v3624
        %v3835 = vunpack.c.l.b16 %v3625
        %v3836 = vunpack.c.h.b16 %v3625
        %v3837 = vunpack.c.l.b16 %v3626
        %v3838 = vunpack.c.h.b16 %v3626
        %v3839 = vpack.c.b16 %v3777, %v3775
        %v3840 = vpack.c.b16 %v3778, %v3776
        %v3841 = vpack.c.b16 %v3781, %v3779
        %v3842 = vpack.c.b16 %v3782, %v3780
        %v3843 = vpack.c.b16 %v3785, %v3783
        %v3844 = vpack.c.b16 %v3786, %v3784
        %v3845 = vpack.c.b16 %v3789, %v3787
        %v3846 = vpack.c.b16 %v3790, %v3788
        %v3847 = vpack.c.b16 %v3793, %v3791
        %v3848 = vpack.c.b16 %v3794, %v3792
        %v3849 = vpack.c.b16 %v3797, %v3795
        %v3850 = vpack.c.b16 %v3798, %v3796
        %v3851 = vpack.c.b16 %v3801, %v3799
        %v3852 = vpack.c.b16 %v3802, %v3800
        %v3853 = vpack.c.b16 %v3805, %v3803
        %v3854 = vpack.c.b16 %v3806, %v3804
        %v3855 = vpack.c.b16 %v3809, %v3807
        %v3856 = vpack.c.b16 %v3810, %v3808
        %v3857 = vpack.c.b16 %v3813, %v3811
        %v3858 = vpack.c.b16 %v3814, %v3812
        %v3859 = vpack.c.b16 %v3817, %v3815
        %v3860 = vpack.c.b16 %v3818, %v3816
        %v3861 = vpack.c.b16 %v3821, %v3819
        %v3862 = vpack.c.b16 %v3822, %v3820
        %v3863 = vpack.c.b16 %v3825, %v3823
        %v3864 = vpack.c.b16 %v3826, %v3824
        %v3865 = vpack.c.b16 %v3829, %v3827
        %v3866 = vpack.c.b16 %v3830, %v3828
        %v3867 = vpack.c.b16 %v3833, %v3831
        %v3868 = vpack.c.b16 %v3834, %v3832
        %v3869 = vpack.c.b16 %v3837, %v3835
        %v3870 = vpack.c.b16 %v3838, %v3836
        %3903 = vmatpush.bf16.msra.mxu0 %v3853
        %3904 = vmatpush.bf16.msra.mxu0 %v3851
        %3905 = vmatpush.bf16.msra.mxu0 %v3849
        %3906 = vmatpush.bf16.msra.mxu0 %v3847
        %3907 = vmatpush.bf16.msra.mxu0 %v3845
        %3908 = vmatpush.bf16.msra.mxu0 %v3843
        %3909 = vmatpush.bf16.msra.mxu0 %v3841
        %3910 = vmatpush.bf16.msra.mxu0 %v3839
        %3911 = vmatmul.bf16.gmra.mxu0 %v3735
        %v3912 = vpop.f32.mrf.mxu0
        %v3913 = vadd.f32 0.0, %v3912
        %v3914 = vpop.f32.mrf.mxu0
        %v3915 = vadd.f32 0.0, %v3914
        %3916 = vmatmul.bf16.gmra.mxu0 %v3737
        %v3917 = vpop.f32.mrf.mxu0
        %v3918 = vadd.f32 0.0, %v3917
        %v3919 = vpop.f32.mrf.mxu0
        %v3920 = vadd.f32 0.0, %v3919
        %3921 = vdwg.mxu0
        %3922 = vmatpush.bf16.msra.mxu0 %v3869
        %3923 = vmatpush.bf16.msra.mxu0 %v3867
        %3924 = vmatpush.bf16.msra.mxu0 %v3865
        %3925 = vmatpush.bf16.msra.mxu0 %v3863
        %3926 = vmatpush.bf16.msra.mxu0 %v3861
        %3927 = vmatpush.bf16.msra.mxu0 %v3859
        %3928 = vmatpush.bf16.msra.mxu0 %v3857
        %3929 = vmatpush.bf16.msra.mxu0 %v3855
        %3930 = vmatmul.bf16.gmra.mxu0 %v3736
        %v3931 = vpop.f32.mrf.mxu0
        %v3932 = vadd.f32 %v3913, %v3931
        %v3933 = vpop.f32.mrf.mxu0
        %v3934 = vadd.f32 %v3915, %v3933
        %3935 = vmatmul.bf16.gmra.mxu0 %v3738
        %v3936 = vpop.f32.mrf.mxu0
        %v3937 = vadd.f32 %v3918, %v3936
        %v3938 = vpop.f32.mrf.mxu0
        %v3939 = vadd.f32 %v3920, %v3938
        %3940 = vdwg.mxu0
        %3941 = vmatpush.bf16.msra.mxu0 %v3854
        %3942 = vmatpush.bf16.msra.mxu0 %v3852
        %3943 = vmatpush.bf16.msra.mxu0 %v3850
        %3944 = vmatpush.bf16.msra.mxu0 %v3848
        %3945 = vmatpush.bf16.msra.mxu0 %v3846
        %3946 = vmatpush.bf16.msra.mxu0 %v3844
        %3947 = vmatpush.bf16.msra.mxu0 %v3842
        %3948 = vmatpush.bf16.msra.mxu0 %v3840
        %3949 = vmatmul.bf16.gmra.mxu0 %v3735
        %v3950 = vpop.f32.mrf.mxu0
        %v3951 = vadd.f32 0.0, %v3950
        %v3952 = vpop.f32.mrf.mxu0
        %v3953 = vadd.f32 0.0, %v3952
        %3954 = vmatmul.bf16.gmra.mxu0 %v3737
        %v3955 = vpop.f32.mrf.mxu0
        %v3956 = vadd.f32 0.0, %v3955
        %v3957 = vpop.f32.mrf.mxu0
        %v3958 = vadd.f32 0.0, %v3957
        %3959 = vdwg.mxu0
        %3960 = vmatpush.bf16.msra.mxu0 %v3870
        %3961 = vmatpush.bf16.msra.mxu0 %v3868
        %3962 = vmatpush.bf16.msra.mxu0 %v3866
        %3963 = vmatpush.bf16.msra.mxu0 %v3864
        %3964 = vmatpush.bf16.msra.mxu0 %v3862
        %3965 = vmatpush.bf16.msra.mxu0 %v3860
        %3966 = vmatpush.bf16.msra.mxu0 %v3858
        %3967 = vmatpush.bf16.msra.mxu0 %v3856
        %3968 = vmatmul.bf16.gmra.mxu0 %v3736
        %v3969 = vpop.f32.mrf.mxu0
        %v3970 = vadd.f32 %v3951, %v3969
        %v3971 = vpop.f32.mrf.mxu0
        %v3972 = vadd.f32 %v3953, %v3971
        %3973 = vmatmul.bf16.gmra.mxu0 %v3738
        %v3974 = vpop.f32.mrf.mxu0
        %v3975 = vadd.f32 %v3956, %v3974
        %v3976 = vpop.f32.mrf.mxu0
        %v3977 = vadd.f32 %v3958, %v3976
        %3978 = vdwg.mxu0
        %v3983 = vunpack.c.l.b16 %v798
        %v3984 = vunpack.c.h.b16 %v798
        %v3985 = vunpack.c.l.b16 %v799
        %v3986 = vunpack.c.h.b16 %v799
        %v3987 = vunpack.c.l.b16 %v800
        %v3988 = vunpack.c.h.b16 %v800
        %v3989 = vunpack.c.l.b16 %v801
        %v3990 = vunpack.c.h.b16 %v801
        %v3991 = vpack.c.b16 %v3985, %v3983
        %v3992 = vpack.c.b16 %v3986, %v3984
        %v3993 = vpack.c.b16 %v3989, %v3987
        %v3994 = vpack.c.b16 %v3990, %v3988
        %v4031 = vunpack.c.l.b16 %v3627
        %v4032 = vunpack.c.h.b16 %v3627
        %v4033 = vunpack.c.l.b16 %v3628
        %v4034 = vunpack.c.h.b16 %v3628
        %v4035 = vunpack.c.l.b16 %v3629
        %v4036 = vunpack.c.h.b16 %v3629
        %v4037 = vunpack.c.l.b16 %v3630
        %v4038 = vunpack.c.h.b16 %v3630
        %v4039 = vunpack.c.l.b16 %v3631
        %v4040 = vunpack.c.h.b16 %v3631
        %v4041 = vunpack.c.l.b16 %v3632
        %v4042 = vunpack.c.h.b16 %v3632
        %v4043 = vunpack.c.l.b16 %v3633
        %v4044 = vunpack.c.h.b16 %v3633
        %v4045 = vunpack.c.l.b16 %v3634
        %v4046 = vunpack.c.h.b16 %v3634
        %v4047 = vunpack.c.l.b16 %v3635
        %v4048 = vunpack.c.h.b16 %v3635
        %v4049 = vunpack.c.l.b16 %v3636
        %v4050 = vunpack.c.h.b16 %v3636
        %v4051 = vunpack.c.l.b16 %v3637
        %v4052 = vunpack.c.h.b16 %v3637
        %v4053 = vunpack.c.l.b16 %v3638
        %v4054 = vunpack.c.h.b16 %v3638
        %v4055 = vunpack.c.l.b16 %v3639
        %v4056 = vunpack.c.h.b16 %v3639
        %v4057 = vunpack.c.l.b16 %v3640
        %v4058 = vunpack.c.h.b16 %v3640
        %v4059 = vunpack.c.l.b16 %v3641
        %v4060 = vunpack.c.h.b16 %v3641
        %v4061 = vunpack.c.l.b16 %v3642
        %v4062 = vunpack.c.h.b16 %v3642
        %v4063 = vunpack.c.l.b16 %v3643
        %v4064 = vunpack.c.h.b16 %v3643
        %v4065 = vunpack.c.l.b16 %v3644
        %v4066 = vunpack.c.h.b16 %v3644
        %v4067 = vunpack.c.l.b16 %v3645
        %v4068 = vunpack.c.h.b16 %v3645
        %v4069 = vunpack.c.l.b16 %v3646
        %v4070 = vunpack.c.h.b16 %v3646
        %v4071 = vunpack.c.l.b16 %v3647
        %v4072 = vunpack.c.h.b16 %v3647
        %v4073 = vunpack.c.l.b16 %v3648
        %v4074 = vunpack.c.h.b16 %v3648
        %v4075 = vunpack.c.l.b16 %v3649
        %v4076 = vunpack.c.h.b16 %v3649
        %v4077 = vunpack.c.l.b16 %v3650
        %v4078 = vunpack.c.h.b16 %v3650
        %v4079 = vunpack.c.l.b16 %v3651
        %v4080 = vunpack.c.h.b16 %v3651
        %v4081 = vunpack.c.l.b16 %v3652
        %v4082 = vunpack.c.h.b16 %v3652
        %v4083 = vunpack.c.l.b16 %v3653
        %v4084 = vunpack.c.h.b16 %v3653
        %v4085 = vunpack.c.l.b16 %v3654
        %v4086 = vunpack.c.h.b16 %v3654
        %v4087 = vunpack.c.l.b16 %v3655
        %v4088 = vunpack.c.h.b16 %v3655
        %v4089 = vunpack.c.l.b16 %v3656
        %v4090 = vunpack.c.h.b16 %v3656
        %v4091 = vunpack.c.l.b16 %v3657
        %v4092 = vunpack.c.h.b16 %v3657
        %v4093 = vunpack.c.l.b16 %v3658
        %v4094 = vunpack.c.h.b16 %v3658
        %v4095 = vpack.c.b16 %v4033, %v4031
        %v4096 = vpack.c.b16 %v4034, %v4032
        %v4097 = vpack.c.b16 %v4037, %v4035
        %v4098 = vpack.c.b16 %v4038, %v4036
        %v4099 = vpack.c.b16 %v4041, %v4039
        %v4100 = vpack.c.b16 %v4042, %v4040
        %v4101 = vpack.c.b16 %v4045, %v4043
        %v4102 = vpack.c.b16 %v4046, %v4044
        %v4103 = vpack.c.b16 %v4049, %v4047
        %v4104 = vpack.c.b16 %v4050, %v4048
        %v4105 = vpack.c.b16 %v4053, %v4051
        %v4106 = vpack.c.b16 %v4054, %v4052
        %v4107 = vpack.c.b16 %v4057, %v4055
        %v4108 = vpack.c.b16 %v4058, %v4056
        %v4109 = vpack.c.b16 %v4061, %v4059
        %v4110 = vpack.c.b16 %v4062, %v4060
        %v4111 = vpack.c.b16 %v4065, %v4063
        %v4112 = vpack.c.b16 %v4066, %v4064
        %v4113 = vpack.c.b16 %v4069, %v4067
        %v4114 = vpack.c.b16 %v4070, %v4068
        %v4115 = vpack.c.b16 %v4073, %v4071
        %v4116 = vpack.c.b16 %v4074, %v4072
        %v4117 = vpack.c.b16 %v4077, %v4075
        %v4118 = vpack.c.b16 %v4078, %v4076
        %v4119 = vpack.c.b16 %v4081, %v4079
        %v4120 = vpack.c.b16 %v4082, %v4080
        %v4121 = vpack.c.b16 %v4085, %v4083
        %v4122 = vpack.c.b16 %v4086, %v4084
        %v4123 = vpack.c.b16 %v4089, %v4087
        %v4124 = vpack.c.b16 %v4090, %v4088
        %v4125 = vpack.c.b16 %v4093, %v4091
        %v4126 = vpack.c.b16 %v4094, %v4092
        %4159 = vmatpush.bf16.msra.mxu0 %v4109
        %4160 = vmatpush.bf16.msra.mxu0 %v4107
        %4161 = vmatpush.bf16.msra.mxu0 %v4105
        %4162 = vmatpush.bf16.msra.mxu0 %v4103
        %4163 = vmatpush.bf16.msra.mxu0 %v4101
        %4164 = vmatpush.bf16.msra.mxu0 %v4099
        %4165 = vmatpush.bf16.msra.mxu0 %v4097
        %4166 = vmatpush.bf16.msra.mxu0 %v4095
        %4167 = vmatmul.bf16.gmra.mxu0 %v3991
        %v4168 = vpop.f32.mrf.mxu0
        %v4169 = vadd.f32 0.0, %v4168
        %v4170 = vpop.f32.mrf.mxu0
        %v4171 = vadd.f32 0.0, %v4170
        %4172 = vmatmul.bf16.gmra.mxu0 %v3993
        %v4173 = vpop.f32.mrf.mxu0
        %v4174 = vadd.f32 0.0, %v4173
        %v4175 = vpop.f32.mrf.mxu0
        %v4176 = vadd.f32 0.0, %v4175
        %4177 = vdwg.mxu0
        %4178 = vmatpush.bf16.msra.mxu0 %v4125
        %4179 = vmatpush.bf16.msra.mxu0 %v4123
        %4180 = vmatpush.bf16.msra.mxu0 %v4121
        %4181 = vmatpush.bf16.msra.mxu0 %v4119
        %4182 = vmatpush.bf16.msra.mxu0 %v4117
        %4183 = vmatpush.bf16.msra.mxu0 %v4115
        %4184 = vmatpush.bf16.msra.mxu0 %v4113
        %4185 = vmatpush.bf16.msra.mxu0 %v4111
        %4186 = vmatmul.bf16.gmra.mxu0 %v3992
        %v4187 = vpop.f32.mrf.mxu0
        %v4188 = vadd.f32 %v4169, %v4187
        %v4189 = vpop.f32.mrf.mxu0
        %v4190 = vadd.f32 %v4171, %v4189
        %4191 = vmatmul.bf16.gmra.mxu0 %v3994
        %v4192 = vpop.f32.mrf.mxu0
        %v4193 = vadd.f32 %v4174, %v4192
        %v4194 = vpop.f32.mrf.mxu0
        %v4195 = vadd.f32 %v4176, %v4194
        %4196 = vdwg.mxu0
        %4197 = vmatpush.bf16.msra.mxu0 %v4110
        %4198 = vmatpush.bf16.msra.mxu0 %v4108
        %4199 = vmatpush.bf16.msra.mxu0 %v4106
        %4200 = vmatpush.bf16.msra.mxu0 %v4104
        %4201 = vmatpush.bf16.msra.mxu0 %v4102
        %4202 = vmatpush.bf16.msra.mxu0 %v4100
        %4203 = vmatpush.bf16.msra.mxu0 %v4098
        %4204 = vmatpush.bf16.msra.mxu0 %v4096
        %4205 = vmatmul.bf16.gmra.mxu0 %v3991
        %v4206 = vpop.f32.mrf.mxu0
        %v4207 = vadd.f32 0.0, %v4206
        %v4208 = vpop.f32.mrf.mxu0
        %v4209 = vadd.f32 0.0, %v4208
        %4210 = vmatmul.bf16.gmra.mxu0 %v3993
        %v4211 = vpop.f32.mrf.mxu0
        %v4212 = vadd.f32 0.0, %v4211
        %v4213 = vpop.f32.mrf.mxu0
        %v4214 = vadd.f32 0.0, %v4213
        %4215 = vdwg.mxu0
        %4216 = vmatpush.bf16.msra.mxu0 %v4126
        %4217 = vmatpush.bf16.msra.mxu0 %v4124
        %4218 = vmatpush.bf16.msra.mxu0 %v4122
        %4219 = vmatpush.bf16.msra.mxu0 %v4120
        %4220 = vmatpush.bf16.msra.mxu0 %v4118
        %4221 = vmatpush.bf16.msra.mxu0 %v4116
        %4222 = vmatpush.bf16.msra.mxu0 %v4114
        %4223 = vmatpush.bf16.msra.mxu0 %v4112
        %4224 = vmatmul.bf16.gmra.mxu0 %v3992
        %v4225 = vpop.f32.mrf.mxu0
        %v4226 = vadd.f32 %v4207, %v4225
        %v4227 = vpop.f32.mrf.mxu0
        %v4228 = vadd.f32 %v4209, %v4227
        %4229 = vmatmul.bf16.gmra.mxu0 %v3994
        %v4230 = vpop.f32.mrf.mxu0
        %v4231 = vadd.f32 %v4212, %v4230
        %v4232 = vpop.f32.mrf.mxu0
        %v4233 = vadd.f32 %v4214, %v4232
        %4234 = vdwg.mxu0
        %v4239 = vunpack.c.l.b16 %v802
        %v4240 = vunpack.c.h.b16 %v802
        %v4241 = vunpack.c.l.b16 %v803
        %v4242 = vunpack.c.h.b16 %v803
        %v4243 = vunpack.c.l.b16 %v804
        %v4244 = vunpack.c.h.b16 %v804
        %v4245 = vunpack.c.l.b16 %v805
        %v4246 = vunpack.c.h.b16 %v805
        %v4247 = vpack.c.b16 %v4241, %v4239
        %v4248 = vpack.c.b16 %v4242, %v4240
        %v4249 = vpack.c.b16 %v4245, %v4243
        %v4250 = vpack.c.b16 %v4246, %v4244
        %v4287 = vunpack.c.l.b16 %v3659
        %v4288 = vunpack.c.h.b16 %v3659
        %v4289 = vunpack.c.l.b16 %v3660
        %v4290 = vunpack.c.h.b16 %v3660
        %v4291 = vunpack.c.l.b16 %v3661
        %v4292 = vunpack.c.h.b16 %v3661
        %v4293 = vunpack.c.l.b16 %v3662
        %v4294 = vunpack.c.h.b16 %v3662
        %v4295 = vunpack.c.l.b16 %v3663
        %v4296 = vunpack.c.h.b16 %v3663
        %v4297 = vunpack.c.l.b16 %v3664
        %v4298 = vunpack.c.h.b16 %v3664
        %v4299 = vunpack.c.l.b16 %v3665
        %v4300 = vunpack.c.h.b16 %v3665
        %v4301 = vunpack.c.l.b16 %v3666
        %v4302 = vunpack.c.h.b16 %v3666
        %v4303 = vunpack.c.l.b16 %v3667
        %v4304 = vunpack.c.h.b16 %v3667
        %v4305 = vunpack.c.l.b16 %v3668
        %v4306 = vunpack.c.h.b16 %v3668
        %v4307 = vunpack.c.l.b16 %v3669
        %v4308 = vunpack.c.h.b16 %v3669
        %v4309 = vunpack.c.l.b16 %v3670
        %v4310 = vunpack.c.h.b16 %v3670
        %v4311 = vunpack.c.l.b16 %v3671
        %v4312 = vunpack.c.h.b16 %v3671
        %v4313 = vunpack.c.l.b16 %v3672
        %v4314 = vunpack.c.h.b16 %v3672
        %v4315 = vunpack.c.l.b16 %v3673
        %v4316 = vunpack.c.h.b16 %v3673
        %v4317 = vunpack.c.l.b16 %v3674
        %v4318 = vunpack.c.h.b16 %v3674
        %v4319 = vunpack.c.l.b16 %v3675
        %v4320 = vunpack.c.h.b16 %v3675
        %v4321 = vunpack.c.l.b16 %v3676
        %v4322 = vunpack.c.h.b16 %v3676
        %v4323 = vunpack.c.l.b16 %v3677
        %v4324 = vunpack.c.h.b16 %v3677
        %v4325 = vunpack.c.l.b16 %v3678
        %v4326 = vunpack.c.h.b16 %v3678
        %v4327 = vunpack.c.l.b16 %v3679
        %v4328 = vunpack.c.h.b16 %v3679
        %v4329 = vunpack.c.l.b16 %v3680
        %v4330 = vunpack.c.h.b16 %v3680
        %v4331 = vunpack.c.l.b16 %v3681
        %v4332 = vunpack.c.h.b16 %v3681
        %v4333 = vunpack.c.l.b16 %v3682
        %v4334 = vunpack.c.h.b16 %v3682
        %v4335 = vunpack.c.l.b16 %v3683
        %v4336 = vunpack.c.h.b16 %v3683
        %v4337 = vunpack.c.l.b16 %v3684
        %v4338 = vunpack.c.h.b16 %v3684
        %v4339 = vunpack.c.l.b16 %v3685
        %v4340 = vunpack.c.h.b16 %v3685
        %v4341 = vunpack.c.l.b16 %v3686
        %v4342 = vunpack.c.h.b16 %v3686
        %v4343 = vunpack.c.l.b16 %v3687
        %v4344 = vunpack.c.h.b16 %v3687
        %v4345 = vunpack.c.l.b16 %v3688
        %v4346 = vunpack.c.h.b16 %v3688
        %v4347 = vunpack.c.l.b16 %v3689
        %v4348 = vunpack.c.h.b16 %v3689
        %v4349 = vunpack.c.l.b16 %v3690
        %v4350 = vunpack.c.h.b16 %v3690
        %v4351 = vpack.c.b16 %v4289, %v4287
        %v4352 = vpack.c.b16 %v4290, %v4288
        %v4353 = vpack.c.b16 %v4293, %v4291
        %v4354 = vpack.c.b16 %v4294, %v4292
        %v4355 = vpack.c.b16 %v4297, %v4295
        %v4356 = vpack.c.b16 %v4298, %v4296
        %v4357 = vpack.c.b16 %v4301, %v4299
        %v4358 = vpack.c.b16 %v4302, %v4300
        %v4359 = vpack.c.b16 %v4305, %v4303
        %v4360 = vpack.c.b16 %v4306, %v4304
        %v4361 = vpack.c.b16 %v4309, %v4307
        %v4362 = vpack.c.b16 %v4310, %v4308
        %v4363 = vpack.c.b16 %v4313, %v4311
        %v4364 = vpack.c.b16 %v4314, %v4312
        %v4365 = vpack.c.b16 %v4317, %v4315
        %v4366 = vpack.c.b16 %v4318, %v4316
        %v4367 = vpack.c.b16 %v4321, %v4319
        %v4368 = vpack.c.b16 %v4322, %v4320
        %v4369 = vpack.c.b16 %v4325, %v4323
        %v4370 = vpack.c.b16 %v4326, %v4324
        %v4371 = vpack.c.b16 %v4329, %v4327
        %v4372 = vpack.c.b16 %v4330, %v4328
        %v4373 = vpack.c.b16 %v4333, %v4331
        %v4374 = vpack.c.b16 %v4334, %v4332
        %v4375 = vpack.c.b16 %v4337, %v4335
        %v4376 = vpack.c.b16 %v4338, %v4336
        %v4377 = vpack.c.b16 %v4341, %v4339
        %v4378 = vpack.c.b16 %v4342, %v4340
        %v4379 = vpack.c.b16 %v4345, %v4343
        %v4380 = vpack.c.b16 %v4346, %v4344
        %v4381 = vpack.c.b16 %v4349, %v4347
        %v4382 = vpack.c.b16 %v4350, %v4348
        %4415 = vmatpush.bf16.msra.mxu0 %v4365
        %4416 = vmatpush.bf16.msra.mxu0 %v4363
        %4417 = vmatpush.bf16.msra.mxu0 %v4361
        %4418 = vmatpush.bf16.msra.mxu0 %v4359
        %4419 = vmatpush.bf16.msra.mxu0 %v4357
        %4420 = vmatpush.bf16.msra.mxu0 %v4355
        %4421 = vmatpush.bf16.msra.mxu0 %v4353
        %4422 = vmatpush.bf16.msra.mxu0 %v4351
        %4423 = vmatmul.bf16.gmra.mxu0 %v4247
        %v4424 = vpop.f32.mrf.mxu0
        %v4425 = vadd.f32 0.0, %v4424
        %v4426 = vpop.f32.mrf.mxu0
        %v4427 = vadd.f32 0.0, %v4426
        %4428 = vmatmul.bf16.gmra.mxu0 %v4249
        %v4429 = vpop.f32.mrf.mxu0
        %v4430 = vadd.f32 0.0, %v4429
        %v4431 = vpop.f32.mrf.mxu0
        %v4432 = vadd.f32 0.0, %v4431
        %4433 = vdwg.mxu0
        %4434 = vmatpush.bf16.msra.mxu0 %v4381
        %4435 = vmatpush.bf16.msra.mxu0 %v4379
        %4436 = vmatpush.bf16.msra.mxu0 %v4377
        %4437 = vmatpush.bf16.msra.mxu0 %v4375
        %4438 = vmatpush.bf16.msra.mxu0 %v4373
        %4439 = vmatpush.bf16.msra.mxu0 %v4371
        %4440 = vmatpush.bf16.msra.mxu0 %v4369
        %4441 = vmatpush.bf16.msra.mxu0 %v4367
        %4442 = vmatmul.bf16.gmra.mxu0 %v4248
        %v4443 = vpop.f32.mrf.mxu0
        %v4444 = vadd.f32 %v4425, %v4443
        %v4445 = vpop.f32.mrf.mxu0
        %v4446 = vadd.f32 %v4427, %v4445
        %4447 = vmatmul.bf16.gmra.mxu0 %v4250
        %v4448 = vpop.f32.mrf.mxu0
        %v4449 = vadd.f32 %v4430, %v4448
        %v4450 = vpop.f32.mrf.mxu0
        %v4451 = vadd.f32 %v4432, %v4450
        %4452 = vdwg.mxu0
        %4453 = vmatpush.bf16.msra.mxu0 %v4366
        %4454 = vmatpush.bf16.msra.mxu0 %v4364
        %4455 = vmatpush.bf16.msra.mxu0 %v4362
        %4456 = vmatpush.bf16.msra.mxu0 %v4360
        %4457 = vmatpush.bf16.msra.mxu0 %v4358
        %4458 = vmatpush.bf16.msra.mxu0 %v4356
        %4459 = vmatpush.bf16.msra.mxu0 %v4354
        %4460 = vmatpush.bf16.msra.mxu0 %v4352
        %4461 = vmatmul.bf16.gmra.mxu0 %v4247
        %v4462 = vpop.f32.mrf.mxu0
        %v4463 = vadd.f32 0.0, %v4462
        %v4464 = vpop.f32.mrf.mxu0
        %v4465 = vadd.f32 0.0, %v4464
        %4466 = vmatmul.bf16.gmra.mxu0 %v4249
        %v4467 = vpop.f32.mrf.mxu0
        %v4468 = vadd.f32 0.0, %v4467
        %v4469 = vpop.f32.mrf.mxu0
        %v4470 = vadd.f32 0.0, %v4469
        %4471 = vdwg.mxu0
        %4472 = vmatpush.bf16.msra.mxu0 %v4382
        %4473 = vmatpush.bf16.msra.mxu0 %v4380
        %4474 = vmatpush.bf16.msra.mxu0 %v4378
        %4475 = vmatpush.bf16.msra.mxu0 %v4376
        %4476 = vmatpush.bf16.msra.mxu0 %v4374
        %4477 = vmatpush.bf16.msra.mxu0 %v4372
        %4478 = vmatpush.bf16.msra.mxu0 %v4370
        %4479 = vmatpush.bf16.msra.mxu0 %v4368
        %4480 = vmatmul.bf16.gmra.mxu0 %v4248
        %v4481 = vpop.f32.mrf.mxu0
        %v4482 = vadd.f32 %v4463, %v4481
        %v4483 = vpop.f32.mrf.mxu0
        %v4484 = vadd.f32 %v4465, %v4483
        %4485 = vmatmul.bf16.gmra.mxu0 %v4250
        %v4486 = vpop.f32.mrf.mxu0
        %v4487 = vadd.f32 %v4468, %v4486
        %v4488 = vpop.f32.mrf.mxu0
        %v4489 = vadd.f32 %v4470, %v4488
        %4490 = vdwg.mxu0
        %v4495 = vunpack.c.l.b16 %v806
        %v4496 = vunpack.c.h.b16 %v806
        %v4497 = vunpack.c.l.b16 %v807
        %v4498 = vunpack.c.h.b16 %v807
        %v4499 = vunpack.c.l.b16 %v808
        %v4500 = vunpack.c.h.b16 %v808
        %v4501 = vunpack.c.l.b16 %v809
        %v4502 = vunpack.c.h.b16 %v809
        %v4503 = vpack.c.b16 %v4497, %v4495
        %v4504 = vpack.c.b16 %v4498, %v4496
        %v4505 = vpack.c.b16 %v4501, %v4499
        %v4506 = vpack.c.b16 %v4502, %v4500
        %v4543 = vunpack.c.l.b16 %v3691
        %v4544 = vunpack.c.h.b16 %v3691
        %v4545 = vunpack.c.l.b16 %v3692
        %v4546 = vunpack.c.h.b16 %v3692
        %v4547 = vunpack.c.l.b16 %v3693
        %v4548 = vunpack.c.h.b16 %v3693
        %v4549 = vunpack.c.l.b16 %v3694
        %v4550 = vunpack.c.h.b16 %v3694
        %v4551 = vunpack.c.l.b16 %v3695
        %v4552 = vunpack.c.h.b16 %v3695
        %v4553 = vunpack.c.l.b16 %v3696
        %v4554 = vunpack.c.h.b16 %v3696
        %v4555 = vunpack.c.l.b16 %v3697
        %v4556 = vunpack.c.h.b16 %v3697
        %v4557 = vunpack.c.l.b16 %v3698
        %v4558 = vunpack.c.h.b16 %v3698
        %v4559 = vunpack.c.l.b16 %v3699
        %v4560 = vunpack.c.h.b16 %v3699
        %v4561 = vunpack.c.l.b16 %v3700
        %v4562 = vunpack.c.h.b16 %v3700
        %v4563 = vunpack.c.l.b16 %v3701
        %v4564 = vunpack.c.h.b16 %v3701
        %v4565 = vunpack.c.l.b16 %v3702
        %v4566 = vunpack.c.h.b16 %v3702
        %v4567 = vunpack.c.l.b16 %v3703
        %v4568 = vunpack.c.h.b16 %v3703
        %v4569 = vunpack.c.l.b16 %v3704
        %v4570 = vunpack.c.h.b16 %v3704
        %v4571 = vunpack.c.l.b16 %v3705
        %v4572 = vunpack.c.h.b16 %v3705
        %v4573 = vunpack.c.l.b16 %v3706
        %v4574 = vunpack.c.h.b16 %v3706
        %v4575 = vunpack.c.l.b16 %v3707
        %v4576 = vunpack.c.h.b16 %v3707
        %v4577 = vunpack.c.l.b16 %v3708
        %v4578 = vunpack.c.h.b16 %v3708
        %v4579 = vunpack.c.l.b16 %v3709
        %v4580 = vunpack.c.h.b16 %v3709
        %v4581 = vunpack.c.l.b16 %v3710
        %v4582 = vunpack.c.h.b16 %v3710
        %v4583 = vunpack.c.l.b16 %v3711
        %v4584 = vunpack.c.h.b16 %v3711
        %v4585 = vunpack.c.l.b16 %v3712
        %v4586 = vunpack.c.h.b16 %v3712
        %v4587 = vunpack.c.l.b16 %v3713
        %v4588 = vunpack.c.h.b16 %v3713
        %v4589 = vunpack.c.l.b16 %v3714
        %v4590 = vunpack.c.h.b16 %v3714
        %v4591 = vunpack.c.l.b16 %v3715
        %v4592 = vunpack.c.h.b16 %v3715
        %v4593 = vunpack.c.l.b16 %v3716
        %v4594 = vunpack.c.h.b16 %v3716
        %v4595 = vunpack.c.l.b16 %v3717
        %v4596 = vunpack.c.h.b16 %v3717
        %v4597 = vunpack.c.l.b16 %v3718
        %v4598 = vunpack.c.h.b16 %v3718
        %v4599 = vunpack.c.l.b16 %v3719
        %v4600 = vunpack.c.h.b16 %v3719
        %v4601 = vunpack.c.l.b16 %v3720
        %v4602 = vunpack.c.h.b16 %v3720
        %v4603 = vunpack.c.l.b16 %v3721
        %v4604 = vunpack.c.h.b16 %v3721
        %v4605 = vunpack.c.l.b16 %v3722
        %v4606 = vunpack.c.h.b16 %v3722
        %v4607 = vpack.c.b16 %v4545, %v4543
        %v4608 = vpack.c.b16 %v4546, %v4544
        %v4609 = vpack.c.b16 %v4549, %v4547
        %v4610 = vpack.c.b16 %v4550, %v4548
        %v4611 = vpack.c.b16 %v4553, %v4551
        %v4612 = vpack.c.b16 %v4554, %v4552
        %v4613 = vpack.c.b16 %v4557, %v4555
        %v4614 = vpack.c.b16 %v4558, %v4556
        %v4615 = vpack.c.b16 %v4561, %v4559
        %v4616 = vpack.c.b16 %v4562, %v4560
        %v4617 = vpack.c.b16 %v4565, %v4563
        %v4618 = vpack.c.b16 %v4566, %v4564
        %v4619 = vpack.c.b16 %v4569, %v4567
        %v4620 = vpack.c.b16 %v4570, %v4568
        %v4621 = vpack.c.b16 %v4573, %v4571
        %v4622 = vpack.c.b16 %v4574, %v4572
        %v4623 = vpack.c.b16 %v4577, %v4575
        %v4624 = vpack.c.b16 %v4578, %v4576
        %v4625 = vpack.c.b16 %v4581, %v4579
        %v4626 = vpack.c.b16 %v4582, %v4580
        %v4627 = vpack.c.b16 %v4585, %v4583
        %v4628 = vpack.c.b16 %v4586, %v4584
        %v4629 = vpack.c.b16 %v4589, %v4587
        %v4630 = vpack.c.b16 %v4590, %v4588
        %v4631 = vpack.c.b16 %v4593, %v4591
        %v4632 = vpack.c.b16 %v4594, %v4592
        %v4633 = vpack.c.b16 %v4597, %v4595
        %v4634 = vpack.c.b16 %v4598, %v4596
        %v4635 = vpack.c.b16 %v4601, %v4599
        %v4636 = vpack.c.b16 %v4602, %v4600
        %v4637 = vpack.c.b16 %v4605, %v4603
        %v4638 = vpack.c.b16 %v4606, %v4604
        %4671 = vmatpush.bf16.msra.mxu0 %v4621
        %4672 = vmatpush.bf16.msra.mxu0 %v4619
        %4673 = vmatpush.bf16.msra.mxu0 %v4617
        %4674 = vmatpush.bf16.msra.mxu0 %v4615
        %4675 = vmatpush.bf16.msra.mxu0 %v4613
        %4676 = vmatpush.bf16.msra.mxu0 %v4611
        %4677 = vmatpush.bf16.msra.mxu0 %v4609
        %4678 = vmatpush.bf16.msra.mxu0 %v4607
        %4679 = vmatmul.bf16.gmra.mxu0 %v4503
        %v4680 = vpop.f32.mrf.mxu0
        %v4681 = vadd.f32 0.0, %v4680
        %v4682 = vpop.f32.mrf.mxu0
        %v4683 = vadd.f32 0.0, %v4682
        %4684 = vmatmul.bf16.gmra.mxu0 %v4505
        %v4685 = vpop.f32.mrf.mxu0
        %v4686 = vadd.f32 0.0, %v4685
        %v4687 = vpop.f32.mrf.mxu0
        %v4688 = vadd.f32 0.0, %v4687
        %4689 = vdwg.mxu0
        %4690 = vmatpush.bf16.msra.mxu0 %v4637
        %4691 = vmatpush.bf16.msra.mxu0 %v4635
        %4692 = vmatpush.bf16.msra.mxu0 %v4633
        %4693 = vmatpush.bf16.msra.mxu0 %v4631
        %4694 = vmatpush.bf16.msra.mxu0 %v4629
        %4695 = vmatpush.bf16.msra.mxu0 %v4627
        %4696 = vmatpush.bf16.msra.mxu0 %v4625
        %4697 = vmatpush.bf16.msra.mxu0 %v4623
        %4698 = vmatmul.bf16.gmra.mxu0 %v4504
        %v4699 = vpop.f32.mrf.mxu0
        %v4700 = vadd.f32 %v4681, %v4699
        %v4701 = vpop.f32.mrf.mxu0
        %v4702 = vadd.f32 %v4683, %v4701
        %4703 = vmatmul.bf16.gmra.mxu0 %v4506
        %v4704 = vpop.f32.mrf.mxu0
        %v4705 = vadd.f32 %v4686, %v4704
        %v4706 = vpop.f32.mrf.mxu0
        %v4707 = vadd.f32 %v4688, %v4706
        %4708 = vdwg.mxu0
        %4709 = vmatpush.bf16.msra.mxu0 %v4622
        %4710 = vmatpush.bf16.msra.mxu0 %v4620
        %4711 = vmatpush.bf16.msra.mxu0 %v4618
        %4712 = vmatpush.bf16.msra.mxu0 %v4616
        %4713 = vmatpush.bf16.msra.mxu0 %v4614
        %4714 = vmatpush.bf16.msra.mxu0 %v4612
        %4715 = vmatpush.bf16.msra.mxu0 %v4610
        %4716 = vmatpush.bf16.msra.mxu0 %v4608
        %4717 = vmatmul.bf16.gmra.mxu0 %v4503
        %v4718 = vpop.f32.mrf.mxu0
        %v4719 = vadd.f32 0.0, %v4718
        %v4720 = vpop.f32.mrf.mxu0
        %v4721 = vadd.f32 0.0, %v4720
        %4722 = vmatmul.bf16.gmra.mxu0 %v4505
        %v4723 = vpop.f32.mrf.mxu0
        %v4724 = vadd.f32 0.0, %v4723
        %v4725 = vpop.f32.mrf.mxu0
        %v4726 = vadd.f32 0.0, %v4725
        %4727 = vdwg.mxu0
        %4728 = vmatpush.bf16.msra.mxu0 %v4638
        %4729 = vmatpush.bf16.msra.mxu0 %v4636
        %4730 = vmatpush.bf16.msra.mxu0 %v4634
        %4731 = vmatpush.bf16.msra.mxu0 %v4632
        %4732 = vmatpush.bf16.msra.mxu0 %v4630
        %4733 = vmatpush.bf16.msra.mxu0 %v4628
        %4734 = vmatpush.bf16.msra.mxu0 %v4626
        %4735 = vmatpush.bf16.msra.mxu0 %v4624
        %4736 = vmatmul.bf16.gmra.mxu0 %v4504
        %v4737 = vpop.f32.mrf.mxu0
        %v4738 = vadd.f32 %v4719, %v4737
        %v4739 = vpop.f32.mrf.mxu0
        %v4740 = vadd.f32 %v4721, %v4739
        %4741 = vmatmul.bf16.gmra.mxu0 %v4506
        %v4742 = vpop.f32.mrf.mxu0
        %v4743 = vadd.f32 %v4724, %v4742
        %v4744 = vpop.f32.mrf.mxu0
        %v4745 = vadd.f32 %v4726, %v4744
        %4746 = vdwg.mxu0
        %v4747 = vpack.c.bf16 %v3934, %v3932
        %v4748 = vpack.c.bf16 %v3972, %v3970
        %v4749 = vpack.c.bf16 %v3939, %v3937
        %v4750 = vpack.c.bf16 %v3977, %v3975
        %v4751 = vpack.c.bf16 %v4190, %v4188
        %v4752 = vpack.c.bf16 %v4228, %v4226
        %v4753 = vpack.c.bf16 %v4195, %v4193
        %v4754 = vpack.c.bf16 %v4233, %v4231
        %v4755 = vpack.c.bf16 %v4446, %v4444
        %v4756 = vpack.c.bf16 %v4484, %v4482
        %v4757 = vpack.c.bf16 %v4451, %v4449
        %v4758 = vpack.c.bf16 %v4489, %v4487
        %v4759 = vpack.c.bf16 %v4702, %v4700
        %v4760 = vpack.c.bf16 %v4740, %v4738
        %v4761 = vpack.c.bf16 %v4707, %v4705
        %v4762 = vpack.c.bf16 %v4745, %v4743
        %v4763 = vld [vmem:[%s2] sm:$0x3]
        %v4764 = vld [vmem:[%s3] sm:$0xf]
        %4766 = vset.pattern.permute.xlu0 0
        %4767 = vperm.xlu0 %4766, %v4764
        %v4768 = vpop.permute.xlu0 %4767
        %4770 = vmatpush.bf16.msra.mxu0 %v4761
        %4771 = vmatpush.bf16.msra.mxu0 %v4759
        %4772 = vmatpush.bf16.msra.mxu0 %v4757
        %4773 = vmatpush.bf16.msra.mxu0 %v4755
        %4774 = vmatpush.bf16.msra.mxu0 %v4753
        %4775 = vmatpush.bf16.msra.mxu0 %v4751
        %4776 = vmatpush.bf16.msra.mxu0 %v4749
        %4777 = vmatpush.bf16.msra.mxu0 %v4747
        %4778 = vmatmul.bf16.gmra.mxu0 %v4763
        %v4779 = vpop.f32.mrf.mxu0
        %v4780 = vadd.f32 %v4768, %v4779
        %v4781 = vpop.f32.mrf.mxu0
        %4782 = vdwg.mxu0
        %4783 = vmatpush.bf16.msra.mxu0 %v4762
        %4784 = vmatpush.bf16.msra.mxu0 %v4760
        %4785 = vmatpush.bf16.msra.mxu0 %v4758
        %4786 = vmatpush.bf16.msra.mxu0 %v4756
        %4787 = vmatpush.bf16.msra.mxu0 %v4754
        %4788 = vmatpush.bf16.msra.mxu0 %v4752
        %4789 = vmatpush.bf16.msra.mxu0 %v4750
        %4790 = vmatpush.bf16.msra.mxu0 %v4748
        %4791 = vmatmul.bf16.gmra.mxu0 %v4763
        %v4792 = vpop.f32.mrf.mxu0
        %v4793 = vadd.f32 %v4768, %v4792
        %v4794 = vpop.f32.mrf.mxu0
        %4795 = vdwg.mxu0
        %v4798 = vrot.slane %v4793, 4
        %v4799 = vsel %vm205, %v4780, %v4798
        %4801 = vst [vmem:[%s190] sm:$0xff] %v4799
        %s4802 = sand.u32 %s115, 1
        %s4803 = scalar_lea.sflag [#allocation3], %s4802
        %s4804 = sand.u32 %s115, 1
        %s4805 = smul.addr %s4804, 8
        %s4806 = scalar_lea.vmem [#allocation2], %s4805
        // Predicated region
        $region37: #{tpu_custom_call.1} parent=35 // pred_check
          %p4807 = pneg %p125
        $region38: #{tpu_custom_call.1} parent=35 // pred_check_branch
          %4809 = sbr.rel (%p4807) target = $region40
        $region39: #{tpu_custom_call.1} parent=35 // pred_region
          %4811 = vsyncadd %s4803, 0
          %s4812 = smul.addr %s18, 2
          %s4813 = smul.addr %s4812, 4
          %s4814 = scalar_lea.hbm %s4, %s4813
          %s4816 = sshll.u32 %s4806, 4
          %s4817 = int_to_ptr.vmem [resolvable:$true] %s4816
          %s4818 = sshll.u32 %s4814, 4
          %s4819 = int_to_ptr.hbm [resolvable:$true] %s4818
          %4821 = dma.vmem_to_hbm [thread:$0]  %s4817, 128, %s4819, %s4803
        $region40: #{tpu_custom_call.1} parent=35 // pred_fallthru
          _
      $region36: #{tpu_custom_call.1} parent=5 // pred_fallthru
        _
      %p4822 = scmp.le.s32.totalorder 2, %s13
      // Predicated region
      $region41: #{tpu_custom_call.1} parent=5 // pred_check
        %p4823 = pneg %p4822
      $region42: #{tpu_custom_call.1} parent=5 // pred_check_branch
        %4825 = sbr.rel (%p4823) target = $region44
      $region43: #{tpu_custom_call.1} parent=5 // pred_region
        %s4826 = ssub.s32 %s13, 2
        // Predicated region
        $region45: #{tpu_custom_call.1} parent=43 // pred_check
          %p4827 = pneg %p131
        $region46: #{tpu_custom_call.1} parent=43 // pred_check_branch
          %4829 = sbr.rel (%p4827) target = $region48
        $region47: #{tpu_custom_call.1} parent=43 // pred_region
          %s4830 = sand.u32 %s116, 1
          %s4831 = scalar_lea.sflag [#allocation3], %s4830
          %s4832 = sand.u32 %s116, 1
          %s4833 = smul.addr %s4832, 8
          %s4834 = scalar_lea.vmem [#allocation2], %s4833
          %4836 = dma.done %s4831, 128
        $region48: #{tpu_custom_call.1} parent=43 // pred_fallthru
          _
      $region44: #{tpu_custom_call.1} parent=5 // pred_fallthru
        _
    $region6: #{tpu_custom_call.1} parent=1 // loop_footer
      %s17 = sadd.s32 1, %s13
    $region7: #{tpu_custom_call.1} parent=1 // loop_footer_branch
      %12 = sbr.rel target = $region3
    $region8: #{tpu_custom_call.1} parent=1 // loop_exit
      _
    %4837 = vsyncpa [#allocation3], 1
    %s4838 = scalar_lea.sflag [#allocation3], 1
    %4839 = vsyncpa %s4838, 1

</llo_original>
